<compile_context>
chip_gen: v5e
topology: v5e:2x2
jax: 0.10.0
libtpu: 0.0.40
codegen_flags: <defaults>
</compile_context>

<pallas_src>
import functools

import jax
import jax.numpy as jnp
from jax.experimental import pallas as pl
from jax.experimental.pallas import tpu as pltpu


def _round_up(v, m):
    return ((v + m - 1) // m) * m


def _make_cam_encode_kernel(d_pad):
    def kernel(x_ref, w1_ref, b1_ref, w2_ref, b2_ref, depth_ref, newx_ref):
        # Cast the x row-tile to bf16 in-kernel (saves a wrapper-side HBM pass).
        xb = x_ref[...].astype(jnp.bfloat16)

        # up1: [tm, C] @ [C, 512] -> f32 accumulate on the MXU.
        h = jnp.dot(xb, w1_ref[...], preferred_element_type=jnp.float32)
        # Bias add in bf16 after the downcast (bf16 VALU on v6e/v7x; h is rounded
        # to bf16 for the next GEMM anyway, so this is numerically equivalent).
        hb = h.astype(jnp.bfloat16) + b1_ref[...]

        # depthnet: single merged GEMM [tm, 512] @ [512, D_pad + C_pad] -> f32.
        # Bias (incl. -1e30 on padded depth columns) added in f32.
        y = jnp.dot(hb, w2_ref[...], preferred_element_type=jnp.float32) + b2_ref[...]

        # Lane-aligned split (d_pad is a multiple of 128 -> exact vreg boundary).
        logits = y[:, :d_pad]
        feats = y[:, d_pad:]

        # Softmax over the depth head.  Padded depth columns carry a -1e30 bias,
        # so exp() underflows to exactly 0 there and real columns sum to 1.
        m = jnp.max(logits, axis=-1, keepdims=True)
        e = jnp.exp(logits - m)
        denom = jnp.sum(e, axis=-1, keepdims=True)
        depth_ref[...] = (e * pl.reciprocal(denom, approx=True)).astype(depth_ref.dtype)

        newx_ref[...] = feats.astype(newx_ref.dtype)

    return kernel


@functools.partial(jax.jit,
                   static_argnames=("D", "C", "tm", "out_dtype", "trim_outputs"))
def cam_encode_pallas(x, w1, b1, w2, b2, *, D, C, tm=512,
                      out_dtype=jnp.bfloat16, trim_outputs=True):
    """x: [N, C] f32.  w1: [C, 512], b1: [512], w2: [512, D+C], b2: [D+C] (f32).

    Returns (depth [N, D], new_x [N, C]) matching the PyTorch forward.
    With trim_outputs=False returns the lane-dense padded outputs
    (depth [N_pad, D_pad], new_x [N_pad, C_pad]); padded depth columns are
    exact zeros, so consumers that tolerate the padding avoid an extra
    non-contiguous column-slice copy.
    """
    N, Cin = x.shape
    assert Cin == C
    H = w1.shape[1]                      # 512
    assert w2.shape == (H, D + C)

    # Lane-dense padded head widths (multiples of 128).
    D_pad = _round_up(D, 128)
    C_pad = _round_up(C, 128)
    W2_cols = D_pad + C_pad

    # Merged + padded second linear layer (static, done once in the wrapper).
    w2m = jnp.zeros((H, W2_cols), jnp.float32)
    w2m = w2m.at[:, :D].set(w2[:, :D].astype(jnp.float32))
    w2m = w2m.at[:, D_pad:D_pad + C].set(w2[:, D:D + C].astype(jnp.float32))
    w2m_bf = w2m.astype(jnp.bfloat16)

    b2m = jnp.zeros((W2_cols,), jnp.float32)
    b2m = b2m.at[:D].set(b2[:D].astype(jnp.float32))
    if D_pad > D:
        b2m = b2m.at[D:D_pad].set(-1e30)   # padded depth cols -> exp underflows to 0
    b2m = b2m.at[D_pad:D_pad + C].set(b2[D:D + C].astype(jnp.float32))
    b2m_2d = b2m.reshape(1, W2_cols)       # stays f32 (keeps -1e30 exact)

    w1_bf = w1.astype(jnp.bfloat16)
    b1_2d = b1.astype(jnp.bfloat16).reshape(1, H)   # bf16 bias add in-kernel

    # Pad the row count up to a multiple of the tile (x stays f32; the bf16 cast
    # happens inside the kernel).
    N_pad = _round_up(N, tm)
    x_in = x if N_pad == N else jnp.pad(x, ((0, N_pad - N), (0, 0)))
    grid = (N_pad // tm,)

    out_bytes = jnp.dtype(out_dtype).itemsize

    # Advisory cost estimate so XLA schedules this custom call sensibly.
    flops = 2 * N_pad * (C * H + H * W2_cols)
    bytes_accessed = (
        N_pad * C * 4                                  # x (f32)
        + (C * H + H * W2_cols) * 2                    # weights (bf16)
        + H * 2 + W2_cols * 4                          # biases
        + N_pad * (D_pad + C_pad) * out_bytes          # outputs
    )
    cost = pl.CostEstimate(flops=flops,
                           transcendentals=N_pad * (D_pad + 1),
                           bytes_accessed=bytes_accessed)

    # Tight-ish VMEM limit derived from the actual footprint (plus headroom),
    # instead of a blanket 32 MiB reservation.
    vmem_bytes = (
        2 * tm * C * 4                               # x tile, double-buffered (f32)
        + C * H * 2 + H * 2                          # W1 + b1 (bf16, single-buffered)
        + H * W2_cols * 2 + W2_cols * 4              # merged W2 + b2 (single-buffered)
        + 2 * tm * (D_pad + C_pad) * out_bytes       # outputs, double-buffered
        + tm * (2 * H * 4 + H * 2 + 2 * W2_cols * 4) # f32/bf16 intermediates
    )
    vmem_limit = min(max(int(vmem_bytes) + 4 * 1024 * 1024,
                         16 * 1024 * 1024), 64 * 1024 * 1024)

    kernel = _make_cam_encode_kernel(D_pad)
    resident = pl.Buffered(buffer_count=1)   # grid-invariant operands: single buffer

    depth_full, newx_full = pl.pallas_call(
        kernel,
        out_shape=(
            jax.ShapeDtypeStruct((N_pad, D_pad), out_dtype),
            jax.ShapeDtypeStruct((N_pad, C_pad), out_dtype),
        ),
        grid_spec=pltpu.PrefetchScalarGridSpec(
            num_scalar_prefetch=0,
            grid=grid,
            in_specs=[
                pl.BlockSpec((tm, C), lambda i: (i, 0)),          # x row tile (f32)
                pl.BlockSpec((C, H), lambda i: (0, 0),
                             pipeline_mode=resident),             # W1 (resident)
                pl.BlockSpec((1, H), lambda i: (0, 0),
                             pipeline_mode=resident),             # b1 (bf16)
                pl.BlockSpec((H, W2_cols), lambda i: (0, 0),
                             pipeline_mode=resident),             # merged W2
                pl.BlockSpec((1, W2_cols), lambda i: (0, 0),
                             pipeline_mode=resident),             # merged b2 (f32)
            ],
            out_specs=[
                pl.BlockSpec((tm, D_pad), lambda i: (i, 0)),      # depth (lane-dense)
                pl.BlockSpec((tm, C_pad), lambda i: (i, 0)),      # new_x (lane-dense)
            ],
        ),
        compiler_params=pltpu.CompilerParams(
            dimension_semantics=("parallel",),
            vmem_limit_bytes=vmem_limit,
        ),
        cost_estimate=cost,
    )(x_in, w1_bf, b1_2d, w2m_bf, b2m_2d)

    if not trim_outputs:
        return depth_full, newx_full
    # Column/row trim for exact module-shape parity (prefer trim_outputs=False
    # downstream to skip this non-contiguous copy; padded depth cols are 0).
    return depth_full[:N, :D], newx_full[:N, :C]


def cam_encode_reference(x, w1, b1, w2, b2, D, C):
    """Pure-f32 JAX reference mirroring the PyTorch forward exactly."""
    h = jnp.dot(x, w1) + b1
    y = jnp.dot(h, w2) + b2
    depth = jax.nn.softmax(y[:, :D], axis=1)
    new_x = y[:, D:D + C]
    return depth, new_x


if __name__ == "__main__":
    # hidden=512 is fixed by CamEncode; D depth bins, C channels, N flattened rows.
    # N is deliberately NOT a multiple of the row tile (exercises padding) and
    # pads to a 4-step grid at tm=512 (pipelining + both v7x TensorCores busy).
    D, C, H = 64, 128, 512
    N = 2000
    TM = 512

    key = jax.random.PRNGKey(0)
    kx, kw1, kb1, kw2, kb2 = jax.random.split(key, 5)

    x = jax.random.normal(kx, (N, C), dtype=jnp.float32)
    # Deterministic synthetic parameters (nn.Linear-like scale), pre-transposed [in, out].
    w1 = jax.random.normal(kw1, (C, H), dtype=jnp.float32) * (1.0 / jnp.sqrt(C))
    b1 = jax.random.normal(kb1, (H,), dtype=jnp.float32) * 0.01
    w2 = jax.random.normal(kw2, (H, D + C), dtype=jnp.float32) * (1.0 / jnp.sqrt(H))
    b2 = jax.random.normal(kb2, (D + C,), dtype=jnp.float32) * 0.01

    depth, new_x = cam_encode_pallas(x, w1, b1, w2, b2, D=D, C=C, tm=TM)
    jax.block_until_ready((depth, new_x))

    depth_ref, new_x_ref = cam_encode_reference(x, w1, b1, w2, b2, D, C)

    assert depth.shape == (N, D) and new_x.shape == (N, C)

    depth32 = depth.astype(jnp.float32)
    newx32 = new_x.astype(jnp.float32)
    # Tolerances account for bf16 MXU inputs + bf16 outputs vs the true f32 forward.
    assert jnp.allclose(depth32, depth_ref, atol=5e-2, rtol=5e-2)
    assert jnp.allclose(newx32, new_x_ref, atol=1e-1, rtol=5e-2)
    # softmax rows sum to 1 (padded depth columns contribute exactly 0 mass;
    # small slack for the approx EUP reciprocal and bf16 output rounding).
    assert jnp.allclose(jnp.sum(depth32, axis=1), 1.0, atol=1e-2)

    print("KERNEL_OK")
</pallas_src>

<mosaic_0001>
module attributes {stable_mosaic.version = 11 : i64} {
  func.func @kernel(%arg0: i32, %arg1: memref<512x128xf32, #tpu.memory_space<vmem>>, %arg2: memref<128x512xbf16, #tpu.memory_space<vmem>>, %arg3: memref<1x512xbf16, #tpu.memory_space<vmem>>, %arg4: memref<512x256xbf16, #tpu.memory_space<vmem>>, %arg5: memref<1x256xf32, #tpu.memory_space<vmem>>, %arg6: memref<512x128xbf16, #tpu.memory_space<vmem>>, %arg7: memref<512x128xbf16, #tpu.memory_space<vmem>>) attributes {dimension_semantics = [#tpu.dimension_semantics<parallel>], iteration_bounds = array<i64: 4>, scalar_prefetch = 0 : i64, scratch_operands = 0 : i64, tpu.core_type = #tpu.core_type<tc>, window_params = [{transform_indices = @transform_0, window_bounds = array<i64: 512, 128>}, {pipeline_mode = #tpu.pipeline_mode<synchronous>, transform_indices = @transform_1, window_bounds = array<i64: 128, 512>}, {pipeline_mode = #tpu.pipeline_mode<synchronous>, transform_indices = @transform_2, window_bounds = array<i64: 1, 512>}, {pipeline_mode = #tpu.pipeline_mode<synchronous>, transform_indices = @transform_3, window_bounds = array<i64: 512, 256>}, {pipeline_mode = #tpu.pipeline_mode<synchronous>, transform_indices = @transform_4, window_bounds = array<i64: 1, 256>}, {transform_indices = @transform_5, window_bounds = array<i64: 512, 128>}, {transform_indices = @transform_6, window_bounds = array<i64: 512, 128>}]} {
    %c0 = arith.constant 0 : index
    %c0_0 = arith.constant 0 : index
    %0 = vector.load %arg1[%c0, %c0_0] : memref<512x128xf32, #tpu.memory_space<vmem>>, vector<512x128xf32>
    %1 = arith.truncf %0 : vector<512x128xf32> to vector<512x128xbf16>
    %c0_1 = arith.constant 0 : index
    %c0_2 = arith.constant 0 : index
    %2 = vector.load %arg2[%c0_1, %c0_2] : memref<128x512xbf16, #tpu.memory_space<vmem>>, vector<128x512xbf16>
    %cst = arith.constant dense<0.000000e+00> : vector<512x512xf32>
    %3 = tpu.matmul %1, %2, %cst {dimension_numbers = #tpu.dot_dimension_numbers<[1], [0], [0], [1], [0, 0, 1, 1], [], []>} : vector<512x128xbf16>, vector<128x512xbf16>, vector<512x512xf32> -> vector<512x512xf32>
    %4 = arith.truncf %3 : vector<512x512xf32> to vector<512x512xbf16>
    %c0_3 = arith.constant 0 : index
    %c0_4 = arith.constant 0 : index
    %5 = vector.load %arg3[%c0_3, %c0_4] : memref<1x512xbf16, #tpu.memory_space<vmem>>, vector<1x512xbf16>
    %6 = vector.broadcast %5 : vector<1x512xbf16> to vector<512x512xbf16>
    %7 = arith.addf %4, %6 : vector<512x512xbf16>
    %c0_5 = arith.constant 0 : index
    %c0_6 = arith.constant 0 : index
    %8 = vector.load %arg4[%c0_5, %c0_6] : memref<512x256xbf16, #tpu.memory_space<vmem>>, vector<512x256xbf16>
    %cst_7 = arith.constant dense<0.000000e+00> : vector<512x256xf32>
    %9 = tpu.matmul %7, %8, %cst_7 {dimension_numbers = #tpu.dot_dimension_numbers<[1], [0], [0], [1], [0, 0, 1, 1], [], []>} : vector<512x512xbf16>, vector<512x256xbf16>, vector<512x256xf32> -> vector<512x256xf32>
    %c0_8 = arith.constant 0 : index
    %c0_9 = arith.constant 0 : index
    %10 = vector.load %arg5[%c0_8, %c0_9] : memref<1x256xf32, #tpu.memory_space<vmem>>, vector<1x256xf32>
    %11 = vector.broadcast %10 : vector<1x256xf32> to vector<512x256xf32>
    %12 = arith.addf %9, %11 : vector<512x256xf32>
    %13 = vector.extract_strided_slice %12 {offsets = [0, 0], sizes = [512, 128], strides = [1, 1]} : vector<512x256xf32> to vector<512x128xf32>
    %14 = vector.extract_strided_slice %12 {offsets = [0, 128], sizes = [512, 128], strides = [1, 1]} : vector<512x256xf32> to vector<512x128xf32>
    %cst_10 = arith.constant dense<0xFF800000> : vector<512xf32>
    %15 = vector.multi_reduction <maximumf>, %13, %cst_10 [1] : vector<512x128xf32> to vector<512xf32>
    %16 = vector.shape_cast %15 : vector<512xf32> to vector<512x1xf32>
    %17 = vector.broadcast %16 : vector<512x1xf32> to vector<512x128xf32>
    %18 = arith.subf %13, %17 : vector<512x128xf32>
    %19 = math.exp %18 : vector<512x128xf32>
    %cst_11 = arith.constant dense<0.000000e+00> : vector<512xf32>
    %20 = vector.multi_reduction <add>, %19, %cst_11 [1] : vector<512x128xf32> to vector<512xf32>
    %21 = vector.shape_cast %20 : vector<512xf32> to vector<512x1xf32>
    %22 = tpu.reciprocal %21 {approx = true} : vector<512x1xf32> -> vector<512x1xf32>
    %23 = vector.broadcast %22 : vector<512x1xf32> to vector<512x128xf32>
    %24 = arith.mulf %19, %23 : vector<512x128xf32>
    %25 = arith.truncf %24 : vector<512x128xf32> to vector<512x128xbf16>
    %c0_12 = arith.constant 0 : index
    %c0_13 = arith.constant 0 : index
    %26 = vector.load %arg6[%c0_12, %c0_13] : memref<512x128xbf16, #tpu.memory_space<vmem>>, vector<512x128xbf16>
    tpu.vector_store %arg6[%c0_12, %c0_13], %25 {strides = array<i32>} : memref<512x128xbf16, #tpu.memory_space<vmem>>, vector<512x128xbf16>,
    %27 = arith.truncf %14 : vector<512x128xf32> to vector<512x128xbf16>
    %c0_14 = arith.constant 0 : index
    %c0_15 = arith.constant 0 : index
    %28 = vector.load %arg7[%c0_14, %c0_15] : memref<512x128xbf16, #tpu.memory_space<vmem>>, vector<512x128xbf16>
    tpu.vector_store %arg7[%c0_14, %c0_15], %27 {strides = array<i32>} : memref<512x128xbf16, #tpu.memory_space<vmem>>, vector<512x128xbf16>,
    return
  }
  func.func @transform_0(%arg0: i32) -> (i32, i32) {
    %c0_i32 = arith.constant 0 : i32
    %c0_i32_0 = arith.constant 0 : i32
    return %arg0, %c0_i32 : i32, i32
  }
  func.func @transform_1(%arg0: i32) -> (i32, i32) {
    %c0_i32 = arith.constant 0 : i32
    %c0_i32_0 = arith.constant 0 : i32
    %c0_i32_1 = arith.constant 0 : i32
    return %c0_i32, %c0_i32_0 : i32, i32
  }
  func.func @transform_2(%arg0: i32) -> (i32, i32) {
    %c0_i32 = arith.constant 0 : i32
    %c0_i32_0 = arith.constant 0 : i32
    %c0_i32_1 = arith.constant 0 : i32
    return %c0_i32, %c0_i32_0 : i32, i32
  }
  func.func @transform_3(%arg0: i32) -> (i32, i32) {
    %c0_i32 = arith.constant 0 : i32
    %c0_i32_0 = arith.constant 0 : i32
    %c0_i32_1 = arith.constant 0 : i32
    return %c0_i32, %c0_i32_0 : i32, i32
  }
  func.func @transform_4(%arg0: i32) -> (i32, i32) {
    %c0_i32 = arith.constant 0 : i32
    %c0_i32_0 = arith.constant 0 : i32
    %c0_i32_1 = arith.constant 0 : i32
    return %c0_i32, %c0_i32_0 : i32, i32
  }
  func.func @transform_5(%arg0: i32) -> (i32, i32) {
    %c0_i32 = arith.constant 0 : i32
    %c0_i32_0 = arith.constant 0 : i32
    return %arg0, %c0_i32 : i32, i32
  }
  func.func @transform_6(%arg0: i32) -> (i32, i32) {
    %c0_i32 = arith.constant 0 : i32
    %c0_i32_0 = arith.constant 0 : i32
    return %arg0, %c0_i32 : i32, i32
  }
}

</mosaic_0001>

<llo_original>
// kernel: cam_encode_pallas.1
$region0: #{cam_encode_pallas.1}
  #allocation0 [shape = 'u32[]', space=smem, size = 0x4, offset = 0x4, fixed_abs, tag = 'smem constant byte address 0x4 - core index']
  #allocation1 [shape = 'u32[72,128]{1,0:T(1,128)}', space=vmem, size = 0x9000, scoped, tag = 'internal scratch']
  %s0 = inlined_call_operand.vmem [shape: f32[2048,128], index: 0, kind: input, shape index: {}]
  %s1 = inlined_call_operand.vmem [shape: bf16[128,512], index: 1, kind: input, shape index: {}]
  %s2 = inlined_call_operand.vmem [shape: bf16[1,512], index: 2, kind: input, shape index: {}]
  %s3 = inlined_call_operand.vmem [shape: bf16[512,256], index: 3, kind: input, shape index: {}]
  %s4 = inlined_call_operand.vmem [shape: f32[1,256], index: 4, kind: input, shape index: {}]
  %s5 = inlined_call_operand.vmem [shape: bf16[2048,128], index: 5, kind: output, shape index: {0}]
  %s6 = inlined_call_operand.vmem [shape: bf16[2048,128], index: 6, kind: output, shape index: {1}]
  %7 = xla_tuple %s5, %s6
  %s8 = sld [smem:[#allocation0]]
  $region61: #{cam_encode_pallas.1} parent=0
    _
  %s10 = ssub.s32 1, %s8
  %s11 = scalar_select 0, %s10, %s8
  loop: start=0, step=1, limit=6
  $region2: #{cam_encode_pallas.1} parent=0 // loop_pre_header
    _
  $region3: #{cam_encode_pallas.1} parent=0 // loop_header
    %s13 = sphi 0, %s17
    %p14 = scmp.ge.s32.totalorder %s13, 6
    %s23 = sphi 0, %s25
    %s26 = sphi 0, %s23
    %s27 = sphi 0, %s26
    %s43 = sphi 0, %s27
    %s47 = sphi 0, %s47
    %s49 = sphi 0, %s47
    %s50 = sphi 0, %s49
    %s64 = sphi 0, %s50
    %s68 = sphi 0, %s68
    %s70 = sphi 0, %s68
    %s71 = sphi 0, %s70
    %s85 = sphi 0, %s71
    %s89 = sphi 0, %s89
    %s91 = sphi 0, %s89
    %s92 = sphi 0, %s91
    %s106 = sphi 0, %s92
    %s110 = sphi 0, %s110
    %s112 = sphi 0, %s110
    %s113 = sphi 0, %s112
    %s127 = sphi 0, %s113
    %s133 = sphi 0, %s135
    %s136 = sphi 0, %s133
    %s137 = sphi 0, %s136
    %s153 = sphi 0, %s137
    %s159 = sphi 0, %s161
    %s162 = sphi 0, %s159
    %s163 = sphi 0, %s162
    %s179 = sphi 0, %s163
  $region4: #{cam_encode_pallas.1} parent=0 // loop_header_branch
    %16 = sbr.rel (%p14) target = $region8
  $region5: #{cam_encode_pallas.1} parent=0 // loop_body
    %s18 = ssub.s32 %s13, 1
    %s19 = ssub.s32 %s13, 2
    %s20 = sadd.s32 %s13, 1
    %s21 = ssub.s32 %s13, %s20
    %p22 = scmp.eq.s32.totalorder %s21, 0
    %s24 = sadd.s32 %s23, 1
    %s25 = scalar_select %p22, %s23, %s24
    %p28 = pneg %p22
    %p29 = scmp.eq.s32.totalorder %s13, 3
    %p30 = por %p28, %p29
    %p31 = scmp.ne.s32.totalorder %s23, %s26
    %p32 = scmp.eq.s32.totalorder %s13, 0
    %p33 = por %p31, %p32
    %p34 = scmp.ne.s32.totalorder %s23, %s26
    %p35 = scmp.eq.s32.totalorder %s18, 3
    %p36 = por %p34, %p35
    %p37 = scmp.ne.s32.totalorder %s26, %s27
    %p38 = scmp.eq.s32.totalorder %s18, 0
    %p39 = por %p37, %p38
    %p40 = scmp.ne.s32.totalorder %s26, %s27
    %p41 = scmp.eq.s32.totalorder %s19, 3
    %p42 = por %p40, %p41
    %p44 = scmp.ne.s32.totalorder %s27, %s43
    %p45 = scmp.eq.s32.totalorder %s19, 0
    %p46 = por %p44, %p45
    %s48 = sadd.s32 %s47, 1
    %p51 = scmp.eq.s32.totalorder %s13, 3
    %p52 = scmp.ne.s32.totalorder %s47, %s49
    %p53 = scmp.eq.s32.totalorder %s13, 0
    %p54 = por %p52, %p53
    %p55 = scmp.ne.s32.totalorder %s47, %s49
    %p56 = scmp.eq.s32.totalorder %s18, 3
    %p57 = por %p55, %p56
    %p58 = scmp.ne.s32.totalorder %s49, %s50
    %p59 = scmp.eq.s32.totalorder %s18, 0
    %p60 = por %p58, %p59
    %p61 = scmp.ne.s32.totalorder %s49, %s50
    %p62 = scmp.eq.s32.totalorder %s19, 3
    %p63 = por %p61, %p62
    %p65 = scmp.ne.s32.totalorder %s50, %s64
    %p66 = scmp.eq.s32.totalorder %s19, 0
    %p67 = por %p65, %p66
    %s69 = sadd.s32 %s68, 1
    %p72 = scmp.eq.s32.totalorder %s13, 3
    %p73 = scmp.ne.s32.totalorder %s68, %s70
    %p74 = scmp.eq.s32.totalorder %s13, 0
    %p75 = por %p73, %p74
    %p76 = scmp.ne.s32.totalorder %s68, %s70
    %p77 = scmp.eq.s32.totalorder %s18, 3
    %p78 = por %p76, %p77
    %p79 = scmp.ne.s32.totalorder %s70, %s71
    %p80 = scmp.eq.s32.totalorder %s18, 0
    %p81 = por %p79, %p80
    %p82 = scmp.ne.s32.totalorder %s70, %s71
    %p83 = scmp.eq.s32.totalorder %s19, 3
    %p84 = por %p82, %p83
    %p86 = scmp.ne.s32.totalorder %s71, %s85
    %p87 = scmp.eq.s32.totalorder %s19, 0
    %p88 = por %p86, %p87
    %s90 = sadd.s32 %s89, 1
    %p93 = scmp.eq.s32.totalorder %s13, 3
    %p94 = scmp.ne.s32.totalorder %s89, %s91
    %p95 = scmp.eq.s32.totalorder %s13, 0
    %p96 = por %p94, %p95
    %p97 = scmp.ne.s32.totalorder %s89, %s91
    %p98 = scmp.eq.s32.totalorder %s18, 3
    %p99 = por %p97, %p98
    %p100 = scmp.ne.s32.totalorder %s91, %s92
    %p101 = scmp.eq.s32.totalorder %s18, 0
    %p102 = por %p100, %p101
    %p103 = scmp.ne.s32.totalorder %s91, %s92
    %p104 = scmp.eq.s32.totalorder %s19, 3
    %p105 = por %p103, %p104
    %p107 = scmp.ne.s32.totalorder %s92, %s106
    %p108 = scmp.eq.s32.totalorder %s19, 0
    %p109 = por %p107, %p108
    %s111 = sadd.s32 %s110, 1
    %p114 = scmp.eq.s32.totalorder %s13, 3
    %p115 = scmp.ne.s32.totalorder %s110, %s112
    %p116 = scmp.eq.s32.totalorder %s13, 0
    %p117 = por %p115, %p116
    %p118 = scmp.ne.s32.totalorder %s110, %s112
    %p119 = scmp.eq.s32.totalorder %s18, 3
    %p120 = por %p118, %p119
    %p121 = scmp.ne.s32.totalorder %s112, %s113
    %p122 = scmp.eq.s32.totalorder %s18, 0
    %p123 = por %p121, %p122
    %p124 = scmp.ne.s32.totalorder %s112, %s113
    %p125 = scmp.eq.s32.totalorder %s19, 3
    %p126 = por %p124, %p125
    %p128 = scmp.ne.s32.totalorder %s113, %s127
    %p129 = scmp.eq.s32.totalorder %s19, 0
    %p130 = por %p128, %p129
    %s131 = ssub.s32 %s13, %s20
    %p132 = scmp.eq.s32.totalorder %s131, 0
    %s134 = sadd.s32 %s133, 1
    %s135 = scalar_select %p132, %s133, %s134
    %p138 = pneg %p132
    %p139 = scmp.eq.s32.totalorder %s13, 3
    %p140 = por %p138, %p139
    %p141 = scmp.ne.s32.totalorder %s133, %s136
    %p142 = scmp.eq.s32.totalorder %s13, 0
    %p143 = por %p141, %p142
    %p144 = scmp.ne.s32.totalorder %s133, %s136
    %p145 = scmp.eq.s32.totalorder %s18, 3
    %p146 = por %p144, %p145
    %p147 = scmp.ne.s32.totalorder %s136, %s137
    %p148 = scmp.eq.s32.totalorder %s18, 0
    %p149 = por %p147, %p148
    %p150 = scmp.ne.s32.totalorder %s136, %s137
    %p151 = scmp.eq.s32.totalorder %s19, 3
    %p152 = por %p150, %p151
    %p154 = scmp.ne.s32.totalorder %s137, %s153
    %p155 = scmp.eq.s32.totalorder %s19, 0
    %p156 = por %p154, %p155
    %s157 = ssub.s32 %s13, %s20
    %p158 = scmp.eq.s32.totalorder %s157, 0
    %s160 = sadd.s32 %s159, 1
    %s161 = scalar_select %p158, %s159, %s160
    %p164 = pneg %p158
    %p165 = scmp.eq.s32.totalorder %s13, 3
    %p166 = por %p164, %p165
    %p167 = scmp.ne.s32.totalorder %s159, %s162
    %p168 = scmp.eq.s32.totalorder %s13, 0
    %p169 = por %p167, %p168
    %p170 = scmp.ne.s32.totalorder %s159, %s162
    %p171 = scmp.eq.s32.totalorder %s18, 3
    %p172 = por %p170, %p171
    %p173 = scmp.ne.s32.totalorder %s162, %s163
    %p174 = scmp.eq.s32.totalorder %s18, 0
    %p175 = por %p173, %p174
    %p176 = scmp.ne.s32.totalorder %s162, %s163
    %p177 = scmp.eq.s32.totalorder %s19, 3
    %p178 = por %p176, %p177
    %p180 = scmp.ne.s32.totalorder %s163, %s179
    %p181 = scmp.eq.s32.totalorder %s19, 0
    %p182 = por %p180, %p181
    %p183 = scmp.le.s32.totalorder 1, %s13
    %p184 = scmp.lt.s32.totalorder %s13, 5
    %p185 = pnand %p183, %p184
    %p186 = pneg %p185
    // Predicated region
    $region9: #{cam_encode_pallas.1} parent=5 // pred_check
      _
    $region10: #{cam_encode_pallas.1} parent=5 // pred_check_branch
      %188 = sbr.rel (%p185) target = $region12
    $region11: #{cam_encode_pallas.1} parent=5 // pred_region
      %s189 = ssub.s32 %s13, 1
      // Predicated region
      $region13: #{cam_encode_pallas.1} parent=11 // pred_check
        %p190 = pneg %p60
      $region14: #{cam_encode_pallas.1} parent=11 // pred_check_branch
        %192 = sbr.rel (%p190) target = $region16
      $region15: #{cam_encode_pallas.1} parent=11 // pred_region
        _
      $region16: #{cam_encode_pallas.1} parent=11 // pred_fallthru
        _
      // Predicated region
      $region17: #{cam_encode_pallas.1} parent=11 // pred_check
        %p193 = pneg %p81
      $region18: #{cam_encode_pallas.1} parent=11 // pred_check_branch
        %195 = sbr.rel (%p193) target = $region20
      $region19: #{cam_encode_pallas.1} parent=11 // pred_region
        _
      $region20: #{cam_encode_pallas.1} parent=11 // pred_fallthru
        _
      // Predicated region
      $region21: #{cam_encode_pallas.1} parent=11 // pred_check
        %p196 = pneg %p102
      $region22: #{cam_encode_pallas.1} parent=11 // pred_check_branch
        %198 = sbr.rel (%p196) target = $region24
      $region23: #{cam_encode_pallas.1} parent=11 // pred_region
        _
      $region24: #{cam_encode_pallas.1} parent=11 // pred_fallthru
        _
      // Predicated region
      $region25: #{cam_encode_pallas.1} parent=11 // pred_check
        %p199 = pneg %p123
      $region26: #{cam_encode_pallas.1} parent=11 // pred_check_branch
        %201 = sbr.rel (%p199) target = $region28
      $region27: #{cam_encode_pallas.1} parent=11 // pred_region
        _
      $region28: #{cam_encode_pallas.1} parent=11 // pred_fallthru
        _
    $region12: #{cam_encode_pallas.1} parent=5 // pred_fallthru
      _
    %p202 = scmp.lt.s32.totalorder %s13, 4
    // Predicated region
    $region29: #{cam_encode_pallas.1} parent=5 // pred_check
      %p203 = pneg %p202
    $region30: #{cam_encode_pallas.1} parent=5 // pred_check_branch
      %205 = sbr.rel (%p203) target = $region32
    $region31: #{cam_encode_pallas.1} parent=5 // pred_region
      // Predicated region
      $region33: #{cam_encode_pallas.1} parent=31 // pred_check
        %p206 = pneg %p33
      $region34: #{cam_encode_pallas.1} parent=31 // pred_check_branch
        %208 = sbr.rel (%p206) target = $region36
      $region35: #{cam_encode_pallas.1} parent=31 // pred_region
        %s209 = smul.u32 64, %s13
        %p210 = scmp.lt.s32.totalorder %s209, 255
        %s211 = scalar_select %p210, %s209, 255
        %s212 = smul.addr %s211, 8
        %s213 = scalar_lea.vmem %s0, %s212
        %s214 = smul.u32 64, %s13
      $region36: #{cam_encode_pallas.1} parent=31 // pred_fallthru
        _
    $region32: #{cam_encode_pallas.1} parent=5 // pred_fallthru
      _
    %p215 = scmp.le.s32.totalorder 1, %s13
    %p216 = scmp.lt.s32.totalorder %s13, 5
    %p217 = pnand %p215, %p216
    %p218 = pneg %p217
    // Predicated region
    $region37: #{cam_encode_pallas.1} parent=5 // pred_check
      _
    $region38: #{cam_encode_pallas.1} parent=5 // pred_check_branch
      %220 = sbr.rel (%p217) target = $region40
    $region39: #{cam_encode_pallas.1} parent=5 // pred_region
      %s221 = ssub.s32 %s13, 1
      %s222 = smul.u32 64, %s18
      %p223 = scmp.lt.s32.totalorder %s222, 255
      %s224 = scalar_select %p223, %s222, 255
      %s225 = smul.addr %s224, 8
      %s226 = scalar_lea.vmem %s0, %s225
      %p227 = pneg %p39
      %p228 = pneg %p36
      %p229 = pneg %p60
      %p230 = pneg %p57
      %p231 = pneg %p81
      %p232 = pneg %p78
      %p233 = pneg %p102
      %p234 = pneg %p99
      %p235 = pneg %p123
      %p236 = pneg %p120
      %p237 = pneg %p149
      %p238 = pneg %p146
      %s239 = smul.u32 64, %s18
      %p240 = scmp.lt.s32.totalorder %s239, 255
      %s241 = scalar_select %p240, %s239, 255
      %s242 = smul.addr %s241, 4
      %s243 = scalar_lea.vmem %s5, %s242
      %p244 = pneg %p175
      %p245 = pneg %p172
      %s246 = smul.u32 64, %s18
      %p247 = scmp.lt.s32.totalorder %s246, 255
      %s248 = scalar_select %p247, %s246, 255
      %s249 = smul.addr %s248, 4
      %s250 = scalar_lea.vmem %s6, %s249
      %s251 = smul.u32 64, %s18
      %p252 = scmp.lt.s32.totalorder %s251, 255
      %s253 = scalar_select %p252, %s251, 255
      %s254 = smul.addr %s253, 8
      %s255 = scalar_lea.vmem %s0, %s254
      %s256 = smul.u32 64, %s18
      %s257 = smul.u32 64, %s18
      %p258 = scmp.lt.s32.totalorder %s257, 255
      %s259 = scalar_select %p258, %s257, 255
      %s260 = smul.addr %s259, 4
      %s261 = scalar_lea.vmem %s5, %s260
      %s262 = smul.u32 64, %s18
      %s263 = smul.u32 64, %s18
      %p264 = scmp.lt.s32.totalorder %s263, 255
      %s265 = scalar_select %p264, %s263, 255
      %s266 = smul.addr %s265, 4
      %s267 = scalar_lea.vmem %s6, %s266
      %s268 = smul.u32 64, %s18
      %v269 = vld [vmem:[%s255] sm:$0xff]
      %v270 = vld [vmem:[%s255 + $0x8] sm:$0xff]
      %v271 = vld [vmem:[%s255 + $0x10] sm:$0xff]
      %v272 = vld [vmem:[%s255 + $0x18] sm:$0xff]
      %v273 = vld [vmem:[%s255 + $0x20] sm:$0xff]
      %v274 = vld [vmem:[%s255 + $0x28] sm:$0xff]
      %v275 = vld [vmem:[%s255 + $0x30] sm:$0xff]
      %v276 = vld [vmem:[%s255 + $0x38] sm:$0xff]
      %v277 = vld [vmem:[%s255 + $0x40] sm:$0xff]
      %v278 = vld [vmem:[%s255 + $0x48] sm:$0xff]
      %v279 = vld [vmem:[%s255 + $0x50] sm:$0xff]
      %v280 = vld [vmem:[%s255 + $0x58] sm:$0xff]
      %v281 = vld [vmem:[%s255 + $0x60] sm:$0xff]
      %v282 = vld [vmem:[%s255 + $0x68] sm:$0xff]
      %v283 = vld [vmem:[%s255 + $0x70] sm:$0xff]
      %v284 = vld [vmem:[%s255 + $0x78] sm:$0xff]
      %v285 = vld [vmem:[%s255 + $0x80] sm:$0xff]
      %v286 = vld [vmem:[%s255 + $0x88] sm:$0xff]
      %v287 = vld [vmem:[%s255 + $0x90] sm:$0xff]
      %v288 = vld [vmem:[%s255 + $0x98] sm:$0xff]
      %v289 = vld [vmem:[%s255 + $0xa0] sm:$0xff]
      %v290 = vld [vmem:[%s255 + $0xa8] sm:$0xff]
      %v291 = vld [vmem:[%s255 + $0xb0] sm:$0xff]
      %v292 = vld [vmem:[%s255 + $0xb8] sm:$0xff]
      %v293 = vld [vmem:[%s255 + $0xc0] sm:$0xff]
      %v294 = vld [vmem:[%s255 + $0xc8] sm:$0xff]
      %v295 = vld [vmem:[%s255 + $0xd0] sm:$0xff]
      %v296 = vld [vmem:[%s255 + $0xd8] sm:$0xff]
      %v297 = vld [vmem:[%s255 + $0xe0] sm:$0xff]
      %v298 = vld [vmem:[%s255 + $0xe8] sm:$0xff]
      %v299 = vld [vmem:[%s255 + $0xf0] sm:$0xff]
      %v300 = vld [vmem:[%s255 + $0xf8] sm:$0xff]
      %v301 = vld [vmem:[%s255 + $0x100] sm:$0xff]
      %v302 = vld [vmem:[%s255 + $0x108] sm:$0xff]
      %v303 = vld [vmem:[%s255 + $0x110] sm:$0xff]
      %v304 = vld [vmem:[%s255 + $0x118] sm:$0xff]
      %v305 = vld [vmem:[%s255 + $0x120] sm:$0xff]
      %v306 = vld [vmem:[%s255 + $0x128] sm:$0xff]
      %v307 = vld [vmem:[%s255 + $0x130] sm:$0xff]
      %v308 = vld [vmem:[%s255 + $0x138] sm:$0xff]
      %v309 = vld [vmem:[%s255 + $0x140] sm:$0xff]
      %v310 = vld [vmem:[%s255 + $0x148] sm:$0xff]
      %v311 = vld [vmem:[%s255 + $0x150] sm:$0xff]
      %v312 = vld [vmem:[%s255 + $0x158] sm:$0xff]
      %v313 = vld [vmem:[%s255 + $0x160] sm:$0xff]
      %v314 = vld [vmem:[%s255 + $0x168] sm:$0xff]
      %v315 = vld [vmem:[%s255 + $0x170] sm:$0xff]
      %v316 = vld [vmem:[%s255 + $0x178] sm:$0xff]
      %v317 = vld [vmem:[%s255 + $0x180] sm:$0xff]
      %v318 = vld [vmem:[%s255 + $0x188] sm:$0xff]
      %v319 = vld [vmem:[%s255 + $0x190] sm:$0xff]
      %v320 = vld [vmem:[%s255 + $0x198] sm:$0xff]
      %v321 = vld [vmem:[%s255 + $0x1a0] sm:$0xff]
      %v322 = vld [vmem:[%s255 + $0x1a8] sm:$0xff]
      %v323 = vld [vmem:[%s255 + $0x1b0] sm:$0xff]
      %v324 = vld [vmem:[%s255 + $0x1b8] sm:$0xff]
      %v325 = vld [vmem:[%s255 + $0x1c0] sm:$0xff]
      %v326 = vld [vmem:[%s255 + $0x1c8] sm:$0xff]
      %v327 = vld [vmem:[%s255 + $0x1d0] sm:$0xff]
      %v328 = vld [vmem:[%s255 + $0x1d8] sm:$0xff]
      %v329 = vld [vmem:[%s255 + $0x1e0] sm:$0xff]
      %v330 = vld [vmem:[%s255 + $0x1e8] sm:$0xff]
      %v331 = vld [vmem:[%s255 + $0x1f0] sm:$0xff]
      %v332 = vld [vmem:[%s255 + $0x1f8] sm:$0xff]
      %v333 = vpack.c.bf16 %v270, %v269
      %v334 = vpack.c.bf16 %v272, %v271
      %v335 = vpack.c.bf16 %v274, %v273
      %v336 = vpack.c.bf16 %v276, %v275
      %v337 = vpack.c.bf16 %v278, %v277
      %v338 = vpack.c.bf16 %v280, %v279
      %v339 = vpack.c.bf16 %v282, %v281
      %v340 = vpack.c.bf16 %v284, %v283
      %v341 = vpack.c.bf16 %v286, %v285
      %v342 = vpack.c.bf16 %v288, %v287
      %v343 = vpack.c.bf16 %v290, %v289
      %v344 = vpack.c.bf16 %v292, %v291
      %v345 = vpack.c.bf16 %v294, %v293
      %v346 = vpack.c.bf16 %v296, %v295
      %v347 = vpack.c.bf16 %v298, %v297
      %v348 = vpack.c.bf16 %v300, %v299
      %v349 = vpack.c.bf16 %v302, %v301
      %v350 = vpack.c.bf16 %v304, %v303
      %v351 = vpack.c.bf16 %v306, %v305
      %v352 = vpack.c.bf16 %v308, %v307
      %v353 = vpack.c.bf16 %v310, %v309
      %v354 = vpack.c.bf16 %v312, %v311
      %v355 = vpack.c.bf16 %v314, %v313
      %v356 = vpack.c.bf16 %v316, %v315
      %v357 = vpack.c.bf16 %v318, %v317
      %v358 = vpack.c.bf16 %v320, %v319
      %v359 = vpack.c.bf16 %v322, %v321
      %v360 = vpack.c.bf16 %v324, %v323
      %v361 = vpack.c.bf16 %v326, %v325
      %v362 = vpack.c.bf16 %v328, %v327
      %v363 = vpack.c.bf16 %v330, %v329
      %v364 = vpack.c.bf16 %v332, %v331
      %v365 = vld [vmem:[%s1] sm:$0xff]
      %v366 = vld [vmem:[%s1 + $0x8] sm:$0xff]
      %v367 = vld [vmem:[%s1 + $0x10] sm:$0xff]
      %v368 = vld [vmem:[%s1 + $0x18] sm:$0xff]
      %v369 = vld [vmem:[%s1 + $0x20] sm:$0xff]
      %v370 = vld [vmem:[%s1 + $0x28] sm:$0xff]
      %v371 = vld [vmem:[%s1 + $0x30] sm:$0xff]
      %v372 = vld [vmem:[%s1 + $0x38] sm:$0xff]
      %v373 = vld [vmem:[%s1 + $0x40] sm:$0xff]
      %v374 = vld [vmem:[%s1 + $0x48] sm:$0xff]
      %v375 = vld [vmem:[%s1 + $0x50] sm:$0xff]
      %v376 = vld [vmem:[%s1 + $0x58] sm:$0xff]
      %v377 = vld [vmem:[%s1 + $0x60] sm:$0xff]
      %v378 = vld [vmem:[%s1 + $0x68] sm:$0xff]
      %v379 = vld [vmem:[%s1 + $0x70] sm:$0xff]
      %v380 = vld [vmem:[%s1 + $0x78] sm:$0xff]
      %v381 = vld [vmem:[%s1 + $0x80] sm:$0xff]
      %v382 = vld [vmem:[%s1 + $0x88] sm:$0xff]
      %v383 = vld [vmem:[%s1 + $0x90] sm:$0xff]
      %v384 = vld [vmem:[%s1 + $0x98] sm:$0xff]
      %v385 = vld [vmem:[%s1 + $0xa0] sm:$0xff]
      %v386 = vld [vmem:[%s1 + $0xa8] sm:$0xff]
      %v387 = vld [vmem:[%s1 + $0xb0] sm:$0xff]
      %v388 = vld [vmem:[%s1 + $0xb8] sm:$0xff]
      %v389 = vld [vmem:[%s1 + $0xc0] sm:$0xff]
      %v390 = vld [vmem:[%s1 + $0xc8] sm:$0xff]
      %v391 = vld [vmem:[%s1 + $0xd0] sm:$0xff]
      %v392 = vld [vmem:[%s1 + $0xd8] sm:$0xff]
      %v393 = vld [vmem:[%s1 + $0xe0] sm:$0xff]
      %v394 = vld [vmem:[%s1 + $0xe8] sm:$0xff]
      %v395 = vld [vmem:[%s1 + $0xf0] sm:$0xff]
      %v396 = vld [vmem:[%s1 + $0xf8] sm:$0xff]
      %v429 = vunpack.c.l.b16 %v365
      %v430 = vunpack.c.h.b16 %v365
      %v431 = vunpack.c.l.b16 %v366
      %v432 = vunpack.c.h.b16 %v366
      %v433 = vunpack.c.l.b16 %v367
      %v434 = vunpack.c.h.b16 %v367
      %v435 = vunpack.c.l.b16 %v368
      %v436 = vunpack.c.h.b16 %v368
      %v437 = vunpack.c.l.b16 %v369
      %v438 = vunpack.c.h.b16 %v369
      %v439 = vunpack.c.l.b16 %v370
      %v440 = vunpack.c.h.b16 %v370
      %v441 = vunpack.c.l.b16 %v371
      %v442 = vunpack.c.h.b16 %v371
      %v443 = vunpack.c.l.b16 %v372
      %v444 = vunpack.c.h.b16 %v372
      %v445 = vunpack.c.l.b16 %v373
      %v446 = vunpack.c.h.b16 %v373
      %v447 = vunpack.c.l.b16 %v374
      %v448 = vunpack.c.h.b16 %v374
      %v449 = vunpack.c.l.b16 %v375
      %v450 = vunpack.c.h.b16 %v375
      %v451 = vunpack.c.l.b16 %v376
      %v452 = vunpack.c.h.b16 %v376
      %v453 = vunpack.c.l.b16 %v377
      %v454 = vunpack.c.h.b16 %v377
      %v455 = vunpack.c.l.b16 %v378
      %v456 = vunpack.c.h.b16 %v378
      %v457 = vunpack.c.l.b16 %v379
      %v458 = vunpack.c.h.b16 %v379
      %v459 = vunpack.c.l.b16 %v380
      %v460 = vunpack.c.h.b16 %v380
      %v461 = vunpack.c.l.b16 %v381
      %v462 = vunpack.c.h.b16 %v381
      %v463 = vunpack.c.l.b16 %v382
      %v464 = vunpack.c.h.b16 %v382
      %v465 = vunpack.c.l.b16 %v383
      %v466 = vunpack.c.h.b16 %v383
      %v467 = vunpack.c.l.b16 %v384
      %v468 = vunpack.c.h.b16 %v384
      %v469 = vunpack.c.l.b16 %v385
      %v470 = vunpack.c.h.b16 %v385
      %v471 = vunpack.c.l.b16 %v386
      %v472 = vunpack.c.h.b16 %v386
      %v473 = vunpack.c.l.b16 %v387
      %v474 = vunpack.c.h.b16 %v387
      %v475 = vunpack.c.l.b16 %v388
      %v476 = vunpack.c.h.b16 %v388
      %v477 = vunpack.c.l.b16 %v389
      %v478 = vunpack.c.h.b16 %v389
      %v479 = vunpack.c.l.b16 %v390
      %v480 = vunpack.c.h.b16 %v390
      %v481 = vunpack.c.l.b16 %v391
      %v482 = vunpack.c.h.b16 %v391
      %v483 = vunpack.c.l.b16 %v392
      %v484 = vunpack.c.h.b16 %v392
      %v485 = vunpack.c.l.b16 %v393
      %v486 = vunpack.c.h.b16 %v393
      %v487 = vunpack.c.l.b16 %v394
      %v488 = vunpack.c.h.b16 %v394
      %v489 = vunpack.c.l.b16 %v395
      %v490 = vunpack.c.h.b16 %v395
      %v491 = vunpack.c.l.b16 %v396
      %v492 = vunpack.c.h.b16 %v396
      %v493 = vpack.c.b16 %v433, %v429
      %v494 = vpack.c.b16 %v434, %v430
      %v495 = vpack.c.b16 %v435, %v431
      %v496 = vpack.c.b16 %v436, %v432
      %v497 = vpack.c.b16 %v441, %v437
      %v498 = vpack.c.b16 %v442, %v438
      %v499 = vpack.c.b16 %v443, %v439
      %v500 = vpack.c.b16 %v444, %v440
      %v501 = vpack.c.b16 %v449, %v445
      %v502 = vpack.c.b16 %v450, %v446
      %v503 = vpack.c.b16 %v451, %v447
      %v504 = vpack.c.b16 %v452, %v448
      %v505 = vpack.c.b16 %v457, %v453
      %v506 = vpack.c.b16 %v458, %v454
      %v507 = vpack.c.b16 %v459, %v455
      %v508 = vpack.c.b16 %v460, %v456
      %v509 = vpack.c.b16 %v465, %v461
      %v510 = vpack.c.b16 %v466, %v462
      %v511 = vpack.c.b16 %v467, %v463
      %v512 = vpack.c.b16 %v468, %v464
      %v513 = vpack.c.b16 %v473, %v469
      %v514 = vpack.c.b16 %v474, %v470
      %v515 = vpack.c.b16 %v475, %v471
      %v516 = vpack.c.b16 %v476, %v472
      %v517 = vpack.c.b16 %v481, %v477
      %v518 = vpack.c.b16 %v482, %v478
      %v519 = vpack.c.b16 %v483, %v479
      %v520 = vpack.c.b16 %v484, %v480
      %v521 = vpack.c.b16 %v489, %v485
      %v522 = vpack.c.b16 %v490, %v486
      %v523 = vpack.c.b16 %v491, %v487
      %v524 = vpack.c.b16 %v492, %v488
      %557 = vmatpush.bf16.msra.mxu0 %v521
      %558 = vmatpush.bf16.msra.mxu0 %v517
      %559 = vmatpush.bf16.msra.mxu0 %v513
      %560 = vmatpush.bf16.msra.mxu0 %v509
      %561 = vmatpush.bf16.msra.mxu0 %v505
      %562 = vmatpush.bf16.msra.mxu0 %v501
      %563 = vmatpush.bf16.msra.mxu0 %v497
      %564 = vmatpush.bf16.msra.mxu0 %v493
      %565 = vmatmul.bf16.gmra.mxu0 %v333
      %v566 = vpop.f32.mrf.mxu0
      %v567 = vadd.f32 0.0, %v566
      %v568 = vpop.f32.mrf.mxu0
      %v569 = vadd.f32 0.0, %v568
      %570 = vmatmul.bf16.gmra.mxu0 %v334
      %v571 = vpop.f32.mrf.mxu0
      %v572 = vadd.f32 0.0, %v571
      %v573 = vpop.f32.mrf.mxu0
      %v574 = vadd.f32 0.0, %v573
      %575 = vmatmul.bf16.gmra.mxu0 %v335
      %v576 = vpop.f32.mrf.mxu0
      %v577 = vadd.f32 0.0, %v576
      %v578 = vpop.f32.mrf.mxu0
      %v579 = vadd.f32 0.0, %v578
      %580 = vmatmul.bf16.gmra.mxu0 %v336
      %v581 = vpop.f32.mrf.mxu0
      %v582 = vadd.f32 0.0, %v581
      %v583 = vpop.f32.mrf.mxu0
      %v584 = vadd.f32 0.0, %v583
      %585 = vmatmul.bf16.gmra.mxu0 %v337
      %v586 = vpop.f32.mrf.mxu0
      %v587 = vadd.f32 0.0, %v586
      %v588 = vpop.f32.mrf.mxu0
      %v589 = vadd.f32 0.0, %v588
      %590 = vmatmul.bf16.gmra.mxu0 %v338
      %v591 = vpop.f32.mrf.mxu0
      %v592 = vadd.f32 0.0, %v591
      %v593 = vpop.f32.mrf.mxu0
      %v594 = vadd.f32 0.0, %v593
      %595 = vmatmul.bf16.gmra.mxu0 %v339
      %v596 = vpop.f32.mrf.mxu0
      %v597 = vadd.f32 0.0, %v596
      %v598 = vpop.f32.mrf.mxu0
      %v599 = vadd.f32 0.0, %v598
      %600 = vmatmul.bf16.gmra.mxu0 %v340
      %v601 = vpop.f32.mrf.mxu0
      %v602 = vadd.f32 0.0, %v601
      %v603 = vpop.f32.mrf.mxu0
      %v604 = vadd.f32 0.0, %v603
      %605 = vmatmul.bf16.gmra.mxu0 %v341
      %v606 = vpop.f32.mrf.mxu0
      %v607 = vadd.f32 0.0, %v606
      %v608 = vpop.f32.mrf.mxu0
      %v609 = vadd.f32 0.0, %v608
      %610 = vmatmul.bf16.gmra.mxu0 %v342
      %v611 = vpop.f32.mrf.mxu0
      %v612 = vadd.f32 0.0, %v611
      %v613 = vpop.f32.mrf.mxu0
      %v614 = vadd.f32 0.0, %v613
      %615 = vmatmul.bf16.gmra.mxu0 %v343
      %v616 = vpop.f32.mrf.mxu0
      %v617 = vadd.f32 0.0, %v616
      %v618 = vpop.f32.mrf.mxu0
      %v619 = vadd.f32 0.0, %v618
      %620 = vmatmul.bf16.gmra.mxu0 %v344
      %v621 = vpop.f32.mrf.mxu0
      %v622 = vadd.f32 0.0, %v621
      %v623 = vpop.f32.mrf.mxu0
      %v624 = vadd.f32 0.0, %v623
      %625 = vmatmul.bf16.gmra.mxu0 %v345
      %v626 = vpop.f32.mrf.mxu0
      %v627 = vadd.f32 0.0, %v626
      %v628 = vpop.f32.mrf.mxu0
      %v629 = vadd.f32 0.0, %v628
      %630 = vmatmul.bf16.gmra.mxu0 %v346
      %v631 = vpop.f32.mrf.mxu0
      %v632 = vadd.f32 0.0, %v631
      %v633 = vpop.f32.mrf.mxu0
      %v634 = vadd.f32 0.0, %v633
      %635 = vmatmul.bf16.gmra.mxu0 %v347
      %v636 = vpop.f32.mrf.mxu0
      %v637 = vadd.f32 0.0, %v636
      %v638 = vpop.f32.mrf.mxu0
      %v639 = vadd.f32 0.0, %v638
      %640 = vmatmul.bf16.gmra.mxu0 %v348
      %v641 = vpop.f32.mrf.mxu0
      %v642 = vadd.f32 0.0, %v641
      %v643 = vpop.f32.mrf.mxu0
      %v644 = vadd.f32 0.0, %v643
      %645 = vmatmul.bf16.gmra.mxu0 %v349
      %v646 = vpop.f32.mrf.mxu0
      %v647 = vadd.f32 0.0, %v646
      %v648 = vpop.f32.mrf.mxu0
      %v649 = vadd.f32 0.0, %v648
      %650 = vmatmul.bf16.gmra.mxu0 %v350
      %v651 = vpop.f32.mrf.mxu0
      %v652 = vadd.f32 0.0, %v651
      %v653 = vpop.f32.mrf.mxu0
      %v654 = vadd.f32 0.0, %v653
      %655 = vmatmul.bf16.gmra.mxu0 %v351
      %v656 = vpop.f32.mrf.mxu0
      %v657 = vadd.f32 0.0, %v656
      %v658 = vpop.f32.mrf.mxu0
      %v659 = vadd.f32 0.0, %v658
      %660 = vmatmul.bf16.gmra.mxu0 %v352
      %v661 = vpop.f32.mrf.mxu0
      %v662 = vadd.f32 0.0, %v661
      %v663 = vpop.f32.mrf.mxu0
      %v664 = vadd.f32 0.0, %v663
      %665 = vmatmul.bf16.gmra.mxu0 %v353
      %v666 = vpop.f32.mrf.mxu0
      %v667 = vadd.f32 0.0, %v666
      %v668 = vpop.f32.mrf.mxu0
      %v669 = vadd.f32 0.0, %v668
      %670 = vmatmul.bf16.gmra.mxu0 %v354
      %v671 = vpop.f32.mrf.mxu0
      %v672 = vadd.f32 0.0, %v671
      %v673 = vpop.f32.mrf.mxu0
      %v674 = vadd.f32 0.0, %v673
      %675 = vmatmul.bf16.gmra.mxu0 %v355
      %v676 = vpop.f32.mrf.mxu0
      %v677 = vadd.f32 0.0, %v676
      %v678 = vpop.f32.mrf.mxu0
      %v679 = vadd.f32 0.0, %v678
      %680 = vmatmul.bf16.gmra.mxu0 %v356
      %v681 = vpop.f32.mrf.mxu0
      %v682 = vadd.f32 0.0, %v681
      %v683 = vpop.f32.mrf.mxu0
      %v684 = vadd.f32 0.0, %v683
      %685 = vmatmul.bf16.gmra.mxu0 %v357
      %v686 = vpop.f32.mrf.mxu0
      %v687 = vadd.f32 0.0, %v686
      %v688 = vpop.f32.mrf.mxu0
      %v689 = vadd.f32 0.0, %v688
      %690 = vmatmul.bf16.gmra.mxu0 %v358
      %v691 = vpop.f32.mrf.mxu0
      %v692 = vadd.f32 0.0, %v691
      %v693 = vpop.f32.mrf.mxu0
      %v694 = vadd.f32 0.0, %v693
      %695 = vmatmul.bf16.gmra.mxu0 %v359
      %v696 = vpop.f32.mrf.mxu0
      %v697 = vadd.f32 0.0, %v696
      %v698 = vpop.f32.mrf.mxu0
      %v699 = vadd.f32 0.0, %v698
      %700 = vmatmul.bf16.gmra.mxu0 %v360
      %v701 = vpop.f32.mrf.mxu0
      %v702 = vadd.f32 0.0, %v701
      %v703 = vpop.f32.mrf.mxu0
      %v704 = vadd.f32 0.0, %v703
      %705 = vmatmul.bf16.gmra.mxu0 %v361
      %v706 = vpop.f32.mrf.mxu0
      %v707 = vadd.f32 0.0, %v706
      %v708 = vpop.f32.mrf.mxu0
      %v709 = vadd.f32 0.0, %v708
      %710 = vmatmul.bf16.gmra.mxu0 %v362
      %v711 = vpop.f32.mrf.mxu0
      %v712 = vadd.f32 0.0, %v711
      %v713 = vpop.f32.mrf.mxu0
      %v714 = vadd.f32 0.0, %v713
      %715 = vmatmul.bf16.gmra.mxu0 %v363
      %v716 = vpop.f32.mrf.mxu0
      %v717 = vadd.f32 0.0, %v716
      %v718 = vpop.f32.mrf.mxu0
      %v719 = vadd.f32 0.0, %v718
      %720 = vmatmul.bf16.gmra.mxu0 %v364
      %v721 = vpop.f32.mrf.mxu0
      %v722 = vadd.f32 0.0, %v721
      %v723 = vpop.f32.mrf.mxu0
      %v724 = vadd.f32 0.0, %v723
      %725 = vdwg.mxu0
      %726 = vmatpush.bf16.msra.mxu0 %v522
      %727 = vmatpush.bf16.msra.mxu0 %v518
      %728 = vmatpush.bf16.msra.mxu0 %v514
      %729 = vmatpush.bf16.msra.mxu0 %v510
      %730 = vmatpush.bf16.msra.mxu0 %v506
      %731 = vmatpush.bf16.msra.mxu0 %v502
      %732 = vmatpush.bf16.msra.mxu0 %v498
      %733 = vmatpush.bf16.msra.mxu0 %v494
      %734 = vmatmul.bf16.gmra.mxu0 %v333
      %v735 = vpop.f32.mrf.mxu0
      %v736 = vadd.f32 0.0, %v735
      %v737 = vpop.f32.mrf.mxu0
      %v738 = vadd.f32 0.0, %v737
      %739 = vmatmul.bf16.gmra.mxu0 %v334
      %v740 = vpop.f32.mrf.mxu0
      %v741 = vadd.f32 0.0, %v740
      %v742 = vpop.f32.mrf.mxu0
      %v743 = vadd.f32 0.0, %v742
      %744 = vmatmul.bf16.gmra.mxu0 %v335
      %v745 = vpop.f32.mrf.mxu0
      %v746 = vadd.f32 0.0, %v745
      %v747 = vpop.f32.mrf.mxu0
      %v748 = vadd.f32 0.0, %v747
      %749 = vmatmul.bf16.gmra.mxu0 %v336
      %v750 = vpop.f32.mrf.mxu0
      %v751 = vadd.f32 0.0, %v750
      %v752 = vpop.f32.mrf.mxu0
      %v753 = vadd.f32 0.0, %v752
      %754 = vmatmul.bf16.gmra.mxu0 %v337
      %v755 = vpop.f32.mrf.mxu0
      %v756 = vadd.f32 0.0, %v755
      %v757 = vpop.f32.mrf.mxu0
      %v758 = vadd.f32 0.0, %v757
      %759 = vmatmul.bf16.gmra.mxu0 %v338
      %v760 = vpop.f32.mrf.mxu0
      %v761 = vadd.f32 0.0, %v760
      %v762 = vpop.f32.mrf.mxu0
      %v763 = vadd.f32 0.0, %v762
      %764 = vmatmul.bf16.gmra.mxu0 %v339
      %v765 = vpop.f32.mrf.mxu0
      %v766 = vadd.f32 0.0, %v765
      %v767 = vpop.f32.mrf.mxu0
      %v768 = vadd.f32 0.0, %v767
      %769 = vmatmul.bf16.gmra.mxu0 %v340
      %v770 = vpop.f32.mrf.mxu0
      %v771 = vadd.f32 0.0, %v770
      %v772 = vpop.f32.mrf.mxu0
      %v773 = vadd.f32 0.0, %v772
      %774 = vmatmul.bf16.gmra.mxu0 %v341
      %v775 = vpop.f32.mrf.mxu0
      %v776 = vadd.f32 0.0, %v775
      %v777 = vpop.f32.mrf.mxu0
      %v778 = vadd.f32 0.0, %v777
      %779 = vmatmul.bf16.gmra.mxu0 %v342
      %v780 = vpop.f32.mrf.mxu0
      %v781 = vadd.f32 0.0, %v780
      %v782 = vpop.f32.mrf.mxu0
      %v783 = vadd.f32 0.0, %v782
      %784 = vmatmul.bf16.gmra.mxu0 %v343
      %v785 = vpop.f32.mrf.mxu0
      %v786 = vadd.f32 0.0, %v785
      %v787 = vpop.f32.mrf.mxu0
      %v788 = vadd.f32 0.0, %v787
      %789 = vmatmul.bf16.gmra.mxu0 %v344
      %v790 = vpop.f32.mrf.mxu0
      %v791 = vadd.f32 0.0, %v790
      %v792 = vpop.f32.mrf.mxu0
      %v793 = vadd.f32 0.0, %v792
      %794 = vmatmul.bf16.gmra.mxu0 %v345
      %v795 = vpop.f32.mrf.mxu0
      %v796 = vadd.f32 0.0, %v795
      %v797 = vpop.f32.mrf.mxu0
      %v798 = vadd.f32 0.0, %v797
      %799 = vmatmul.bf16.gmra.mxu0 %v346
      %v800 = vpop.f32.mrf.mxu0
      %v801 = vadd.f32 0.0, %v800
      %v802 = vpop.f32.mrf.mxu0
      %v803 = vadd.f32 0.0, %v802
      %804 = vmatmul.bf16.gmra.mxu0 %v347
      %v805 = vpop.f32.mrf.mxu0
      %v806 = vadd.f32 0.0, %v805
      %v807 = vpop.f32.mrf.mxu0
      %v808 = vadd.f32 0.0, %v807
      %809 = vmatmul.bf16.gmra.mxu0 %v348
      %v810 = vpop.f32.mrf.mxu0
      %v811 = vadd.f32 0.0, %v810
      %v812 = vpop.f32.mrf.mxu0
      %v813 = vadd.f32 0.0, %v812
      %814 = vmatmul.bf16.gmra.mxu0 %v349
      %v815 = vpop.f32.mrf.mxu0
      %v816 = vadd.f32 0.0, %v815
      %v817 = vpop.f32.mrf.mxu0
      %v818 = vadd.f32 0.0, %v817
      %819 = vmatmul.bf16.gmra.mxu0 %v350
      %v820 = vpop.f32.mrf.mxu0
      %v821 = vadd.f32 0.0, %v820
      %v822 = vpop.f32.mrf.mxu0
      %v823 = vadd.f32 0.0, %v822
      %824 = vmatmul.bf16.gmra.mxu0 %v351
      %v825 = vpop.f32.mrf.mxu0
      %v826 = vadd.f32 0.0, %v825
      %v827 = vpop.f32.mrf.mxu0
      %v828 = vadd.f32 0.0, %v827
      %829 = vmatmul.bf16.gmra.mxu0 %v352
      %v830 = vpop.f32.mrf.mxu0
      %v831 = vadd.f32 0.0, %v830
      %v832 = vpop.f32.mrf.mxu0
      %v833 = vadd.f32 0.0, %v832
      %834 = vmatmul.bf16.gmra.mxu0 %v353
      %v835 = vpop.f32.mrf.mxu0
      %v836 = vadd.f32 0.0, %v835
      %v837 = vpop.f32.mrf.mxu0
      %v838 = vadd.f32 0.0, %v837
      %839 = vmatmul.bf16.gmra.mxu0 %v354
      %v840 = vpop.f32.mrf.mxu0
      %v841 = vadd.f32 0.0, %v840
      %v842 = vpop.f32.mrf.mxu0
      %v843 = vadd.f32 0.0, %v842
      %844 = vmatmul.bf16.gmra.mxu0 %v355
      %v845 = vpop.f32.mrf.mxu0
      %v846 = vadd.f32 0.0, %v845
      %v847 = vpop.f32.mrf.mxu0
      %v848 = vadd.f32 0.0, %v847
      %849 = vmatmul.bf16.gmra.mxu0 %v356
      %v850 = vpop.f32.mrf.mxu0
      %v851 = vadd.f32 0.0, %v850
      %v852 = vpop.f32.mrf.mxu0
      %v853 = vadd.f32 0.0, %v852
      %854 = vmatmul.bf16.gmra.mxu0 %v357
      %v855 = vpop.f32.mrf.mxu0
      %v856 = vadd.f32 0.0, %v855
      %v857 = vpop.f32.mrf.mxu0
      %v858 = vadd.f32 0.0, %v857
      %859 = vmatmul.bf16.gmra.mxu0 %v358
      %v860 = vpop.f32.mrf.mxu0
      %v861 = vadd.f32 0.0, %v860
      %v862 = vpop.f32.mrf.mxu0
      %v863 = vadd.f32 0.0, %v862
      %864 = vmatmul.bf16.gmra.mxu0 %v359
      %v865 = vpop.f32.mrf.mxu0
      %v866 = vadd.f32 0.0, %v865
      %v867 = vpop.f32.mrf.mxu0
      %v868 = vadd.f32 0.0, %v867
      %869 = vmatmul.bf16.gmra.mxu0 %v360
      %v870 = vpop.f32.mrf.mxu0
      %v871 = vadd.f32 0.0, %v870
      %v872 = vpop.f32.mrf.mxu0
      %v873 = vadd.f32 0.0, %v872
      %874 = vmatmul.bf16.gmra.mxu0 %v361
      %v875 = vpop.f32.mrf.mxu0
      %v876 = vadd.f32 0.0, %v875
      %v877 = vpop.f32.mrf.mxu0
      %v878 = vadd.f32 0.0, %v877
      %879 = vmatmul.bf16.gmra.mxu0 %v362
      %v880 = vpop.f32.mrf.mxu0
      %v881 = vadd.f32 0.0, %v880
      %v882 = vpop.f32.mrf.mxu0
      %v883 = vadd.f32 0.0, %v882
      %884 = vmatmul.bf16.gmra.mxu0 %v363
      %v885 = vpop.f32.mrf.mxu0
      %v886 = vadd.f32 0.0, %v885
      %v887 = vpop.f32.mrf.mxu0
      %v888 = vadd.f32 0.0, %v887
      %889 = vmatmul.bf16.gmra.mxu0 %v364
      %v890 = vpop.f32.mrf.mxu0
      %v891 = vadd.f32 0.0, %v890
      %v892 = vpop.f32.mrf.mxu0
      %v893 = vadd.f32 0.0, %v892
      %894 = vdwg.mxu0
      %895 = vmatpush.bf16.msra.mxu0 %v523
      %896 = vmatpush.bf16.msra.mxu0 %v519
      %897 = vmatpush.bf16.msra.mxu0 %v515
      %898 = vmatpush.bf16.msra.mxu0 %v511
      %899 = vmatpush.bf16.msra.mxu0 %v507
      %900 = vmatpush.bf16.msra.mxu0 %v503
      %901 = vmatpush.bf16.msra.mxu0 %v499
      %902 = vmatpush.bf16.msra.mxu0 %v495
      %903 = vmatmul.bf16.gmra.mxu0 %v333
      %v904 = vpop.f32.mrf.mxu0
      %v905 = vadd.f32 0.0, %v904
      %v906 = vpop.f32.mrf.mxu0
      %v907 = vadd.f32 0.0, %v906
      %908 = vmatmul.bf16.gmra.mxu0 %v334
      %v909 = vpop.f32.mrf.mxu0
      %v910 = vadd.f32 0.0, %v909
      %v911 = vpop.f32.mrf.mxu0
      %v912 = vadd.f32 0.0, %v911
      %913 = vmatmul.bf16.gmra.mxu0 %v335
      %v914 = vpop.f32.mrf.mxu0
      %v915 = vadd.f32 0.0, %v914
      %v916 = vpop.f32.mrf.mxu0
      %v917 = vadd.f32 0.0, %v916
      %918 = vmatmul.bf16.gmra.mxu0 %v336
      %v919 = vpop.f32.mrf.mxu0
      %v920 = vadd.f32 0.0, %v919
      %v921 = vpop.f32.mrf.mxu0
      %v922 = vadd.f32 0.0, %v921
      %923 = vmatmul.bf16.gmra.mxu0 %v337
      %v924 = vpop.f32.mrf.mxu0
      %v925 = vadd.f32 0.0, %v924
      %v926 = vpop.f32.mrf.mxu0
      %v927 = vadd.f32 0.0, %v926
      %928 = vmatmul.bf16.gmra.mxu0 %v338
      %v929 = vpop.f32.mrf.mxu0
      %v930 = vadd.f32 0.0, %v929
      %v931 = vpop.f32.mrf.mxu0
      %v932 = vadd.f32 0.0, %v931
      %933 = vmatmul.bf16.gmra.mxu0 %v339
      %v934 = vpop.f32.mrf.mxu0
      %v935 = vadd.f32 0.0, %v934
      %v936 = vpop.f32.mrf.mxu0
      %v937 = vadd.f32 0.0, %v936
      %938 = vmatmul.bf16.gmra.mxu0 %v340
      %v939 = vpop.f32.mrf.mxu0
      %v940 = vadd.f32 0.0, %v939
      %v941 = vpop.f32.mrf.mxu0
      %v942 = vadd.f32 0.0, %v941
      %943 = vmatmul.bf16.gmra.mxu0 %v341
      %v944 = vpop.f32.mrf.mxu0
      %v945 = vadd.f32 0.0, %v944
      %v946 = vpop.f32.mrf.mxu0
      %v947 = vadd.f32 0.0, %v946
      %948 = vmatmul.bf16.gmra.mxu0 %v342
      %v949 = vpop.f32.mrf.mxu0
      %v950 = vadd.f32 0.0, %v949
      %v951 = vpop.f32.mrf.mxu0
      %v952 = vadd.f32 0.0, %v951
      %953 = vmatmul.bf16.gmra.mxu0 %v343
      %v954 = vpop.f32.mrf.mxu0
      %v955 = vadd.f32 0.0, %v954
      %v956 = vpop.f32.mrf.mxu0
      %v957 = vadd.f32 0.0, %v956
      %958 = vmatmul.bf16.gmra.mxu0 %v344
      %v959 = vpop.f32.mrf.mxu0
      %v960 = vadd.f32 0.0, %v959
      %v961 = vpop.f32.mrf.mxu0
      %v962 = vadd.f32 0.0, %v961
      %963 = vmatmul.bf16.gmra.mxu0 %v345
      %v964 = vpop.f32.mrf.mxu0
      %v965 = vadd.f32 0.0, %v964
      %v966 = vpop.f32.mrf.mxu0
      %v967 = vadd.f32 0.0, %v966
      %968 = vmatmul.bf16.gmra.mxu0 %v346
      %v969 = vpop.f32.mrf.mxu0
      %v970 = vadd.f32 0.0, %v969
      %v971 = vpop.f32.mrf.mxu0
      %v972 = vadd.f32 0.0, %v971
      %973 = vmatmul.bf16.gmra.mxu0 %v347
      %v974 = vpop.f32.mrf.mxu0
      %v975 = vadd.f32 0.0, %v974
      %v976 = vpop.f32.mrf.mxu0
      %v977 = vadd.f32 0.0, %v976
      %978 = vmatmul.bf16.gmra.mxu0 %v348
      %v979 = vpop.f32.mrf.mxu0
      %v980 = vadd.f32 0.0, %v979
      %v981 = vpop.f32.mrf.mxu0
      %v982 = vadd.f32 0.0, %v981
      %983 = vmatmul.bf16.gmra.mxu0 %v349
      %v984 = vpop.f32.mrf.mxu0
      %v985 = vadd.f32 0.0, %v984
      %v986 = vpop.f32.mrf.mxu0
      %v987 = vadd.f32 0.0, %v986
      %988 = vmatmul.bf16.gmra.mxu0 %v350
      %v989 = vpop.f32.mrf.mxu0
      %v990 = vadd.f32 0.0, %v989
      %v991 = vpop.f32.mrf.mxu0
      %v992 = vadd.f32 0.0, %v991
      %993 = vmatmul.bf16.gmra.mxu0 %v351
      %v994 = vpop.f32.mrf.mxu0
      %v995 = vadd.f32 0.0, %v994
      %v996 = vpop.f32.mrf.mxu0
      %v997 = vadd.f32 0.0, %v996
      %998 = vmatmul.bf16.gmra.mxu0 %v352
      %v999 = vpop.f32.mrf.mxu0
      %v1000 = vadd.f32 0.0, %v999
      %v1001 = vpop.f32.mrf.mxu0
      %v1002 = vadd.f32 0.0, %v1001
      %1003 = vmatmul.bf16.gmra.mxu0 %v353
      %v1004 = vpop.f32.mrf.mxu0
      %v1005 = vadd.f32 0.0, %v1004
      %v1006 = vpop.f32.mrf.mxu0
      %v1007 = vadd.f32 0.0, %v1006
      %1008 = vmatmul.bf16.gmra.mxu0 %v354
      %v1009 = vpop.f32.mrf.mxu0
      %v1010 = vadd.f32 0.0, %v1009
      %v1011 = vpop.f32.mrf.mxu0
      %v1012 = vadd.f32 0.0, %v1011
      %1013 = vmatmul.bf16.gmra.mxu0 %v355
      %v1014 = vpop.f32.mrf.mxu0
      %v1015 = vadd.f32 0.0, %v1014
      %v1016 = vpop.f32.mrf.mxu0
      %v1017 = vadd.f32 0.0, %v1016
      %1018 = vmatmul.bf16.gmra.mxu0 %v356
      %v1019 = vpop.f32.mrf.mxu0
      %v1020 = vadd.f32 0.0, %v1019
      %v1021 = vpop.f32.mrf.mxu0
      %v1022 = vadd.f32 0.0, %v1021
      %1023 = vmatmul.bf16.gmra.mxu0 %v357
      %v1024 = vpop.f32.mrf.mxu0
      %v1025 = vadd.f32 0.0, %v1024
      %v1026 = vpop.f32.mrf.mxu0
      %v1027 = vadd.f32 0.0, %v1026
      %1028 = vmatmul.bf16.gmra.mxu0 %v358
      %v1029 = vpop.f32.mrf.mxu0
      %v1030 = vadd.f32 0.0, %v1029
      %v1031 = vpop.f32.mrf.mxu0
      %v1032 = vadd.f32 0.0, %v1031
      %1033 = vmatmul.bf16.gmra.mxu0 %v359
      %v1034 = vpop.f32.mrf.mxu0
      %v1035 = vadd.f32 0.0, %v1034
      %v1036 = vpop.f32.mrf.mxu0
      %v1037 = vadd.f32 0.0, %v1036
      %1038 = vmatmul.bf16.gmra.mxu0 %v360
      %v1039 = vpop.f32.mrf.mxu0
      %v1040 = vadd.f32 0.0, %v1039
      %v1041 = vpop.f32.mrf.mxu0
      %v1042 = vadd.f32 0.0, %v1041
      %1043 = vmatmul.bf16.gmra.mxu0 %v361
      %v1044 = vpop.f32.mrf.mxu0
      %v1045 = vadd.f32 0.0, %v1044
      %v1046 = vpop.f32.mrf.mxu0
      %v1047 = vadd.f32 0.0, %v1046
      %1048 = vmatmul.bf16.gmra.mxu0 %v362
      %v1049 = vpop.f32.mrf.mxu0
      %v1050 = vadd.f32 0.0, %v1049
      %v1051 = vpop.f32.mrf.mxu0
      %v1052 = vadd.f32 0.0, %v1051
      %1053 = vmatmul.bf16.gmra.mxu0 %v363
      %v1054 = vpop.f32.mrf.mxu0
      %v1055 = vadd.f32 0.0, %v1054
      %v1056 = vpop.f32.mrf.mxu0
      %v1057 = vadd.f32 0.0, %v1056
      %1058 = vmatmul.bf16.gmra.mxu0 %v364
      %v1059 = vpop.f32.mrf.mxu0
      %v1060 = vadd.f32 0.0, %v1059
      %v1061 = vpop.f32.mrf.mxu0
      %v1062 = vadd.f32 0.0, %v1061
      %1063 = vdwg.mxu0
      %1064 = vmatpush.bf16.msra.mxu0 %v524
      %1065 = vmatpush.bf16.msra.mxu0 %v520
      %1066 = vmatpush.bf16.msra.mxu0 %v516
      %1067 = vmatpush.bf16.msra.mxu0 %v512
      %1068 = vmatpush.bf16.msra.mxu0 %v508
      %1069 = vmatpush.bf16.msra.mxu0 %v504
      %1070 = vmatpush.bf16.msra.mxu0 %v500
      %1071 = vmatpush.bf16.msra.mxu0 %v496
      %1072 = vmatmul.bf16.gmra.mxu0 %v333
      %v1073 = vpop.f32.mrf.mxu0
      %v1074 = vadd.f32 0.0, %v1073
      %v1075 = vpop.f32.mrf.mxu0
      %v1076 = vadd.f32 0.0, %v1075
      %1077 = vmatmul.bf16.gmra.mxu0 %v334
      %v1078 = vpop.f32.mrf.mxu0
      %v1079 = vadd.f32 0.0, %v1078
      %v1080 = vpop.f32.mrf.mxu0
      %v1081 = vadd.f32 0.0, %v1080
      %1082 = vmatmul.bf16.gmra.mxu0 %v335
      %v1083 = vpop.f32.mrf.mxu0
      %v1084 = vadd.f32 0.0, %v1083
      %v1085 = vpop.f32.mrf.mxu0
      %v1086 = vadd.f32 0.0, %v1085
      %1087 = vmatmul.bf16.gmra.mxu0 %v336
      %v1088 = vpop.f32.mrf.mxu0
      %v1089 = vadd.f32 0.0, %v1088
      %v1090 = vpop.f32.mrf.mxu0
      %v1091 = vadd.f32 0.0, %v1090
      %1092 = vmatmul.bf16.gmra.mxu0 %v337
      %v1093 = vpop.f32.mrf.mxu0
      %v1094 = vadd.f32 0.0, %v1093
      %v1095 = vpop.f32.mrf.mxu0
      %v1096 = vadd.f32 0.0, %v1095
      %1097 = vmatmul.bf16.gmra.mxu0 %v338
      %v1098 = vpop.f32.mrf.mxu0
      %v1099 = vadd.f32 0.0, %v1098
      %v1100 = vpop.f32.mrf.mxu0
      %v1101 = vadd.f32 0.0, %v1100
      %1102 = vmatmul.bf16.gmra.mxu0 %v339
      %v1103 = vpop.f32.mrf.mxu0
      %v1104 = vadd.f32 0.0, %v1103
      %v1105 = vpop.f32.mrf.mxu0
      %v1106 = vadd.f32 0.0, %v1105
      %1107 = vmatmul.bf16.gmra.mxu0 %v340
      %v1108 = vpop.f32.mrf.mxu0
      %v1109 = vadd.f32 0.0, %v1108
      %v1110 = vpop.f32.mrf.mxu0
      %v1111 = vadd.f32 0.0, %v1110
      %1112 = vmatmul.bf16.gmra.mxu0 %v341
      %v1113 = vpop.f32.mrf.mxu0
      %v1114 = vadd.f32 0.0, %v1113
      %v1115 = vpop.f32.mrf.mxu0
      %v1116 = vadd.f32 0.0, %v1115
      %1117 = vmatmul.bf16.gmra.mxu0 %v342
      %v1118 = vpop.f32.mrf.mxu0
      %v1119 = vadd.f32 0.0, %v1118
      %v1120 = vpop.f32.mrf.mxu0
      %v1121 = vadd.f32 0.0, %v1120
      %1122 = vmatmul.bf16.gmra.mxu0 %v343
      %v1123 = vpop.f32.mrf.mxu0
      %v1124 = vadd.f32 0.0, %v1123
      %v1125 = vpop.f32.mrf.mxu0
      %v1126 = vadd.f32 0.0, %v1125
      %1127 = vmatmul.bf16.gmra.mxu0 %v344
      %v1128 = vpop.f32.mrf.mxu0
      %v1129 = vadd.f32 0.0, %v1128
      %v1130 = vpop.f32.mrf.mxu0
      %v1131 = vadd.f32 0.0, %v1130
      %1132 = vmatmul.bf16.gmra.mxu0 %v345
      %v1133 = vpop.f32.mrf.mxu0
      %v1134 = vadd.f32 0.0, %v1133
      %v1135 = vpop.f32.mrf.mxu0
      %v1136 = vadd.f32 0.0, %v1135
      %1137 = vmatmul.bf16.gmra.mxu0 %v346
      %v1138 = vpop.f32.mrf.mxu0
      %v1139 = vadd.f32 0.0, %v1138
      %v1140 = vpop.f32.mrf.mxu0
      %v1141 = vadd.f32 0.0, %v1140
      %1142 = vmatmul.bf16.gmra.mxu0 %v347
      %v1143 = vpop.f32.mrf.mxu0
      %v1144 = vadd.f32 0.0, %v1143
      %v1145 = vpop.f32.mrf.mxu0
      %v1146 = vadd.f32 0.0, %v1145
      %1147 = vmatmul.bf16.gmra.mxu0 %v348
      %v1148 = vpop.f32.mrf.mxu0
      %v1149 = vadd.f32 0.0, %v1148
      %v1150 = vpop.f32.mrf.mxu0
      %v1151 = vadd.f32 0.0, %v1150
      %1152 = vmatmul.bf16.gmra.mxu0 %v349
      %v1153 = vpop.f32.mrf.mxu0
      %v1154 = vadd.f32 0.0, %v1153
      %v1155 = vpop.f32.mrf.mxu0
      %v1156 = vadd.f32 0.0, %v1155
      %1157 = vmatmul.bf16.gmra.mxu0 %v350
      %v1158 = vpop.f32.mrf.mxu0
      %v1159 = vadd.f32 0.0, %v1158
      %v1160 = vpop.f32.mrf.mxu0
      %v1161 = vadd.f32 0.0, %v1160
      %1162 = vmatmul.bf16.gmra.mxu0 %v351
      %v1163 = vpop.f32.mrf.mxu0
      %v1164 = vadd.f32 0.0, %v1163
      %v1165 = vpop.f32.mrf.mxu0
      %v1166 = vadd.f32 0.0, %v1165
      %1167 = vmatmul.bf16.gmra.mxu0 %v352
      %v1168 = vpop.f32.mrf.mxu0
      %v1169 = vadd.f32 0.0, %v1168
      %v1170 = vpop.f32.mrf.mxu0
      %v1171 = vadd.f32 0.0, %v1170
      %1172 = vmatmul.bf16.gmra.mxu0 %v353
      %v1173 = vpop.f32.mrf.mxu0
      %v1174 = vadd.f32 0.0, %v1173
      %v1175 = vpop.f32.mrf.mxu0
      %v1176 = vadd.f32 0.0, %v1175
      %1177 = vmatmul.bf16.gmra.mxu0 %v354
      %v1178 = vpop.f32.mrf.mxu0
      %v1179 = vadd.f32 0.0, %v1178
      %v1180 = vpop.f32.mrf.mxu0
      %v1181 = vadd.f32 0.0, %v1180
      %1182 = vmatmul.bf16.gmra.mxu0 %v355
      %v1183 = vpop.f32.mrf.mxu0
      %v1184 = vadd.f32 0.0, %v1183
      %v1185 = vpop.f32.mrf.mxu0
      %v1186 = vadd.f32 0.0, %v1185
      %1187 = vmatmul.bf16.gmra.mxu0 %v356
      %v1188 = vpop.f32.mrf.mxu0
      %v1189 = vadd.f32 0.0, %v1188
      %v1190 = vpop.f32.mrf.mxu0
      %v1191 = vadd.f32 0.0, %v1190
      %1192 = vmatmul.bf16.gmra.mxu0 %v357
      %v1193 = vpop.f32.mrf.mxu0
      %v1194 = vadd.f32 0.0, %v1193
      %v1195 = vpop.f32.mrf.mxu0
      %v1196 = vadd.f32 0.0, %v1195
      %1197 = vmatmul.bf16.gmra.mxu0 %v358
      %v1198 = vpop.f32.mrf.mxu0
      %v1199 = vadd.f32 0.0, %v1198
      %v1200 = vpop.f32.mrf.mxu0
      %v1201 = vadd.f32 0.0, %v1200
      %1202 = vmatmul.bf16.gmra.mxu0 %v359
      %v1203 = vpop.f32.mrf.mxu0
      %v1204 = vadd.f32 0.0, %v1203
      %v1205 = vpop.f32.mrf.mxu0
      %v1206 = vadd.f32 0.0, %v1205
      %1207 = vmatmul.bf16.gmra.mxu0 %v360
      %v1208 = vpop.f32.mrf.mxu0
      %v1209 = vadd.f32 0.0, %v1208
      %v1210 = vpop.f32.mrf.mxu0
      %v1211 = vadd.f32 0.0, %v1210
      %1212 = vmatmul.bf16.gmra.mxu0 %v361
      %v1213 = vpop.f32.mrf.mxu0
      %v1214 = vadd.f32 0.0, %v1213
      %v1215 = vpop.f32.mrf.mxu0
      %v1216 = vadd.f32 0.0, %v1215
      %1217 = vmatmul.bf16.gmra.mxu0 %v362
      %v1218 = vpop.f32.mrf.mxu0
      %v1219 = vadd.f32 0.0, %v1218
      %v1220 = vpop.f32.mrf.mxu0
      %v1221 = vadd.f32 0.0, %v1220
      %1222 = vmatmul.bf16.gmra.mxu0 %v363
      %v1223 = vpop.f32.mrf.mxu0
      %v1224 = vadd.f32 0.0, %v1223
      %v1225 = vpop.f32.mrf.mxu0
      %v1226 = vadd.f32 0.0, %v1225
      %1227 = vmatmul.bf16.gmra.mxu0 %v364
      %v1228 = vpop.f32.mrf.mxu0
      %v1229 = vadd.f32 0.0, %v1228
      %v1230 = vpop.f32.mrf.mxu0
      %v1231 = vadd.f32 0.0, %v1230
      %1232 = vdwg.mxu0
      %v1233 = vpack.c.bf16 %v736, %v567
      %v1234 = vpack.c.bf16 %v1074, %v905
      %v1235 = vpack.c.bf16 %v738, %v569
      %v1236 = vpack.c.bf16 %v1076, %v907
      %v1237 = vpack.c.bf16 %v741, %v572
      %v1238 = vpack.c.bf16 %v1079, %v910
      %v1239 = vpack.c.bf16 %v743, %v574
      %v1240 = vpack.c.bf16 %v1081, %v912
      %v1241 = vpack.c.bf16 %v746, %v577
      %v1242 = vpack.c.bf16 %v1084, %v915
      %v1243 = vpack.c.bf16 %v748, %v579
      %v1244 = vpack.c.bf16 %v1086, %v917
      %v1245 = vpack.c.bf16 %v751, %v582
      %v1246 = vpack.c.bf16 %v1089, %v920
      %v1247 = vpack.c.bf16 %v753, %v584
      %v1248 = vpack.c.bf16 %v1091, %v922
      %v1249 = vpack.c.bf16 %v756, %v587
      %v1250 = vpack.c.bf16 %v1094, %v925
      %v1251 = vpack.c.bf16 %v758, %v589
      %v1252 = vpack.c.bf16 %v1096, %v927
      %v1253 = vpack.c.bf16 %v761, %v592
      %v1254 = vpack.c.bf16 %v1099, %v930
      %v1255 = vpack.c.bf16 %v763, %v594
      %v1256 = vpack.c.bf16 %v1101, %v932
      %v1257 = vpack.c.bf16 %v766, %v597
      %v1258 = vpack.c.bf16 %v1104, %v935
      %v1259 = vpack.c.bf16 %v768, %v599
      %v1260 = vpack.c.bf16 %v1106, %v937
      %v1261 = vpack.c.bf16 %v771, %v602
      %v1262 = vpack.c.bf16 %v1109, %v940
      %v1263 = vpack.c.bf16 %v773, %v604
      %v1264 = vpack.c.bf16 %v1111, %v942
      %v1265 = vpack.c.bf16 %v776, %v607
      %v1266 = vpack.c.bf16 %v1114, %v945
      %v1267 = vpack.c.bf16 %v778, %v609
      %v1268 = vpack.c.bf16 %v1116, %v947
      %v1269 = vpack.c.bf16 %v781, %v612
      %v1270 = vpack.c.bf16 %v1119, %v950
      %v1271 = vpack.c.bf16 %v783, %v614
      %v1272 = vpack.c.bf16 %v1121, %v952
      %v1273 = vpack.c.bf16 %v786, %v617
      %v1274 = vpack.c.bf16 %v1124, %v955
      %v1275 = vpack.c.bf16 %v788, %v619
      %v1276 = vpack.c.bf16 %v1126, %v957
      %v1277 = vpack.c.bf16 %v791, %v622
      %v1278 = vpack.c.bf16 %v1129, %v960
      %v1279 = vpack.c.bf16 %v793, %v624
      %v1280 = vpack.c.bf16 %v1131, %v962
      %v1281 = vpack.c.bf16 %v796, %v627
      %v1282 = vpack.c.bf16 %v1134, %v965
      %v1283 = vpack.c.bf16 %v798, %v629
      %v1284 = vpack.c.bf16 %v1136, %v967
      %v1285 = vpack.c.bf16 %v801, %v632
      %v1286 = vpack.c.bf16 %v1139, %v970
      %v1287 = vpack.c.bf16 %v803, %v634
      %v1288 = vpack.c.bf16 %v1141, %v972
      %v1289 = vpack.c.bf16 %v806, %v637
      %v1290 = vpack.c.bf16 %v1144, %v975
      %v1291 = vpack.c.bf16 %v808, %v639
      %v1292 = vpack.c.bf16 %v1146, %v977
      %v1293 = vpack.c.bf16 %v811, %v642
      %v1294 = vpack.c.bf16 %v1149, %v980
      %v1295 = vpack.c.bf16 %v813, %v644
      %v1296 = vpack.c.bf16 %v1151, %v982
      %v1297 = vpack.c.bf16 %v816, %v647
      %v1298 = vpack.c.bf16 %v1154, %v985
      %v1299 = vpack.c.bf16 %v818, %v649
      %v1300 = vpack.c.bf16 %v1156, %v987
      %v1301 = vpack.c.bf16 %v821, %v652
      %v1302 = vpack.c.bf16 %v1159, %v990
      %v1303 = vpack.c.bf16 %v823, %v654
      %v1304 = vpack.c.bf16 %v1161, %v992
      %v1305 = vpack.c.bf16 %v826, %v657
      %v1306 = vpack.c.bf16 %v1164, %v995
      %v1307 = vpack.c.bf16 %v828, %v659
      %v1308 = vpack.c.bf16 %v1166, %v997
      %v1309 = vpack.c.bf16 %v831, %v662
      %v1310 = vpack.c.bf16 %v1169, %v1000
      %v1311 = vpack.c.bf16 %v833, %v664
      %v1312 = vpack.c.bf16 %v1171, %v1002
      %v1313 = vpack.c.bf16 %v836, %v667
      %v1314 = vpack.c.bf16 %v1174, %v1005
      %v1315 = vpack.c.bf16 %v838, %v669
      %v1316 = vpack.c.bf16 %v1176, %v1007
      %v1317 = vpack.c.bf16 %v841, %v672
      %v1318 = vpack.c.bf16 %v1179, %v1010
      %v1319 = vpack.c.bf16 %v843, %v674
      %v1320 = vpack.c.bf16 %v1181, %v1012
      %v1321 = vpack.c.bf16 %v846, %v677
      %v1322 = vpack.c.bf16 %v1184, %v1015
      %v1323 = vpack.c.bf16 %v848, %v679
      %v1324 = vpack.c.bf16 %v1186, %v1017
      %v1325 = vpack.c.bf16 %v851, %v682
      %v1326 = vpack.c.bf16 %v1189, %v1020
      %v1327 = vpack.c.bf16 %v853, %v684
      %v1328 = vpack.c.bf16 %v1191, %v1022
      %v1329 = vpack.c.bf16 %v856, %v687
      %v1330 = vpack.c.bf16 %v1194, %v1025
      %v1331 = vpack.c.bf16 %v858, %v689
      %v1332 = vpack.c.bf16 %v1196, %v1027
      %v1333 = vpack.c.bf16 %v861, %v692
      %v1334 = vpack.c.bf16 %v1199, %v1030
      %v1335 = vpack.c.bf16 %v863, %v694
      %v1336 = vpack.c.bf16 %v1201, %v1032
      %v1337 = vpack.c.bf16 %v866, %v697
      %v1338 = vpack.c.bf16 %v1204, %v1035
      %v1339 = vpack.c.bf16 %v868, %v699
      %v1340 = vpack.c.bf16 %v1206, %v1037
      %v1341 = vpack.c.bf16 %v871, %v702
      %v1342 = vpack.c.bf16 %v1209, %v1040
      %v1343 = vpack.c.bf16 %v873, %v704
      %v1344 = vpack.c.bf16 %v1211, %v1042
      %v1345 = vpack.c.bf16 %v876, %v707
      %v1346 = vpack.c.bf16 %v1214, %v1045
      %v1347 = vpack.c.bf16 %v878, %v709
      %v1348 = vpack.c.bf16 %v1216, %v1047
      %v1349 = vpack.c.bf16 %v881, %v712
      %v1350 = vpack.c.bf16 %v1219, %v1050
      %v1351 = vpack.c.bf16 %v883, %v714
      %v1352 = vpack.c.bf16 %v1221, %v1052
      %v1353 = vpack.c.bf16 %v886, %v717
      %v1354 = vpack.c.bf16 %v1224, %v1055
      %v1355 = vpack.c.bf16 %v888, %v719
      %v1356 = vpack.c.bf16 %v1226, %v1057
      %v1357 = vpack.c.bf16 %v891, %v722
      %v1358 = vpack.c.bf16 %v1229, %v1060
      %v1359 = vpack.c.bf16 %v893, %v724
      %v1360 = vpack.c.bf16 %v1231, %v1062
      %v1361 = vld [vmem:[%s2] sm:$0xf]
      %1363 = vst [vmem:[#allocation1] ss:$9 sm:$0xff] %v1361
      %v1364 = vld [vmem:[#allocation1] sm:$0xff]
      %v1365 = vld [vmem:[#allocation1 + $0x9] sm:$0xff]
      %v1366 = vld [vmem:[#allocation1 + $0x12] sm:$0xff]
      %v1367 = vld [vmem:[#allocation1 + $0x1b] sm:$0xff]
      %v1368 = vpack.i.b16 %v1364, %v1364
      %v1370 = vperm.slane %v1368, 0
      %v1371 = vpack.i.b16 %v1365, %v1365
      %v1373 = vperm.slane %v1371, 0
      %v1374 = vpack.i.b16 %v1366, %v1366
      %v1376 = vperm.slane %v1374, 0
      %v1377 = vpack.i.b16 %v1367, %v1367
      %v1379 = vperm.slane %v1377, 0
      %v1380 = vunpack.c.l.bf16 %v1233
      %v1381 = vunpack.c.h.bf16 %v1233
      %v1382 = vunpack.c.l.bf16 %v1234
      %v1383 = vunpack.c.h.bf16 %v1234
      %v1384 = vunpack.c.l.bf16 %v1235
      %v1385 = vunpack.c.h.bf16 %v1235
      %v1386 = vunpack.c.l.bf16 %v1236
      %v1387 = vunpack.c.h.bf16 %v1236
      %v1388 = vunpack.c.l.bf16 %v1237
      %v1389 = vunpack.c.h.bf16 %v1237
      %v1390 = vunpack.c.l.bf16 %v1238
      %v1391 = vunpack.c.h.bf16 %v1238
      %v1392 = vunpack.c.l.bf16 %v1239
      %v1393 = vunpack.c.h.bf16 %v1239
      %v1394 = vunpack.c.l.bf16 %v1240
      %v1395 = vunpack.c.h.bf16 %v1240
      %v1396 = vunpack.c.l.bf16 %v1241
      %v1397 = vunpack.c.h.bf16 %v1241
      %v1398 = vunpack.c.l.bf16 %v1242
      %v1399 = vunpack.c.h.bf16 %v1242
      %v1400 = vunpack.c.l.bf16 %v1243
      %v1401 = vunpack.c.h.bf16 %v1243
      %v1402 = vunpack.c.l.bf16 %v1244
      %v1403 = vunpack.c.h.bf16 %v1244
      %v1404 = vunpack.c.l.bf16 %v1245
      %v1405 = vunpack.c.h.bf16 %v1245
      %v1406 = vunpack.c.l.bf16 %v1246
      %v1407 = vunpack.c.h.bf16 %v1246
      %v1408 = vunpack.c.l.bf16 %v1247
      %v1409 = vunpack.c.h.bf16 %v1247
      %v1410 = vunpack.c.l.bf16 %v1248
      %v1411 = vunpack.c.h.bf16 %v1248
      %v1412 = vunpack.c.l.bf16 %v1249
      %v1413 = vunpack.c.h.bf16 %v1249
      %v1414 = vunpack.c.l.bf16 %v1250
      %v1415 = vunpack.c.h.bf16 %v1250
      %v1416 = vunpack.c.l.bf16 %v1251
      %v1417 = vunpack.c.h.bf16 %v1251
      %v1418 = vunpack.c.l.bf16 %v1252
      %v1419 = vunpack.c.h.bf16 %v1252
      %v1420 = vunpack.c.l.bf16 %v1253
      %v1421 = vunpack.c.h.bf16 %v1253
      %v1422 = vunpack.c.l.bf16 %v1254
      %v1423 = vunpack.c.h.bf16 %v1254
      %v1424 = vunpack.c.l.bf16 %v1255
      %v1425 = vunpack.c.h.bf16 %v1255
      %v1426 = vunpack.c.l.bf16 %v1256
      %v1427 = vunpack.c.h.bf16 %v1256
      %v1428 = vunpack.c.l.bf16 %v1257
      %v1429 = vunpack.c.h.bf16 %v1257
      %v1430 = vunpack.c.l.bf16 %v1258
      %v1431 = vunpack.c.h.bf16 %v1258
      %v1432 = vunpack.c.l.bf16 %v1259
      %v1433 = vunpack.c.h.bf16 %v1259
      %v1434 = vunpack.c.l.bf16 %v1260
      %v1435 = vunpack.c.h.bf16 %v1260
      %v1436 = vunpack.c.l.bf16 %v1261
      %v1437 = vunpack.c.h.bf16 %v1261
      %v1438 = vunpack.c.l.bf16 %v1262
      %v1439 = vunpack.c.h.bf16 %v1262
      %v1440 = vunpack.c.l.bf16 %v1263
      %v1441 = vunpack.c.h.bf16 %v1263
      %v1442 = vunpack.c.l.bf16 %v1264
      %v1443 = vunpack.c.h.bf16 %v1264
      %v1444 = vunpack.c.l.bf16 %v1265
      %v1445 = vunpack.c.h.bf16 %v1265
      %v1446 = vunpack.c.l.bf16 %v1266
      %v1447 = vunpack.c.h.bf16 %v1266
      %v1448 = vunpack.c.l.bf16 %v1267
      %v1449 = vunpack.c.h.bf16 %v1267
      %v1450 = vunpack.c.l.bf16 %v1268
      %v1451 = vunpack.c.h.bf16 %v1268
      %v1452 = vunpack.c.l.bf16 %v1269
      %v1453 = vunpack.c.h.bf16 %v1269
      %v1454 = vunpack.c.l.bf16 %v1270
      %v1455 = vunpack.c.h.bf16 %v1270
      %v1456 = vunpack.c.l.bf16 %v1271
      %v1457 = vunpack.c.h.bf16 %v1271
      %v1458 = vunpack.c.l.bf16 %v1272
      %v1459 = vunpack.c.h.bf16 %v1272
      %v1460 = vunpack.c.l.bf16 %v1273
      %v1461 = vunpack.c.h.bf16 %v1273
      %v1462 = vunpack.c.l.bf16 %v1274
      %v1463 = vunpack.c.h.bf16 %v1274
      %v1464 = vunpack.c.l.bf16 %v1275
      %v1465 = vunpack.c.h.bf16 %v1275
      %v1466 = vunpack.c.l.bf16 %v1276
      %v1467 = vunpack.c.h.bf16 %v1276
      %v1468 = vunpack.c.l.bf16 %v1277
      %v1469 = vunpack.c.h.bf16 %v1277
      %v1470 = vunpack.c.l.bf16 %v1278
      %v1471 = vunpack.c.h.bf16 %v1278
      %v1472 = vunpack.c.l.bf16 %v1279
      %v1473 = vunpack.c.h.bf16 %v1279
      %v1474 = vunpack.c.l.bf16 %v1280
      %v1475 = vunpack.c.h.bf16 %v1280
      %v1476 = vunpack.c.l.bf16 %v1281
      %v1477 = vunpack.c.h.bf16 %v1281
      %v1478 = vunpack.c.l.bf16 %v1282
      %v1479 = vunpack.c.h.bf16 %v1282
      %v1480 = vunpack.c.l.bf16 %v1283
      %v1481 = vunpack.c.h.bf16 %v1283
      %v1482 = vunpack.c.l.bf16 %v1284
      %v1483 = vunpack.c.h.bf16 %v1284
      %v1484 = vunpack.c.l.bf16 %v1285
      %v1485 = vunpack.c.h.bf16 %v1285
      %v1486 = vunpack.c.l.bf16 %v1286
      %v1487 = vunpack.c.h.bf16 %v1286
      %v1488 = vunpack.c.l.bf16 %v1287
      %v1489 = vunpack.c.h.bf16 %v1287
      %v1490 = vunpack.c.l.bf16 %v1288
      %v1491 = vunpack.c.h.bf16 %v1288
      %v1492 = vunpack.c.l.bf16 %v1289
      %v1493 = vunpack.c.h.bf16 %v1289
      %v1494 = vunpack.c.l.bf16 %v1290
      %v1495 = vunpack.c.h.bf16 %v1290
      %v1496 = vunpack.c.l.bf16 %v1291
      %v1497 = vunpack.c.h.bf16 %v1291
      %v1498 = vunpack.c.l.bf16 %v1292
      %v1499 = vunpack.c.h.bf16 %v1292
      %v1500 = vunpack.c.l.bf16 %v1293
      %v1501 = vunpack.c.h.bf16 %v1293
      %v1502 = vunpack.c.l.bf16 %v1294
      %v1503 = vunpack.c.h.bf16 %v1294
      %v1504 = vunpack.c.l.bf16 %v1295
      %v1505 = vunpack.c.h.bf16 %v1295
      %v1506 = vunpack.c.l.bf16 %v1296
      %v1507 = vunpack.c.h.bf16 %v1296
      %v1508 = vunpack.c.l.bf16 %v1297
      %v1509 = vunpack.c.h.bf16 %v1297
      %v1510 = vunpack.c.l.bf16 %v1298
      %v1511 = vunpack.c.h.bf16 %v1298
      %v1512 = vunpack.c.l.bf16 %v1299
      %v1513 = vunpack.c.h.bf16 %v1299
      %v1514 = vunpack.c.l.bf16 %v1300
      %v1515 = vunpack.c.h.bf16 %v1300
      %v1516 = vunpack.c.l.bf16 %v1301
      %v1517 = vunpack.c.h.bf16 %v1301
      %v1518 = vunpack.c.l.bf16 %v1302
      %v1519 = vunpack.c.h.bf16 %v1302
      %v1520 = vunpack.c.l.bf16 %v1303
      %v1521 = vunpack.c.h.bf16 %v1303
      %v1522 = vunpack.c.l.bf16 %v1304
      %v1523 = vunpack.c.h.bf16 %v1304
      %v1524 = vunpack.c.l.bf16 %v1305
      %v1525 = vunpack.c.h.bf16 %v1305
      %v1526 = vunpack.c.l.bf16 %v1306
      %v1527 = vunpack.c.h.bf16 %v1306
      %v1528 = vunpack.c.l.bf16 %v1307
      %v1529 = vunpack.c.h.bf16 %v1307
      %v1530 = vunpack.c.l.bf16 %v1308
      %v1531 = vunpack.c.h.bf16 %v1308
      %v1532 = vunpack.c.l.bf16 %v1309
      %v1533 = vunpack.c.h.bf16 %v1309
      %v1534 = vunpack.c.l.bf16 %v1310
      %v1535 = vunpack.c.h.bf16 %v1310
      %v1536 = vunpack.c.l.bf16 %v1311
      %v1537 = vunpack.c.h.bf16 %v1311
      %v1538 = vunpack.c.l.bf16 %v1312
      %v1539 = vunpack.c.h.bf16 %v1312
      %v1540 = vunpack.c.l.bf16 %v1313
      %v1541 = vunpack.c.h.bf16 %v1313
      %v1542 = vunpack.c.l.bf16 %v1314
      %v1543 = vunpack.c.h.bf16 %v1314
      %v1544 = vunpack.c.l.bf16 %v1315
      %v1545 = vunpack.c.h.bf16 %v1315
      %v1546 = vunpack.c.l.bf16 %v1316
      %v1547 = vunpack.c.h.bf16 %v1316
      %v1548 = vunpack.c.l.bf16 %v1317
      %v1549 = vunpack.c.h.bf16 %v1317
      %v1550 = vunpack.c.l.bf16 %v1318
      %v1551 = vunpack.c.h.bf16 %v1318
      %v1552 = vunpack.c.l.bf16 %v1319
      %v1553 = vunpack.c.h.bf16 %v1319
      %v1554 = vunpack.c.l.bf16 %v1320
      %v1555 = vunpack.c.h.bf16 %v1320
      %v1556 = vunpack.c.l.bf16 %v1321
      %v1557 = vunpack.c.h.bf16 %v1321
      %v1558 = vunpack.c.l.bf16 %v1322
      %v1559 = vunpack.c.h.bf16 %v1322
      %v1560 = vunpack.c.l.bf16 %v1323
      %v1561 = vunpack.c.h.bf16 %v1323
      %v1562 = vunpack.c.l.bf16 %v1324
      %v1563 = vunpack.c.h.bf16 %v1324
      %v1564 = vunpack.c.l.bf16 %v1325
      %v1565 = vunpack.c.h.bf16 %v1325
      %v1566 = vunpack.c.l.bf16 %v1326
      %v1567 = vunpack.c.h.bf16 %v1326
      %v1568 = vunpack.c.l.bf16 %v1327
      %v1569 = vunpack.c.h.bf16 %v1327
      %v1570 = vunpack.c.l.bf16 %v1328
      %v1571 = vunpack.c.h.bf16 %v1328
      %v1572 = vunpack.c.l.bf16 %v1329
      %v1573 = vunpack.c.h.bf16 %v1329
      %v1574 = vunpack.c.l.bf16 %v1330
      %v1575 = vunpack.c.h.bf16 %v1330
      %v1576 = vunpack.c.l.bf16 %v1331
      %v1577 = vunpack.c.h.bf16 %v1331
      %v1578 = vunpack.c.l.bf16 %v1332
      %v1579 = vunpack.c.h.bf16 %v1332
      %v1580 = vunpack.c.l.bf16 %v1333
      %v1581 = vunpack.c.h.bf16 %v1333
      %v1582 = vunpack.c.l.bf16 %v1334
      %v1583 = vunpack.c.h.bf16 %v1334
      %v1584 = vunpack.c.l.bf16 %v1335
      %v1585 = vunpack.c.h.bf16 %v1335
      %v1586 = vunpack.c.l.bf16 %v1336
      %v1587 = vunpack.c.h.bf16 %v1336
      %v1588 = vunpack.c.l.bf16 %v1337
      %v1589 = vunpack.c.h.bf16 %v1337
      %v1590 = vunpack.c.l.bf16 %v1338
      %v1591 = vunpack.c.h.bf16 %v1338
      %v1592 = vunpack.c.l.bf16 %v1339
      %v1593 = vunpack.c.h.bf16 %v1339
      %v1594 = vunpack.c.l.bf16 %v1340
      %v1595 = vunpack.c.h.bf16 %v1340
      %v1596 = vunpack.c.l.bf16 %v1341
      %v1597 = vunpack.c.h.bf16 %v1341
      %v1598 = vunpack.c.l.bf16 %v1342
      %v1599 = vunpack.c.h.bf16 %v1342
      %v1600 = vunpack.c.l.bf16 %v1343
      %v1601 = vunpack.c.h.bf16 %v1343
      %v1602 = vunpack.c.l.bf16 %v1344
      %v1603 = vunpack.c.h.bf16 %v1344
      %v1604 = vunpack.c.l.bf16 %v1345
      %v1605 = vunpack.c.h.bf16 %v1345
      %v1606 = vunpack.c.l.bf16 %v1346
      %v1607 = vunpack.c.h.bf16 %v1346
      %v1608 = vunpack.c.l.bf16 %v1347
      %v1609 = vunpack.c.h.bf16 %v1347
      %v1610 = vunpack.c.l.bf16 %v1348
      %v1611 = vunpack.c.h.bf16 %v1348
      %v1612 = vunpack.c.l.bf16 %v1349
      %v1613 = vunpack.c.h.bf16 %v1349
      %v1614 = vunpack.c.l.bf16 %v1350
      %v1615 = vunpack.c.h.bf16 %v1350
      %v1616 = vunpack.c.l.bf16 %v1351
      %v1617 = vunpack.c.h.bf16 %v1351
      %v1618 = vunpack.c.l.bf16 %v1352
      %v1619 = vunpack.c.h.bf16 %v1352
      %v1620 = vunpack.c.l.bf16 %v1353
      %v1621 = vunpack.c.h.bf16 %v1353
      %v1622 = vunpack.c.l.bf16 %v1354
      %v1623 = vunpack.c.h.bf16 %v1354
      %v1624 = vunpack.c.l.bf16 %v1355
      %v1625 = vunpack.c.h.bf16 %v1355
      %v1626 = vunpack.c.l.bf16 %v1356
      %v1627 = vunpack.c.h.bf16 %v1356
      %v1628 = vunpack.c.l.bf16 %v1357
      %v1629 = vunpack.c.h.bf16 %v1357
      %v1630 = vunpack.c.l.bf16 %v1358
      %v1631 = vunpack.c.h.bf16 %v1358
      %v1632 = vunpack.c.l.bf16 %v1359
      %v1633 = vunpack.c.h.bf16 %v1359
      %v1634 = vunpack.c.l.bf16 %v1360
      %v1635 = vunpack.c.h.bf16 %v1360
      %v1636 = vunpack.c.l.bf16 %v1370
      %v1637 = vunpack.c.l.bf16 %v1373
      %v1638 = vunpack.c.l.bf16 %v1376
      %v1639 = vunpack.c.l.bf16 %v1379
      %v1640 = vadd.f32 %v1380, %v1636
      %v1641 = vadd.f32 %v1381, %v1637
      %v1642 = vadd.f32 %v1382, %v1638
      %v1643 = vadd.f32 %v1383, %v1639
      %v1644 = vadd.f32 %v1384, %v1636
      %v1645 = vadd.f32 %v1385, %v1637
      %v1646 = vadd.f32 %v1386, %v1638
      %v1647 = vadd.f32 %v1387, %v1639
      %v1648 = vadd.f32 %v1388, %v1636
      %v1649 = vadd.f32 %v1389, %v1637
      %v1650 = vadd.f32 %v1390, %v1638
      %v1651 = vadd.f32 %v1391, %v1639
      %v1652 = vadd.f32 %v1392, %v1636
      %v1653 = vadd.f32 %v1393, %v1637
      %v1654 = vadd.f32 %v1394, %v1638
      %v1655 = vadd.f32 %v1395, %v1639
      %v1656 = vadd.f32 %v1396, %v1636
      %v1657 = vadd.f32 %v1397, %v1637
      %v1658 = vadd.f32 %v1398, %v1638
      %v1659 = vadd.f32 %v1399, %v1639
      %v1660 = vadd.f32 %v1400, %v1636
      %v1661 = vadd.f32 %v1401, %v1637
      %v1662 = vadd.f32 %v1402, %v1638
      %v1663 = vadd.f32 %v1403, %v1639
      %v1664 = vadd.f32 %v1404, %v1636
      %v1665 = vadd.f32 %v1405, %v1637
      %v1666 = vadd.f32 %v1406, %v1638
      %v1667 = vadd.f32 %v1407, %v1639
      %v1668 = vadd.f32 %v1408, %v1636
      %v1669 = vadd.f32 %v1409, %v1637
      %v1670 = vadd.f32 %v1410, %v1638
      %v1671 = vadd.f32 %v1411, %v1639
      %v1672 = vadd.f32 %v1412, %v1636
      %v1673 = vadd.f32 %v1413, %v1637
      %v1674 = vadd.f32 %v1414, %v1638
      %v1675 = vadd.f32 %v1415, %v1639
      %v1676 = vadd.f32 %v1416, %v1636
      %v1677 = vadd.f32 %v1417, %v1637
      %v1678 = vadd.f32 %v1418, %v1638
      %v1679 = vadd.f32 %v1419, %v1639
      %v1680 = vadd.f32 %v1420, %v1636
      %v1681 = vadd.f32 %v1421, %v1637
      %v1682 = vadd.f32 %v1422, %v1638
      %v1683 = vadd.f32 %v1423, %v1639
      %v1684 = vadd.f32 %v1424, %v1636
      %v1685 = vadd.f32 %v1425, %v1637
      %v1686 = vadd.f32 %v1426, %v1638
      %v1687 = vadd.f32 %v1427, %v1639
      %v1688 = vadd.f32 %v1428, %v1636
      %v1689 = vadd.f32 %v1429, %v1637
      %v1690 = vadd.f32 %v1430, %v1638
      %v1691 = vadd.f32 %v1431, %v1639
      %v1692 = vadd.f32 %v1432, %v1636
      %v1693 = vadd.f32 %v1433, %v1637
      %v1694 = vadd.f32 %v1434, %v1638
      %v1695 = vadd.f32 %v1435, %v1639
      %v1696 = vadd.f32 %v1436, %v1636
      %v1697 = vadd.f32 %v1437, %v1637
      %v1698 = vadd.f32 %v1438, %v1638
      %v1699 = vadd.f32 %v1439, %v1639
      %v1700 = vadd.f32 %v1440, %v1636
      %v1701 = vadd.f32 %v1441, %v1637
      %v1702 = vadd.f32 %v1442, %v1638
      %v1703 = vadd.f32 %v1443, %v1639
      %v1704 = vadd.f32 %v1444, %v1636
      %v1705 = vadd.f32 %v1445, %v1637
      %v1706 = vadd.f32 %v1446, %v1638
      %v1707 = vadd.f32 %v1447, %v1639
      %v1708 = vadd.f32 %v1448, %v1636
      %v1709 = vadd.f32 %v1449, %v1637
      %v1710 = vadd.f32 %v1450, %v1638
      %v1711 = vadd.f32 %v1451, %v1639
      %v1712 = vadd.f32 %v1452, %v1636
      %v1713 = vadd.f32 %v1453, %v1637
      %v1714 = vadd.f32 %v1454, %v1638
      %v1715 = vadd.f32 %v1455, %v1639
      %v1716 = vadd.f32 %v1456, %v1636
      %v1717 = vadd.f32 %v1457, %v1637
      %v1718 = vadd.f32 %v1458, %v1638
      %v1719 = vadd.f32 %v1459, %v1639
      %v1720 = vadd.f32 %v1460, %v1636
      %v1721 = vadd.f32 %v1461, %v1637
      %v1722 = vadd.f32 %v1462, %v1638
      %v1723 = vadd.f32 %v1463, %v1639
      %v1724 = vadd.f32 %v1464, %v1636
      %v1725 = vadd.f32 %v1465, %v1637
      %v1726 = vadd.f32 %v1466, %v1638
      %v1727 = vadd.f32 %v1467, %v1639
      %v1728 = vadd.f32 %v1468, %v1636
      %v1729 = vadd.f32 %v1469, %v1637
      %v1730 = vadd.f32 %v1470, %v1638
      %v1731 = vadd.f32 %v1471, %v1639
      %v1732 = vadd.f32 %v1472, %v1636
      %v1733 = vadd.f32 %v1473, %v1637
      %v1734 = vadd.f32 %v1474, %v1638
      %v1735 = vadd.f32 %v1475, %v1639
      %v1736 = vadd.f32 %v1476, %v1636
      %v1737 = vadd.f32 %v1477, %v1637
      %v1738 = vadd.f32 %v1478, %v1638
      %v1739 = vadd.f32 %v1479, %v1639
      %v1740 = vadd.f32 %v1480, %v1636
      %v1741 = vadd.f32 %v1481, %v1637
      %v1742 = vadd.f32 %v1482, %v1638
      %v1743 = vadd.f32 %v1483, %v1639
      %v1744 = vadd.f32 %v1484, %v1636
      %v1745 = vadd.f32 %v1485, %v1637
      %v1746 = vadd.f32 %v1486, %v1638
      %v1747 = vadd.f32 %v1487, %v1639
      %v1748 = vadd.f32 %v1488, %v1636
      %v1749 = vadd.f32 %v1489, %v1637
      %v1750 = vadd.f32 %v1490, %v1638
      %v1751 = vadd.f32 %v1491, %v1639
      %v1752 = vadd.f32 %v1492, %v1636
      %v1753 = vadd.f32 %v1493, %v1637
      %v1754 = vadd.f32 %v1494, %v1638
      %v1755 = vadd.f32 %v1495, %v1639
      %v1756 = vadd.f32 %v1496, %v1636
      %v1757 = vadd.f32 %v1497, %v1637
      %v1758 = vadd.f32 %v1498, %v1638
      %v1759 = vadd.f32 %v1499, %v1639
      %v1760 = vadd.f32 %v1500, %v1636
      %v1761 = vadd.f32 %v1501, %v1637
      %v1762 = vadd.f32 %v1502, %v1638
      %v1763 = vadd.f32 %v1503, %v1639
      %v1764 = vadd.f32 %v1504, %v1636
      %v1765 = vadd.f32 %v1505, %v1637
      %v1766 = vadd.f32 %v1506, %v1638
      %v1767 = vadd.f32 %v1507, %v1639
      %v1768 = vadd.f32 %v1508, %v1636
      %v1769 = vadd.f32 %v1509, %v1637
      %v1770 = vadd.f32 %v1510, %v1638
      %v1771 = vadd.f32 %v1511, %v1639
      %v1772 = vadd.f32 %v1512, %v1636
      %v1773 = vadd.f32 %v1513, %v1637
      %v1774 = vadd.f32 %v1514, %v1638
      %v1775 = vadd.f32 %v1515, %v1639
      %v1776 = vadd.f32 %v1516, %v1636
      %v1777 = vadd.f32 %v1517, %v1637
      %v1778 = vadd.f32 %v1518, %v1638
      %v1779 = vadd.f32 %v1519, %v1639
      %v1780 = vadd.f32 %v1520, %v1636
      %v1781 = vadd.f32 %v1521, %v1637
      %v1782 = vadd.f32 %v1522, %v1638
      %v1783 = vadd.f32 %v1523, %v1639
      %v1784 = vadd.f32 %v1524, %v1636
      %v1785 = vadd.f32 %v1525, %v1637
      %v1786 = vadd.f32 %v1526, %v1638
      %v1787 = vadd.f32 %v1527, %v1639
      %v1788 = vadd.f32 %v1528, %v1636
      %v1789 = vadd.f32 %v1529, %v1637
      %v1790 = vadd.f32 %v1530, %v1638
      %v1791 = vadd.f32 %v1531, %v1639
      %v1792 = vadd.f32 %v1532, %v1636
      %v1793 = vadd.f32 %v1533, %v1637
      %v1794 = vadd.f32 %v1534, %v1638
      %v1795 = vadd.f32 %v1535, %v1639
      %v1796 = vadd.f32 %v1536, %v1636
      %v1797 = vadd.f32 %v1537, %v1637
      %v1798 = vadd.f32 %v1538, %v1638
      %v1799 = vadd.f32 %v1539, %v1639
      %v1800 = vadd.f32 %v1540, %v1636
      %v1801 = vadd.f32 %v1541, %v1637
      %v1802 = vadd.f32 %v1542, %v1638
      %v1803 = vadd.f32 %v1543, %v1639
      %v1804 = vadd.f32 %v1544, %v1636
      %v1805 = vadd.f32 %v1545, %v1637
      %v1806 = vadd.f32 %v1546, %v1638
      %v1807 = vadd.f32 %v1547, %v1639
      %v1808 = vadd.f32 %v1548, %v1636
      %v1809 = vadd.f32 %v1549, %v1637
      %v1810 = vadd.f32 %v1550, %v1638
      %v1811 = vadd.f32 %v1551, %v1639
      %v1812 = vadd.f32 %v1552, %v1636
      %v1813 = vadd.f32 %v1553, %v1637
      %v1814 = vadd.f32 %v1554, %v1638
      %v1815 = vadd.f32 %v1555, %v1639
      %v1816 = vadd.f32 %v1556, %v1636
      %v1817 = vadd.f32 %v1557, %v1637
      %v1818 = vadd.f32 %v1558, %v1638
      %v1819 = vadd.f32 %v1559, %v1639
      %v1820 = vadd.f32 %v1560, %v1636
      %v1821 = vadd.f32 %v1561, %v1637
      %v1822 = vadd.f32 %v1562, %v1638
      %v1823 = vadd.f32 %v1563, %v1639
      %v1824 = vadd.f32 %v1564, %v1636
      %v1825 = vadd.f32 %v1565, %v1637
      %v1826 = vadd.f32 %v1566, %v1638
      %v1827 = vadd.f32 %v1567, %v1639
      %v1828 = vadd.f32 %v1568, %v1636
      %v1829 = vadd.f32 %v1569, %v1637
      %v1830 = vadd.f32 %v1570, %v1638
      %v1831 = vadd.f32 %v1571, %v1639
      %v1832 = vadd.f32 %v1572, %v1636
      %v1833 = vadd.f32 %v1573, %v1637
      %v1834 = vadd.f32 %v1574, %v1638
      %v1835 = vadd.f32 %v1575, %v1639
      %v1836 = vadd.f32 %v1576, %v1636
      %v1837 = vadd.f32 %v1577, %v1637
      %v1838 = vadd.f32 %v1578, %v1638
      %v1839 = vadd.f32 %v1579, %v1639
      %v1840 = vadd.f32 %v1580, %v1636
      %v1841 = vadd.f32 %v1581, %v1637
      %v1842 = vadd.f32 %v1582, %v1638
      %v1843 = vadd.f32 %v1583, %v1639
      %v1844 = vadd.f32 %v1584, %v1636
      %v1845 = vadd.f32 %v1585, %v1637
      %v1846 = vadd.f32 %v1586, %v1638
      %v1847 = vadd.f32 %v1587, %v1639
      %v1848 = vadd.f32 %v1588, %v1636
      %v1849 = vadd.f32 %v1589, %v1637
      %v1850 = vadd.f32 %v1590, %v1638
      %v1851 = vadd.f32 %v1591, %v1639
      %v1852 = vadd.f32 %v1592, %v1636
      %v1853 = vadd.f32 %v1593, %v1637
      %v1854 = vadd.f32 %v1594, %v1638
      %v1855 = vadd.f32 %v1595, %v1639
      %v1856 = vadd.f32 %v1596, %v1636
      %v1857 = vadd.f32 %v1597, %v1637
      %v1858 = vadd.f32 %v1598, %v1638
      %v1859 = vadd.f32 %v1599, %v1639
      %v1860 = vadd.f32 %v1600, %v1636
      %v1861 = vadd.f32 %v1601, %v1637
      %v1862 = vadd.f32 %v1602, %v1638
      %v1863 = vadd.f32 %v1603, %v1639
      %v1864 = vadd.f32 %v1604, %v1636
      %v1865 = vadd.f32 %v1605, %v1637
      %v1866 = vadd.f32 %v1606, %v1638
      %v1867 = vadd.f32 %v1607, %v1639
      %v1868 = vadd.f32 %v1608, %v1636
      %v1869 = vadd.f32 %v1609, %v1637
      %v1870 = vadd.f32 %v1610, %v1638
      %v1871 = vadd.f32 %v1611, %v1639
      %v1872 = vadd.f32 %v1612, %v1636
      %v1873 = vadd.f32 %v1613, %v1637
      %v1874 = vadd.f32 %v1614, %v1638
      %v1875 = vadd.f32 %v1615, %v1639
      %v1876 = vadd.f32 %v1616, %v1636
      %v1877 = vadd.f32 %v1617, %v1637
      %v1878 = vadd.f32 %v1618, %v1638
      %v1879 = vadd.f32 %v1619, %v1639
      %v1880 = vadd.f32 %v1620, %v1636
      %v1881 = vadd.f32 %v1621, %v1637
      %v1882 = vadd.f32 %v1622, %v1638
      %v1883 = vadd.f32 %v1623, %v1639
      %v1884 = vadd.f32 %v1624, %v1636
      %v1885 = vadd.f32 %v1625, %v1637
      %v1886 = vadd.f32 %v1626, %v1638
      %v1887 = vadd.f32 %v1627, %v1639
      %v1888 = vadd.f32 %v1628, %v1636
      %v1889 = vadd.f32 %v1629, %v1637
      %v1890 = vadd.f32 %v1630, %v1638
      %v1891 = vadd.f32 %v1631, %v1639
      %v1892 = vadd.f32 %v1632, %v1636
      %v1893 = vadd.f32 %v1633, %v1637
      %v1894 = vadd.f32 %v1634, %v1638
      %v1895 = vadd.f32 %v1635, %v1639
      %v1896 = vpack.c.bf16 %v1644, %v1640
      %v1897 = vpack.c.bf16 %v1645, %v1641
      %v1898 = vpack.c.bf16 %v1646, %v1642
      %v1899 = vpack.c.bf16 %v1647, %v1643
      %v1900 = vpack.c.bf16 %v1652, %v1648
      %v1901 = vpack.c.bf16 %v1653, %v1649
      %v1902 = vpack.c.bf16 %v1654, %v1650
      %v1903 = vpack.c.bf16 %v1655, %v1651
      %v1904 = vpack.c.bf16 %v1660, %v1656
      %v1905 = vpack.c.bf16 %v1661, %v1657
      %v1906 = vpack.c.bf16 %v1662, %v1658
      %v1907 = vpack.c.bf16 %v1663, %v1659
      %v1908 = vpack.c.bf16 %v1668, %v1664
      %v1909 = vpack.c.bf16 %v1669, %v1665
      %v1910 = vpack.c.bf16 %v1670, %v1666
      %v1911 = vpack.c.bf16 %v1671, %v1667
      %v1912 = vpack.c.bf16 %v1676, %v1672
      %v1913 = vpack.c.bf16 %v1677, %v1673
      %v1914 = vpack.c.bf16 %v1678, %v1674
      %v1915 = vpack.c.bf16 %v1679, %v1675
      %v1916 = vpack.c.bf16 %v1684, %v1680
      %v1917 = vpack.c.bf16 %v1685, %v1681
      %v1918 = vpack.c.bf16 %v1686, %v1682
      %v1919 = vpack.c.bf16 %v1687, %v1683
      %v1920 = vpack.c.bf16 %v1692, %v1688
      %v1921 = vpack.c.bf16 %v1693, %v1689
      %v1922 = vpack.c.bf16 %v1694, %v1690
      %v1923 = vpack.c.bf16 %v1695, %v1691
      %v1924 = vpack.c.bf16 %v1700, %v1696
      %v1925 = vpack.c.bf16 %v1701, %v1697
      %v1926 = vpack.c.bf16 %v1702, %v1698
      %v1927 = vpack.c.bf16 %v1703, %v1699
      %v1928 = vpack.c.bf16 %v1708, %v1704
      %v1929 = vpack.c.bf16 %v1709, %v1705
      %v1930 = vpack.c.bf16 %v1710, %v1706
      %v1931 = vpack.c.bf16 %v1711, %v1707
      %v1932 = vpack.c.bf16 %v1716, %v1712
      %v1933 = vpack.c.bf16 %v1717, %v1713
      %v1934 = vpack.c.bf16 %v1718, %v1714
      %v1935 = vpack.c.bf16 %v1719, %v1715
      %v1936 = vpack.c.bf16 %v1724, %v1720
      %v1937 = vpack.c.bf16 %v1725, %v1721
      %v1938 = vpack.c.bf16 %v1726, %v1722
      %v1939 = vpack.c.bf16 %v1727, %v1723
      %v1940 = vpack.c.bf16 %v1732, %v1728
      %v1941 = vpack.c.bf16 %v1733, %v1729
      %v1942 = vpack.c.bf16 %v1734, %v1730
      %v1943 = vpack.c.bf16 %v1735, %v1731
      %v1944 = vpack.c.bf16 %v1740, %v1736
      %v1945 = vpack.c.bf16 %v1741, %v1737
      %v1946 = vpack.c.bf16 %v1742, %v1738
      %v1947 = vpack.c.bf16 %v1743, %v1739
      %v1948 = vpack.c.bf16 %v1748, %v1744
      %v1949 = vpack.c.bf16 %v1749, %v1745
      %v1950 = vpack.c.bf16 %v1750, %v1746
      %v1951 = vpack.c.bf16 %v1751, %v1747
      %v1952 = vpack.c.bf16 %v1756, %v1752
      %v1953 = vpack.c.bf16 %v1757, %v1753
      %v1954 = vpack.c.bf16 %v1758, %v1754
      %v1955 = vpack.c.bf16 %v1759, %v1755
      %v1956 = vpack.c.bf16 %v1764, %v1760
      %v1957 = vpack.c.bf16 %v1765, %v1761
      %v1958 = vpack.c.bf16 %v1766, %v1762
      %v1959 = vpack.c.bf16 %v1767, %v1763
      %v1960 = vpack.c.bf16 %v1772, %v1768
      %v1961 = vpack.c.bf16 %v1773, %v1769
      %v1962 = vpack.c.bf16 %v1774, %v1770
      %v1963 = vpack.c.bf16 %v1775, %v1771
      %v1964 = vpack.c.bf16 %v1780, %v1776
      %v1965 = vpack.c.bf16 %v1781, %v1777
      %v1966 = vpack.c.bf16 %v1782, %v1778
      %v1967 = vpack.c.bf16 %v1783, %v1779
      %v1968 = vpack.c.bf16 %v1788, %v1784
      %v1969 = vpack.c.bf16 %v1789, %v1785
      %v1970 = vpack.c.bf16 %v1790, %v1786
      %v1971 = vpack.c.bf16 %v1791, %v1787
      %v1972 = vpack.c.bf16 %v1796, %v1792
      %v1973 = vpack.c.bf16 %v1797, %v1793
      %v1974 = vpack.c.bf16 %v1798, %v1794
      %v1975 = vpack.c.bf16 %v1799, %v1795
      %v1976 = vpack.c.bf16 %v1804, %v1800
      %v1977 = vpack.c.bf16 %v1805, %v1801
      %v1978 = vpack.c.bf16 %v1806, %v1802
      %v1979 = vpack.c.bf16 %v1807, %v1803
      %v1980 = vpack.c.bf16 %v1812, %v1808
      %v1981 = vpack.c.bf16 %v1813, %v1809
      %v1982 = vpack.c.bf16 %v1814, %v1810
      %v1983 = vpack.c.bf16 %v1815, %v1811
      %v1984 = vpack.c.bf16 %v1820, %v1816
      %v1985 = vpack.c.bf16 %v1821, %v1817
      %v1986 = vpack.c.bf16 %v1822, %v1818
      %v1987 = vpack.c.bf16 %v1823, %v1819
      %v1988 = vpack.c.bf16 %v1828, %v1824
      %v1989 = vpack.c.bf16 %v1829, %v1825
      %v1990 = vpack.c.bf16 %v1830, %v1826
      %v1991 = vpack.c.bf16 %v1831, %v1827
      %v1992 = vpack.c.bf16 %v1836, %v1832
      %v1993 = vpack.c.bf16 %v1837, %v1833
      %v1994 = vpack.c.bf16 %v1838, %v1834
      %v1995 = vpack.c.bf16 %v1839, %v1835
      %v1996 = vpack.c.bf16 %v1844, %v1840
      %v1997 = vpack.c.bf16 %v1845, %v1841
      %v1998 = vpack.c.bf16 %v1846, %v1842
      %v1999 = vpack.c.bf16 %v1847, %v1843
      %v2000 = vpack.c.bf16 %v1852, %v1848
      %v2001 = vpack.c.bf16 %v1853, %v1849
      %v2002 = vpack.c.bf16 %v1854, %v1850
      %v2003 = vpack.c.bf16 %v1855, %v1851
      %v2004 = vpack.c.bf16 %v1860, %v1856
      %v2005 = vpack.c.bf16 %v1861, %v1857
      %v2006 = vpack.c.bf16 %v1862, %v1858
      %v2007 = vpack.c.bf16 %v1863, %v1859
      %v2008 = vpack.c.bf16 %v1868, %v1864
      %v2009 = vpack.c.bf16 %v1869, %v1865
      %v2010 = vpack.c.bf16 %v1870, %v1866
      %v2011 = vpack.c.bf16 %v1871, %v1867
      %v2012 = vpack.c.bf16 %v1876, %v1872
      %v2013 = vpack.c.bf16 %v1877, %v1873
      %v2014 = vpack.c.bf16 %v1878, %v1874
      %v2015 = vpack.c.bf16 %v1879, %v1875
      %v2016 = vpack.c.bf16 %v1884, %v1880
      %v2017 = vpack.c.bf16 %v1885, %v1881
      %v2018 = vpack.c.bf16 %v1886, %v1882
      %v2019 = vpack.c.bf16 %v1887, %v1883
      %v2020 = vpack.c.bf16 %v1892, %v1888
      %v2021 = vpack.c.bf16 %v1893, %v1889
      %v2022 = vpack.c.bf16 %v1894, %v1890
      %v2023 = vpack.c.bf16 %v1895, %v1891
      %v2024 = vld [vmem:[%s3] sm:$0xff]
      %v2025 = vld [vmem:[%s3 + $0x8] sm:$0xff]
      %v2026 = vld [vmem:[%s3 + $0x10] sm:$0xff]
      %v2027 = vld [vmem:[%s3 + $0x18] sm:$0xff]
      %v2028 = vld [vmem:[%s3 + $0x20] sm:$0xff]
      %v2029 = vld [vmem:[%s3 + $0x28] sm:$0xff]
      %v2030 = vld [vmem:[%s3 + $0x30] sm:$0xff]
      %v2031 = vld [vmem:[%s3 + $0x38] sm:$0xff]
      %v2032 = vld [vmem:[%s3 + $0x40] sm:$0xff]
      %v2033 = vld [vmem:[%s3 + $0x48] sm:$0xff]
      %v2034 = vld [vmem:[%s3 + $0x50] sm:$0xff]
      %v2035 = vld [vmem:[%s3 + $0x58] sm:$0xff]
      %v2036 = vld [vmem:[%s3 + $0x60] sm:$0xff]
      %v2037 = vld [vmem:[%s3 + $0x68] sm:$0xff]
      %v2038 = vld [vmem:[%s3 + $0x70] sm:$0xff]
      %v2039 = vld [vmem:[%s3 + $0x78] sm:$0xff]
      %v2040 = vld [vmem:[%s3 + $0x80] sm:$0xff]
      %v2041 = vld [vmem:[%s3 + $0x88] sm:$0xff]
      %v2042 = vld [vmem:[%s3 + $0x90] sm:$0xff]
      %v2043 = vld [vmem:[%s3 + $0x98] sm:$0xff]
      %v2044 = vld [vmem:[%s3 + $0xa0] sm:$0xff]
      %v2045 = vld [vmem:[%s3 + $0xa8] sm:$0xff]
      %v2046 = vld [vmem:[%s3 + $0xb0] sm:$0xff]
      %v2047 = vld [vmem:[%s3 + $0xb8] sm:$0xff]
      %v2048 = vld [vmem:[%s3 + $0xc0] sm:$0xff]
      %v2049 = vld [vmem:[%s3 + $0xc8] sm:$0xff]
      %v2050 = vld [vmem:[%s3 + $0xd0] sm:$0xff]
      %v2051 = vld [vmem:[%s3 + $0xd8] sm:$0xff]
      %v2052 = vld [vmem:[%s3 + $0xe0] sm:$0xff]
      %v2053 = vld [vmem:[%s3 + $0xe8] sm:$0xff]
      %v2054 = vld [vmem:[%s3 + $0xf0] sm:$0xff]
      %v2055 = vld [vmem:[%s3 + $0xf8] sm:$0xff]
      %v2056 = vld [vmem:[%s3 + $0x100] sm:$0xff]
      %v2057 = vld [vmem:[%s3 + $0x108] sm:$0xff]
      %v2058 = vld [vmem:[%s3 + $0x110] sm:$0xff]
      %v2059 = vld [vmem:[%s3 + $0x118] sm:$0xff]
      %v2060 = vld [vmem:[%s3 + $0x120] sm:$0xff]
      %v2061 = vld [vmem:[%s3 + $0x128] sm:$0xff]
      %v2062 = vld [vmem:[%s3 + $0x130] sm:$0xff]
      %v2063 = vld [vmem:[%s3 + $0x138] sm:$0xff]
      %v2064 = vld [vmem:[%s3 + $0x140] sm:$0xff]
      %v2065 = vld [vmem:[%s3 + $0x148] sm:$0xff]
      %v2066 = vld [vmem:[%s3 + $0x150] sm:$0xff]
      %v2067 = vld [vmem:[%s3 + $0x158] sm:$0xff]
      %v2068 = vld [vmem:[%s3 + $0x160] sm:$0xff]
      %v2069 = vld [vmem:[%s3 + $0x168] sm:$0xff]
      %v2070 = vld [vmem:[%s3 + $0x170] sm:$0xff]
      %v2071 = vld [vmem:[%s3 + $0x178] sm:$0xff]
      %v2072 = vld [vmem:[%s3 + $0x180] sm:$0xff]
      %v2073 = vld [vmem:[%s3 + $0x188] sm:$0xff]
      %v2074 = vld [vmem:[%s3 + $0x190] sm:$0xff]
      %v2075 = vld [vmem:[%s3 + $0x198] sm:$0xff]
      %v2076 = vld [vmem:[%s3 + $0x1a0] sm:$0xff]
      %v2077 = vld [vmem:[%s3 + $0x1a8] sm:$0xff]
      %v2078 = vld [vmem:[%s3 + $0x1b0] sm:$0xff]
      %v2079 = vld [vmem:[%s3 + $0x1b8] sm:$0xff]
      %v2080 = vld [vmem:[%s3 + $0x1c0] sm:$0xff]
      %v2081 = vld [vmem:[%s3 + $0x1c8] sm:$0xff]
      %v2082 = vld [vmem:[%s3 + $0x1d0] sm:$0xff]
      %v2083 = vld [vmem:[%s3 + $0x1d8] sm:$0xff]
      %v2084 = vld [vmem:[%s3 + $0x1e0] sm:$0xff]
      %v2085 = vld [vmem:[%s3 + $0x1e8] sm:$0xff]
      %v2086 = vld [vmem:[%s3 + $0x1f0] sm:$0xff]
      %v2087 = vld [vmem:[%s3 + $0x1f8] sm:$0xff]
      %v2088 = vld [vmem:[%s4] sm:$0x3]
      %v2090 = vperm.slane %v2088, 0
      %v2091 = vperm.slane %v2088, 1
      %v2158 = vunpack.c.l.b16 %v2024
      %v2159 = vunpack.c.h.b16 %v2024
      %v2160 = vunpack.c.l.b16 %v2025
      %v2161 = vunpack.c.h.b16 %v2025
      %v2162 = vunpack.c.l.b16 %v2026
      %v2163 = vunpack.c.h.b16 %v2026
      %v2164 = vunpack.c.l.b16 %v2027
      %v2165 = vunpack.c.h.b16 %v2027
      %v2166 = vunpack.c.l.b16 %v2028
      %v2167 = vunpack.c.h.b16 %v2028
      %v2168 = vunpack.c.l.b16 %v2029
      %v2169 = vunpack.c.h.b16 %v2029
      %v2170 = vunpack.c.l.b16 %v2030
      %v2171 = vunpack.c.h.b16 %v2030
      %v2172 = vunpack.c.l.b16 %v2031
      %v2173 = vunpack.c.h.b16 %v2031
      %v2174 = vunpack.c.l.b16 %v2032
      %v2175 = vunpack.c.h.b16 %v2032
      %v2176 = vunpack.c.l.b16 %v2033
      %v2177 = vunpack.c.h.b16 %v2033
      %v2178 = vunpack.c.l.b16 %v2034
      %v2179 = vunpack.c.h.b16 %v2034
      %v2180 = vunpack.c.l.b16 %v2035
      %v2181 = vunpack.c.h.b16 %v2035
      %v2182 = vunpack.c.l.b16 %v2036
      %v2183 = vunpack.c.h.b16 %v2036
      %v2184 = vunpack.c.l.b16 %v2037
      %v2185 = vunpack.c.h.b16 %v2037
      %v2186 = vunpack.c.l.b16 %v2038
      %v2187 = vunpack.c.h.b16 %v2038
      %v2188 = vunpack.c.l.b16 %v2039
      %v2189 = vunpack.c.h.b16 %v2039
      %v2190 = vunpack.c.l.b16 %v2040
      %v2191 = vunpack.c.h.b16 %v2040
      %v2192 = vunpack.c.l.b16 %v2041
      %v2193 = vunpack.c.h.b16 %v2041
      %v2194 = vunpack.c.l.b16 %v2042
      %v2195 = vunpack.c.h.b16 %v2042
      %v2196 = vunpack.c.l.b16 %v2043
      %v2197 = vunpack.c.h.b16 %v2043
      %v2198 = vunpack.c.l.b16 %v2044
      %v2199 = vunpack.c.h.b16 %v2044
      %v2200 = vunpack.c.l.b16 %v2045
      %v2201 = vunpack.c.h.b16 %v2045
      %v2202 = vunpack.c.l.b16 %v2046
      %v2203 = vunpack.c.h.b16 %v2046
      %v2204 = vunpack.c.l.b16 %v2047
      %v2205 = vunpack.c.h.b16 %v2047
      %v2206 = vunpack.c.l.b16 %v2048
      %v2207 = vunpack.c.h.b16 %v2048
      %v2208 = vunpack.c.l.b16 %v2049
      %v2209 = vunpack.c.h.b16 %v2049
      %v2210 = vunpack.c.l.b16 %v2050
      %v2211 = vunpack.c.h.b16 %v2050
      %v2212 = vunpack.c.l.b16 %v2051
      %v2213 = vunpack.c.h.b16 %v2051
      %v2214 = vunpack.c.l.b16 %v2052
      %v2215 = vunpack.c.h.b16 %v2052
      %v2216 = vunpack.c.l.b16 %v2053
      %v2217 = vunpack.c.h.b16 %v2053
      %v2218 = vunpack.c.l.b16 %v2054
      %v2219 = vunpack.c.h.b16 %v2054
      %v2220 = vunpack.c.l.b16 %v2055
      %v2221 = vunpack.c.h.b16 %v2055
      %v2222 = vunpack.c.l.b16 %v2056
      %v2223 = vunpack.c.h.b16 %v2056
      %v2224 = vunpack.c.l.b16 %v2057
      %v2225 = vunpack.c.h.b16 %v2057
      %v2226 = vunpack.c.l.b16 %v2058
      %v2227 = vunpack.c.h.b16 %v2058
      %v2228 = vunpack.c.l.b16 %v2059
      %v2229 = vunpack.c.h.b16 %v2059
      %v2230 = vunpack.c.l.b16 %v2060
      %v2231 = vunpack.c.h.b16 %v2060
      %v2232 = vunpack.c.l.b16 %v2061
      %v2233 = vunpack.c.h.b16 %v2061
      %v2234 = vunpack.c.l.b16 %v2062
      %v2235 = vunpack.c.h.b16 %v2062
      %v2236 = vunpack.c.l.b16 %v2063
      %v2237 = vunpack.c.h.b16 %v2063
      %v2238 = vunpack.c.l.b16 %v2064
      %v2239 = vunpack.c.h.b16 %v2064
      %v2240 = vunpack.c.l.b16 %v2065
      %v2241 = vunpack.c.h.b16 %v2065
      %v2242 = vunpack.c.l.b16 %v2066
      %v2243 = vunpack.c.h.b16 %v2066
      %v2244 = vunpack.c.l.b16 %v2067
      %v2245 = vunpack.c.h.b16 %v2067
      %v2246 = vunpack.c.l.b16 %v2068
      %v2247 = vunpack.c.h.b16 %v2068
      %v2248 = vunpack.c.l.b16 %v2069
      %v2249 = vunpack.c.h.b16 %v2069
      %v2250 = vunpack.c.l.b16 %v2070
      %v2251 = vunpack.c.h.b16 %v2070
      %v2252 = vunpack.c.l.b16 %v2071
      %v2253 = vunpack.c.h.b16 %v2071
      %v2254 = vunpack.c.l.b16 %v2072
      %v2255 = vunpack.c.h.b16 %v2072
      %v2256 = vunpack.c.l.b16 %v2073
      %v2257 = vunpack.c.h.b16 %v2073
      %v2258 = vunpack.c.l.b16 %v2074
      %v2259 = vunpack.c.h.b16 %v2074
      %v2260 = vunpack.c.l.b16 %v2075
      %v2261 = vunpack.c.h.b16 %v2075
      %v2262 = vunpack.c.l.b16 %v2076
      %v2263 = vunpack.c.h.b16 %v2076
      %v2264 = vunpack.c.l.b16 %v2077
      %v2265 = vunpack.c.h.b16 %v2077
      %v2266 = vunpack.c.l.b16 %v2078
      %v2267 = vunpack.c.h.b16 %v2078
      %v2268 = vunpack.c.l.b16 %v2079
      %v2269 = vunpack.c.h.b16 %v2079
      %v2270 = vunpack.c.l.b16 %v2080
      %v2271 = vunpack.c.h.b16 %v2080
      %v2272 = vunpack.c.l.b16 %v2081
      %v2273 = vunpack.c.h.b16 %v2081
      %v2274 = vunpack.c.l.b16 %v2082
      %v2275 = vunpack.c.h.b16 %v2082
      %v2276 = vunpack.c.l.b16 %v2083
      %v2277 = vunpack.c.h.b16 %v2083
      %v2278 = vunpack.c.l.b16 %v2084
      %v2279 = vunpack.c.h.b16 %v2084
      %v2280 = vunpack.c.l.b16 %v2085
      %v2281 = vunpack.c.h.b16 %v2085
      %v2282 = vunpack.c.l.b16 %v2086
      %v2283 = vunpack.c.h.b16 %v2086
      %v2284 = vunpack.c.l.b16 %v2087
      %v2285 = vunpack.c.h.b16 %v2087
      %v2286 = vpack.c.b16 %v2160, %v2158
      %v2287 = vpack.c.b16 %v2161, %v2159
      %v2288 = vpack.c.b16 %v2164, %v2162
      %v2289 = vpack.c.b16 %v2165, %v2163
      %v2290 = vpack.c.b16 %v2168, %v2166
      %v2291 = vpack.c.b16 %v2169, %v2167
      %v2292 = vpack.c.b16 %v2172, %v2170
      %v2293 = vpack.c.b16 %v2173, %v2171
      %v2294 = vpack.c.b16 %v2176, %v2174
      %v2295 = vpack.c.b16 %v2177, %v2175
      %v2296 = vpack.c.b16 %v2180, %v2178
      %v2297 = vpack.c.b16 %v2181, %v2179
      %v2298 = vpack.c.b16 %v2184, %v2182
      %v2299 = vpack.c.b16 %v2185, %v2183
      %v2300 = vpack.c.b16 %v2188, %v2186
      %v2301 = vpack.c.b16 %v2189, %v2187
      %v2302 = vpack.c.b16 %v2192, %v2190
      %v2303 = vpack.c.b16 %v2193, %v2191
      %v2304 = vpack.c.b16 %v2196, %v2194
      %v2305 = vpack.c.b16 %v2197, %v2195
      %v2306 = vpack.c.b16 %v2200, %v2198
      %v2307 = vpack.c.b16 %v2201, %v2199
      %v2308 = vpack.c.b16 %v2204, %v2202
      %v2309 = vpack.c.b16 %v2205, %v2203
      %v2310 = vpack.c.b16 %v2208, %v2206
      %v2311 = vpack.c.b16 %v2209, %v2207
      %v2312 = vpack.c.b16 %v2212, %v2210
      %v2313 = vpack.c.b16 %v2213, %v2211
      %v2314 = vpack.c.b16 %v2216, %v2214
      %v2315 = vpack.c.b16 %v2217, %v2215
      %v2316 = vpack.c.b16 %v2220, %v2218
      %v2317 = vpack.c.b16 %v2221, %v2219
      %v2318 = vpack.c.b16 %v2224, %v2222
      %v2319 = vpack.c.b16 %v2225, %v2223
      %v2320 = vpack.c.b16 %v2228, %v2226
      %v2321 = vpack.c.b16 %v2229, %v2227
      %v2322 = vpack.c.b16 %v2232, %v2230
      %v2323 = vpack.c.b16 %v2233, %v2231
      %v2324 = vpack.c.b16 %v2236, %v2234
      %v2325 = vpack.c.b16 %v2237, %v2235
      %v2326 = vpack.c.b16 %v2240, %v2238
      %v2327 = vpack.c.b16 %v2241, %v2239
      %v2328 = vpack.c.b16 %v2244, %v2242
      %v2329 = vpack.c.b16 %v2245, %v2243
      %v2330 = vpack.c.b16 %v2248, %v2246
      %v2331 = vpack.c.b16 %v2249, %v2247
      %v2332 = vpack.c.b16 %v2252, %v2250
      %v2333 = vpack.c.b16 %v2253, %v2251
      %v2334 = vpack.c.b16 %v2256, %v2254
      %v2335 = vpack.c.b16 %v2257, %v2255
      %v2336 = vpack.c.b16 %v2260, %v2258
      %v2337 = vpack.c.b16 %v2261, %v2259
      %v2338 = vpack.c.b16 %v2264, %v2262
      %v2339 = vpack.c.b16 %v2265, %v2263
      %v2340 = vpack.c.b16 %v2268, %v2266
      %v2341 = vpack.c.b16 %v2269, %v2267
      %v2342 = vpack.c.b16 %v2272, %v2270
      %v2343 = vpack.c.b16 %v2273, %v2271
      %v2344 = vpack.c.b16 %v2276, %v2274
      %v2345 = vpack.c.b16 %v2277, %v2275
      %v2346 = vpack.c.b16 %v2280, %v2278
      %v2347 = vpack.c.b16 %v2281, %v2279
      %v2348 = vpack.c.b16 %v2284, %v2282
      %v2349 = vpack.c.b16 %v2285, %v2283
      %2414 = vmatpush.bf16.msra.mxu0 %v2300
      %2415 = vmatpush.bf16.msra.mxu0 %v2298
      %2416 = vmatpush.bf16.msra.mxu0 %v2296
      %2417 = vmatpush.bf16.msra.mxu0 %v2294
      %2418 = vmatpush.bf16.msra.mxu0 %v2292
      %2419 = vmatpush.bf16.msra.mxu0 %v2290
      %2420 = vmatpush.bf16.msra.mxu0 %v2288
      %2421 = vmatpush.bf16.msra.mxu0 %v2286
      %2422 = vmatmul.bf16.gmra.mxu0 %v1896
      %v2423 = vpop.f32.mrf.mxu0
      %v2424 = vadd.f32 %v2090, %v2423
      %v2425 = vpop.f32.mrf.mxu0
      %v2426 = vadd.f32 %v2090, %v2425
      %2427 = vmatmul.bf16.gmra.mxu0 %v1900
      %v2428 = vpop.f32.mrf.mxu0
      %v2429 = vadd.f32 %v2090, %v2428
      %v2430 = vpop.f32.mrf.mxu0
      %v2431 = vadd.f32 %v2090, %v2430
      %2432 = vmatmul.bf16.gmra.mxu0 %v1904
      %v2433 = vpop.f32.mrf.mxu0
      %v2434 = vadd.f32 %v2090, %v2433
      %v2435 = vpop.f32.mrf.mxu0
      %v2436 = vadd.f32 %v2090, %v2435
      %2437 = vmatmul.bf16.gmra.mxu0 %v1908
      %v2438 = vpop.f32.mrf.mxu0
      %v2439 = vadd.f32 %v2090, %v2438
      %v2440 = vpop.f32.mrf.mxu0
      %v2441 = vadd.f32 %v2090, %v2440
      %2442 = vmatmul.bf16.gmra.mxu0 %v1912
      %v2443 = vpop.f32.mrf.mxu0
      %v2444 = vadd.f32 %v2090, %v2443
      %v2445 = vpop.f32.mrf.mxu0
      %v2446 = vadd.f32 %v2090, %v2445
      %2447 = vmatmul.bf16.gmra.mxu0 %v1916
      %v2448 = vpop.f32.mrf.mxu0
      %v2449 = vadd.f32 %v2090, %v2448
      %v2450 = vpop.f32.mrf.mxu0
      %v2451 = vadd.f32 %v2090, %v2450
      %2452 = vmatmul.bf16.gmra.mxu0 %v1920
      %v2453 = vpop.f32.mrf.mxu0
      %v2454 = vadd.f32 %v2090, %v2453
      %v2455 = vpop.f32.mrf.mxu0
      %v2456 = vadd.f32 %v2090, %v2455
      %2457 = vmatmul.bf16.gmra.mxu0 %v1924
      %v2458 = vpop.f32.mrf.mxu0
      %v2459 = vadd.f32 %v2090, %v2458
      %v2460 = vpop.f32.mrf.mxu0
      %v2461 = vadd.f32 %v2090, %v2460
      %2462 = vmatmul.bf16.gmra.mxu0 %v1928
      %v2463 = vpop.f32.mrf.mxu0
      %v2464 = vadd.f32 %v2090, %v2463
      %v2465 = vpop.f32.mrf.mxu0
      %v2466 = vadd.f32 %v2090, %v2465
      %2467 = vmatmul.bf16.gmra.mxu0 %v1932
      %v2468 = vpop.f32.mrf.mxu0
      %v2469 = vadd.f32 %v2090, %v2468
      %v2470 = vpop.f32.mrf.mxu0
      %v2471 = vadd.f32 %v2090, %v2470
      %2472 = vmatmul.bf16.gmra.mxu0 %v1936
      %v2473 = vpop.f32.mrf.mxu0
      %v2474 = vadd.f32 %v2090, %v2473
      %v2475 = vpop.f32.mrf.mxu0
      %v2476 = vadd.f32 %v2090, %v2475
      %2477 = vmatmul.bf16.gmra.mxu0 %v1940
      %v2478 = vpop.f32.mrf.mxu0
      %v2479 = vadd.f32 %v2090, %v2478
      %v2480 = vpop.f32.mrf.mxu0
      %v2481 = vadd.f32 %v2090, %v2480
      %2482 = vmatmul.bf16.gmra.mxu0 %v1944
      %v2483 = vpop.f32.mrf.mxu0
      %v2484 = vadd.f32 %v2090, %v2483
      %v2485 = vpop.f32.mrf.mxu0
      %v2486 = vadd.f32 %v2090, %v2485
      %2487 = vmatmul.bf16.gmra.mxu0 %v1948
      %v2488 = vpop.f32.mrf.mxu0
      %v2489 = vadd.f32 %v2090, %v2488
      %v2490 = vpop.f32.mrf.mxu0
      %v2491 = vadd.f32 %v2090, %v2490
      %2492 = vmatmul.bf16.gmra.mxu0 %v1952
      %v2493 = vpop.f32.mrf.mxu0
      %v2494 = vadd.f32 %v2090, %v2493
      %v2495 = vpop.f32.mrf.mxu0
      %v2496 = vadd.f32 %v2090, %v2495
      %2497 = vmatmul.bf16.gmra.mxu0 %v1956
      %v2498 = vpop.f32.mrf.mxu0
      %v2499 = vadd.f32 %v2090, %v2498
      %v2500 = vpop.f32.mrf.mxu0
      %v2501 = vadd.f32 %v2090, %v2500
      %2502 = vmatmul.bf16.gmra.mxu0 %v1960
      %v2503 = vpop.f32.mrf.mxu0
      %v2504 = vadd.f32 %v2090, %v2503
      %v2505 = vpop.f32.mrf.mxu0
      %v2506 = vadd.f32 %v2090, %v2505
      %2507 = vmatmul.bf16.gmra.mxu0 %v1964
      %v2508 = vpop.f32.mrf.mxu0
      %v2509 = vadd.f32 %v2090, %v2508
      %v2510 = vpop.f32.mrf.mxu0
      %v2511 = vadd.f32 %v2090, %v2510
      %2512 = vmatmul.bf16.gmra.mxu0 %v1968
      %v2513 = vpop.f32.mrf.mxu0
      %v2514 = vadd.f32 %v2090, %v2513
      %v2515 = vpop.f32.mrf.mxu0
      %v2516 = vadd.f32 %v2090, %v2515
      %2517 = vmatmul.bf16.gmra.mxu0 %v1972
      %v2518 = vpop.f32.mrf.mxu0
      %v2519 = vadd.f32 %v2090, %v2518
      %v2520 = vpop.f32.mrf.mxu0
      %v2521 = vadd.f32 %v2090, %v2520
      %2522 = vmatmul.bf16.gmra.mxu0 %v1976
      %v2523 = vpop.f32.mrf.mxu0
      %v2524 = vadd.f32 %v2090, %v2523
      %v2525 = vpop.f32.mrf.mxu0
      %v2526 = vadd.f32 %v2090, %v2525
      %2527 = vmatmul.bf16.gmra.mxu0 %v1980
      %v2528 = vpop.f32.mrf.mxu0
      %v2529 = vadd.f32 %v2090, %v2528
      %v2530 = vpop.f32.mrf.mxu0
      %v2531 = vadd.f32 %v2090, %v2530
      %2532 = vmatmul.bf16.gmra.mxu0 %v1984
      %v2533 = vpop.f32.mrf.mxu0
      %v2534 = vadd.f32 %v2090, %v2533
      %v2535 = vpop.f32.mrf.mxu0
      %v2536 = vadd.f32 %v2090, %v2535
      %2537 = vmatmul.bf16.gmra.mxu0 %v1988
      %v2538 = vpop.f32.mrf.mxu0
      %v2539 = vadd.f32 %v2090, %v2538
      %v2540 = vpop.f32.mrf.mxu0
      %v2541 = vadd.f32 %v2090, %v2540
      %2542 = vmatmul.bf16.gmra.mxu0 %v1992
      %v2543 = vpop.f32.mrf.mxu0
      %v2544 = vadd.f32 %v2090, %v2543
      %v2545 = vpop.f32.mrf.mxu0
      %v2546 = vadd.f32 %v2090, %v2545
      %2547 = vmatmul.bf16.gmra.mxu0 %v1996
      %v2548 = vpop.f32.mrf.mxu0
      %v2549 = vadd.f32 %v2090, %v2548
      %v2550 = vpop.f32.mrf.mxu0
      %v2551 = vadd.f32 %v2090, %v2550
      %2552 = vmatmul.bf16.gmra.mxu0 %v2000
      %v2553 = vpop.f32.mrf.mxu0
      %v2554 = vadd.f32 %v2090, %v2553
      %v2555 = vpop.f32.mrf.mxu0
      %v2556 = vadd.f32 %v2090, %v2555
      %2557 = vmatmul.bf16.gmra.mxu0 %v2004
      %v2558 = vpop.f32.mrf.mxu0
      %v2559 = vadd.f32 %v2090, %v2558
      %v2560 = vpop.f32.mrf.mxu0
      %v2561 = vadd.f32 %v2090, %v2560
      %2562 = vmatmul.bf16.gmra.mxu0 %v2008
      %v2563 = vpop.f32.mrf.mxu0
      %v2564 = vadd.f32 %v2090, %v2563
      %v2565 = vpop.f32.mrf.mxu0
      %v2566 = vadd.f32 %v2090, %v2565
      %2567 = vmatmul.bf16.gmra.mxu0 %v2012
      %v2568 = vpop.f32.mrf.mxu0
      %v2569 = vadd.f32 %v2090, %v2568
      %v2570 = vpop.f32.mrf.mxu0
      %v2571 = vadd.f32 %v2090, %v2570
      %2572 = vmatmul.bf16.gmra.mxu0 %v2016
      %v2573 = vpop.f32.mrf.mxu0
      %v2574 = vadd.f32 %v2090, %v2573
      %v2575 = vpop.f32.mrf.mxu0
      %v2576 = vadd.f32 %v2090, %v2575
      %2577 = vmatmul.bf16.gmra.mxu0 %v2020
      %v2578 = vpop.f32.mrf.mxu0
      %v2579 = vadd.f32 %v2090, %v2578
      %v2580 = vpop.f32.mrf.mxu0
      %v2581 = vadd.f32 %v2090, %v2580
      %2582 = vdwg.mxu0
      %2583 = vmatpush.bf16.msra.mxu0 %v2316
      %2584 = vmatpush.bf16.msra.mxu0 %v2314
      %2585 = vmatpush.bf16.msra.mxu0 %v2312
      %2586 = vmatpush.bf16.msra.mxu0 %v2310
      %2587 = vmatpush.bf16.msra.mxu0 %v2308
      %2588 = vmatpush.bf16.msra.mxu0 %v2306
      %2589 = vmatpush.bf16.msra.mxu0 %v2304
      %2590 = vmatpush.bf16.msra.mxu0 %v2302
      %2591 = vmatmul.bf16.gmra.mxu0 %v1897
      %v2592 = vpop.f32.mrf.mxu0
      %v2593 = vadd.f32 %v2424, %v2592
      %v2594 = vpop.f32.mrf.mxu0
      %v2595 = vadd.f32 %v2426, %v2594
      %2596 = vmatmul.bf16.gmra.mxu0 %v1901
      %v2597 = vpop.f32.mrf.mxu0
      %v2598 = vadd.f32 %v2429, %v2597
      %v2599 = vpop.f32.mrf.mxu0
      %v2600 = vadd.f32 %v2431, %v2599
      %2601 = vmatmul.bf16.gmra.mxu0 %v1905
      %v2602 = vpop.f32.mrf.mxu0
      %v2603 = vadd.f32 %v2434, %v2602
      %v2604 = vpop.f32.mrf.mxu0
      %v2605 = vadd.f32 %v2436, %v2604
      %2606 = vmatmul.bf16.gmra.mxu0 %v1909
      %v2607 = vpop.f32.mrf.mxu0
      %v2608 = vadd.f32 %v2439, %v2607
      %v2609 = vpop.f32.mrf.mxu0
      %v2610 = vadd.f32 %v2441, %v2609
      %2611 = vmatmul.bf16.gmra.mxu0 %v1913
      %v2612 = vpop.f32.mrf.mxu0
      %v2613 = vadd.f32 %v2444, %v2612
      %v2614 = vpop.f32.mrf.mxu0
      %v2615 = vadd.f32 %v2446, %v2614
      %2616 = vmatmul.bf16.gmra.mxu0 %v1917
      %v2617 = vpop.f32.mrf.mxu0
      %v2618 = vadd.f32 %v2449, %v2617
      %v2619 = vpop.f32.mrf.mxu0
      %v2620 = vadd.f32 %v2451, %v2619
      %2621 = vmatmul.bf16.gmra.mxu0 %v1921
      %v2622 = vpop.f32.mrf.mxu0
      %v2623 = vadd.f32 %v2454, %v2622
      %v2624 = vpop.f32.mrf.mxu0
      %v2625 = vadd.f32 %v2456, %v2624
      %2626 = vmatmul.bf16.gmra.mxu0 %v1925
      %v2627 = vpop.f32.mrf.mxu0
      %v2628 = vadd.f32 %v2459, %v2627
      %v2629 = vpop.f32.mrf.mxu0
      %v2630 = vadd.f32 %v2461, %v2629
      %2631 = vmatmul.bf16.gmra.mxu0 %v1929
      %v2632 = vpop.f32.mrf.mxu0
      %v2633 = vadd.f32 %v2464, %v2632
      %v2634 = vpop.f32.mrf.mxu0
      %v2635 = vadd.f32 %v2466, %v2634
      %2636 = vmatmul.bf16.gmra.mxu0 %v1933
      %v2637 = vpop.f32.mrf.mxu0
      %v2638 = vadd.f32 %v2469, %v2637
      %v2639 = vpop.f32.mrf.mxu0
      %v2640 = vadd.f32 %v2471, %v2639
      %2641 = vmatmul.bf16.gmra.mxu0 %v1937
      %v2642 = vpop.f32.mrf.mxu0
      %v2643 = vadd.f32 %v2474, %v2642
      %v2644 = vpop.f32.mrf.mxu0
      %v2645 = vadd.f32 %v2476, %v2644
      %2646 = vmatmul.bf16.gmra.mxu0 %v1941
      %v2647 = vpop.f32.mrf.mxu0
      %v2648 = vadd.f32 %v2479, %v2647
      %v2649 = vpop.f32.mrf.mxu0
      %v2650 = vadd.f32 %v2481, %v2649
      %2651 = vmatmul.bf16.gmra.mxu0 %v1945
      %v2652 = vpop.f32.mrf.mxu0
      %v2653 = vadd.f32 %v2484, %v2652
      %v2654 = vpop.f32.mrf.mxu0
      %v2655 = vadd.f32 %v2486, %v2654
      %2656 = vmatmul.bf16.gmra.mxu0 %v1949
      %v2657 = vpop.f32.mrf.mxu0
      %v2658 = vadd.f32 %v2489, %v2657
      %v2659 = vpop.f32.mrf.mxu0
      %v2660 = vadd.f32 %v2491, %v2659
      %2661 = vmatmul.bf16.gmra.mxu0 %v1953
      %v2662 = vpop.f32.mrf.mxu0
      %v2663 = vadd.f32 %v2494, %v2662
      %v2664 = vpop.f32.mrf.mxu0
      %v2665 = vadd.f32 %v2496, %v2664
      %2666 = vmatmul.bf16.gmra.mxu0 %v1957
      %v2667 = vpop.f32.mrf.mxu0
      %v2668 = vadd.f32 %v2499, %v2667
      %v2669 = vpop.f32.mrf.mxu0
      %v2670 = vadd.f32 %v2501, %v2669
      %2671 = vmatmul.bf16.gmra.mxu0 %v1961
      %v2672 = vpop.f32.mrf.mxu0
      %v2673 = vadd.f32 %v2504, %v2672
      %v2674 = vpop.f32.mrf.mxu0
      %v2675 = vadd.f32 %v2506, %v2674
      %2676 = vmatmul.bf16.gmra.mxu0 %v1965
      %v2677 = vpop.f32.mrf.mxu0
      %v2678 = vadd.f32 %v2509, %v2677
      %v2679 = vpop.f32.mrf.mxu0
      %v2680 = vadd.f32 %v2511, %v2679
      %2681 = vmatmul.bf16.gmra.mxu0 %v1969
      %v2682 = vpop.f32.mrf.mxu0
      %v2683 = vadd.f32 %v2514, %v2682
      %v2684 = vpop.f32.mrf.mxu0
      %v2685 = vadd.f32 %v2516, %v2684
      %2686 = vmatmul.bf16.gmra.mxu0 %v1973
      %v2687 = vpop.f32.mrf.mxu0
      %v2688 = vadd.f32 %v2519, %v2687
      %v2689 = vpop.f32.mrf.mxu0
      %v2690 = vadd.f32 %v2521, %v2689
      %2691 = vmatmul.bf16.gmra.mxu0 %v1977
      %v2692 = vpop.f32.mrf.mxu0
      %v2693 = vadd.f32 %v2524, %v2692
      %v2694 = vpop.f32.mrf.mxu0
      %v2695 = vadd.f32 %v2526, %v2694
      %2696 = vmatmul.bf16.gmra.mxu0 %v1981
      %v2697 = vpop.f32.mrf.mxu0
      %v2698 = vadd.f32 %v2529, %v2697
      %v2699 = vpop.f32.mrf.mxu0
      %v2700 = vadd.f32 %v2531, %v2699
      %2701 = vmatmul.bf16.gmra.mxu0 %v1985
      %v2702 = vpop.f32.mrf.mxu0
      %v2703 = vadd.f32 %v2534, %v2702
      %v2704 = vpop.f32.mrf.mxu0
      %v2705 = vadd.f32 %v2536, %v2704
      %2706 = vmatmul.bf16.gmra.mxu0 %v1989
      %v2707 = vpop.f32.mrf.mxu0
      %v2708 = vadd.f32 %v2539, %v2707
      %v2709 = vpop.f32.mrf.mxu0
      %v2710 = vadd.f32 %v2541, %v2709
      %2711 = vmatmul.bf16.gmra.mxu0 %v1993
      %v2712 = vpop.f32.mrf.mxu0
      %v2713 = vadd.f32 %v2544, %v2712
      %v2714 = vpop.f32.mrf.mxu0
      %v2715 = vadd.f32 %v2546, %v2714
      %2716 = vmatmul.bf16.gmra.mxu0 %v1997
      %v2717 = vpop.f32.mrf.mxu0
      %v2718 = vadd.f32 %v2549, %v2717
      %v2719 = vpop.f32.mrf.mxu0
      %v2720 = vadd.f32 %v2551, %v2719
      %2721 = vmatmul.bf16.gmra.mxu0 %v2001
      %v2722 = vpop.f32.mrf.mxu0
      %v2723 = vadd.f32 %v2554, %v2722
      %v2724 = vpop.f32.mrf.mxu0
      %v2725 = vadd.f32 %v2556, %v2724
      %2726 = vmatmul.bf16.gmra.mxu0 %v2005
      %v2727 = vpop.f32.mrf.mxu0
      %v2728 = vadd.f32 %v2559, %v2727
      %v2729 = vpop.f32.mrf.mxu0
      %v2730 = vadd.f32 %v2561, %v2729
      %2731 = vmatmul.bf16.gmra.mxu0 %v2009
      %v2732 = vpop.f32.mrf.mxu0
      %v2733 = vadd.f32 %v2564, %v2732
      %v2734 = vpop.f32.mrf.mxu0
      %v2735 = vadd.f32 %v2566, %v2734
      %2736 = vmatmul.bf16.gmra.mxu0 %v2013
      %v2737 = vpop.f32.mrf.mxu0
      %v2738 = vadd.f32 %v2569, %v2737
      %v2739 = vpop.f32.mrf.mxu0
      %v2740 = vadd.f32 %v2571, %v2739
      %2741 = vmatmul.bf16.gmra.mxu0 %v2017
      %v2742 = vpop.f32.mrf.mxu0
      %v2743 = vadd.f32 %v2574, %v2742
      %v2744 = vpop.f32.mrf.mxu0
      %v2745 = vadd.f32 %v2576, %v2744
      %2746 = vmatmul.bf16.gmra.mxu0 %v2021
      %v2747 = vpop.f32.mrf.mxu0
      %v2748 = vadd.f32 %v2579, %v2747
      %v2749 = vpop.f32.mrf.mxu0
      %v2750 = vadd.f32 %v2581, %v2749
      %2751 = vdwg.mxu0
      %2752 = vmatpush.bf16.msra.mxu0 %v2332
      %2753 = vmatpush.bf16.msra.mxu0 %v2330
      %2754 = vmatpush.bf16.msra.mxu0 %v2328
      %2755 = vmatpush.bf16.msra.mxu0 %v2326
      %2756 = vmatpush.bf16.msra.mxu0 %v2324
      %2757 = vmatpush.bf16.msra.mxu0 %v2322
      %2758 = vmatpush.bf16.msra.mxu0 %v2320
      %2759 = vmatpush.bf16.msra.mxu0 %v2318
      %2760 = vmatmul.bf16.gmra.mxu0 %v1898
      %v2761 = vpop.f32.mrf.mxu0
      %v2762 = vadd.f32 %v2593, %v2761
      %v2763 = vpop.f32.mrf.mxu0
      %v2764 = vadd.f32 %v2595, %v2763
      %2765 = vmatmul.bf16.gmra.mxu0 %v1902
      %v2766 = vpop.f32.mrf.mxu0
      %v2767 = vadd.f32 %v2598, %v2766
      %v2768 = vpop.f32.mrf.mxu0
      %v2769 = vadd.f32 %v2600, %v2768
      %2770 = vmatmul.bf16.gmra.mxu0 %v1906
      %v2771 = vpop.f32.mrf.mxu0
      %v2772 = vadd.f32 %v2603, %v2771
      %v2773 = vpop.f32.mrf.mxu0
      %v2774 = vadd.f32 %v2605, %v2773
      %2775 = vmatmul.bf16.gmra.mxu0 %v1910
      %v2776 = vpop.f32.mrf.mxu0
      %v2777 = vadd.f32 %v2608, %v2776
      %v2778 = vpop.f32.mrf.mxu0
      %v2779 = vadd.f32 %v2610, %v2778
      %2780 = vmatmul.bf16.gmra.mxu0 %v1914
      %v2781 = vpop.f32.mrf.mxu0
      %v2782 = vadd.f32 %v2613, %v2781
      %v2783 = vpop.f32.mrf.mxu0
      %v2784 = vadd.f32 %v2615, %v2783
      %2785 = vmatmul.bf16.gmra.mxu0 %v1918
      %v2786 = vpop.f32.mrf.mxu0
      %v2787 = vadd.f32 %v2618, %v2786
      %v2788 = vpop.f32.mrf.mxu0
      %v2789 = vadd.f32 %v2620, %v2788
      %2790 = vmatmul.bf16.gmra.mxu0 %v1922
      %v2791 = vpop.f32.mrf.mxu0
      %v2792 = vadd.f32 %v2623, %v2791
      %v2793 = vpop.f32.mrf.mxu0
      %v2794 = vadd.f32 %v2625, %v2793
      %2795 = vmatmul.bf16.gmra.mxu0 %v1926
      %v2796 = vpop.f32.mrf.mxu0
      %v2797 = vadd.f32 %v2628, %v2796
      %v2798 = vpop.f32.mrf.mxu0
      %v2799 = vadd.f32 %v2630, %v2798
      %2800 = vmatmul.bf16.gmra.mxu0 %v1930
      %v2801 = vpop.f32.mrf.mxu0
      %v2802 = vadd.f32 %v2633, %v2801
      %v2803 = vpop.f32.mrf.mxu0
      %v2804 = vadd.f32 %v2635, %v2803
      %2805 = vmatmul.bf16.gmra.mxu0 %v1934
      %v2806 = vpop.f32.mrf.mxu0
      %v2807 = vadd.f32 %v2638, %v2806
      %v2808 = vpop.f32.mrf.mxu0
      %v2809 = vadd.f32 %v2640, %v2808
      %2810 = vmatmul.bf16.gmra.mxu0 %v1938
      %v2811 = vpop.f32.mrf.mxu0
      %v2812 = vadd.f32 %v2643, %v2811
      %v2813 = vpop.f32.mrf.mxu0
      %v2814 = vadd.f32 %v2645, %v2813
      %2815 = vmatmul.bf16.gmra.mxu0 %v1942
      %v2816 = vpop.f32.mrf.mxu0
      %v2817 = vadd.f32 %v2648, %v2816
      %v2818 = vpop.f32.mrf.mxu0
      %v2819 = vadd.f32 %v2650, %v2818
      %2820 = vmatmul.bf16.gmra.mxu0 %v1946
      %v2821 = vpop.f32.mrf.mxu0
      %v2822 = vadd.f32 %v2653, %v2821
      %v2823 = vpop.f32.mrf.mxu0
      %v2824 = vadd.f32 %v2655, %v2823
      %2825 = vmatmul.bf16.gmra.mxu0 %v1950
      %v2826 = vpop.f32.mrf.mxu0
      %v2827 = vadd.f32 %v2658, %v2826
      %v2828 = vpop.f32.mrf.mxu0
      %v2829 = vadd.f32 %v2660, %v2828
      %2830 = vmatmul.bf16.gmra.mxu0 %v1954
      %v2831 = vpop.f32.mrf.mxu0
      %v2832 = vadd.f32 %v2663, %v2831
      %v2833 = vpop.f32.mrf.mxu0
      %v2834 = vadd.f32 %v2665, %v2833
      %2835 = vmatmul.bf16.gmra.mxu0 %v1958
      %v2836 = vpop.f32.mrf.mxu0
      %v2837 = vadd.f32 %v2668, %v2836
      %v2838 = vpop.f32.mrf.mxu0
      %v2839 = vadd.f32 %v2670, %v2838
      %2840 = vmatmul.bf16.gmra.mxu0 %v1962
      %v2841 = vpop.f32.mrf.mxu0
      %v2842 = vadd.f32 %v2673, %v2841
      %v2843 = vpop.f32.mrf.mxu0
      %v2844 = vadd.f32 %v2675, %v2843
      %2845 = vmatmul.bf16.gmra.mxu0 %v1966
      %v2846 = vpop.f32.mrf.mxu0
      %v2847 = vadd.f32 %v2678, %v2846
      %v2848 = vpop.f32.mrf.mxu0
      %v2849 = vadd.f32 %v2680, %v2848
      %2850 = vmatmul.bf16.gmra.mxu0 %v1970
      %v2851 = vpop.f32.mrf.mxu0
      %v2852 = vadd.f32 %v2683, %v2851
      %v2853 = vpop.f32.mrf.mxu0
      %v2854 = vadd.f32 %v2685, %v2853
      %2855 = vmatmul.bf16.gmra.mxu0 %v1974
      %v2856 = vpop.f32.mrf.mxu0
      %v2857 = vadd.f32 %v2688, %v2856
      %v2858 = vpop.f32.mrf.mxu0
      %v2859 = vadd.f32 %v2690, %v2858
      %2860 = vmatmul.bf16.gmra.mxu0 %v1978
      %v2861 = vpop.f32.mrf.mxu0
      %v2862 = vadd.f32 %v2693, %v2861
      %v2863 = vpop.f32.mrf.mxu0
      %v2864 = vadd.f32 %v2695, %v2863
      %2865 = vmatmul.bf16.gmra.mxu0 %v1982
      %v2866 = vpop.f32.mrf.mxu0
      %v2867 = vadd.f32 %v2698, %v2866
      %v2868 = vpop.f32.mrf.mxu0
      %v2869 = vadd.f32 %v2700, %v2868
      %2870 = vmatmul.bf16.gmra.mxu0 %v1986
      %v2871 = vpop.f32.mrf.mxu0
      %v2872 = vadd.f32 %v2703, %v2871
      %v2873 = vpop.f32.mrf.mxu0
      %v2874 = vadd.f32 %v2705, %v2873
      %2875 = vmatmul.bf16.gmra.mxu0 %v1990
      %v2876 = vpop.f32.mrf.mxu0
      %v2877 = vadd.f32 %v2708, %v2876
      %v2878 = vpop.f32.mrf.mxu0
      %v2879 = vadd.f32 %v2710, %v2878
      %2880 = vmatmul.bf16.gmra.mxu0 %v1994
      %v2881 = vpop.f32.mrf.mxu0
      %v2882 = vadd.f32 %v2713, %v2881
      %v2883 = vpop.f32.mrf.mxu0
      %v2884 = vadd.f32 %v2715, %v2883
      %2885 = vmatmul.bf16.gmra.mxu0 %v1998
      %v2886 = vpop.f32.mrf.mxu0
      %v2887 = vadd.f32 %v2718, %v2886
      %v2888 = vpop.f32.mrf.mxu0
      %v2889 = vadd.f32 %v2720, %v2888
      %2890 = vmatmul.bf16.gmra.mxu0 %v2002
      %v2891 = vpop.f32.mrf.mxu0
      %v2892 = vadd.f32 %v2723, %v2891
      %v2893 = vpop.f32.mrf.mxu0
      %v2894 = vadd.f32 %v2725, %v2893
      %2895 = vmatmul.bf16.gmra.mxu0 %v2006
      %v2896 = vpop.f32.mrf.mxu0
      %v2897 = vadd.f32 %v2728, %v2896
      %v2898 = vpop.f32.mrf.mxu0
      %v2899 = vadd.f32 %v2730, %v2898
      %2900 = vmatmul.bf16.gmra.mxu0 %v2010
      %v2901 = vpop.f32.mrf.mxu0
      %v2902 = vadd.f32 %v2733, %v2901
      %v2903 = vpop.f32.mrf.mxu0
      %v2904 = vadd.f32 %v2735, %v2903
      %2905 = vmatmul.bf16.gmra.mxu0 %v2014
      %v2906 = vpop.f32.mrf.mxu0
      %v2907 = vadd.f32 %v2738, %v2906
      %v2908 = vpop.f32.mrf.mxu0
      %v2909 = vadd.f32 %v2740, %v2908
      %2910 = vmatmul.bf16.gmra.mxu0 %v2018
      %v2911 = vpop.f32.mrf.mxu0
      %v2912 = vadd.f32 %v2743, %v2911
      %v2913 = vpop.f32.mrf.mxu0
      %v2914 = vadd.f32 %v2745, %v2913
      %2915 = vmatmul.bf16.gmra.mxu0 %v2022
      %v2916 = vpop.f32.mrf.mxu0
      %v2917 = vadd.f32 %v2748, %v2916
      %v2918 = vpop.f32.mrf.mxu0
      %v2919 = vadd.f32 %v2750, %v2918
      %2920 = vdwg.mxu0
      %2921 = vmatpush.bf16.msra.mxu0 %v2348
      %2922 = vmatpush.bf16.msra.mxu0 %v2346
      %2923 = vmatpush.bf16.msra.mxu0 %v2344
      %2924 = vmatpush.bf16.msra.mxu0 %v2342
      %2925 = vmatpush.bf16.msra.mxu0 %v2340
      %2926 = vmatpush.bf16.msra.mxu0 %v2338
      %2927 = vmatpush.bf16.msra.mxu0 %v2336
      %2928 = vmatpush.bf16.msra.mxu0 %v2334
      %2929 = vmatmul.bf16.gmra.mxu0 %v1899
      %v2930 = vpop.f32.mrf.mxu0
      %v2931 = vadd.f32 %v2762, %v2930
      %v2932 = vpop.f32.mrf.mxu0
      %v2933 = vadd.f32 %v2764, %v2932
      %2934 = vmatmul.bf16.gmra.mxu0 %v1903
      %v2935 = vpop.f32.mrf.mxu0
      %v2936 = vadd.f32 %v2767, %v2935
      %v2937 = vpop.f32.mrf.mxu0
      %v2938 = vadd.f32 %v2769, %v2937
      %2939 = vmatmul.bf16.gmra.mxu0 %v1907
      %v2940 = vpop.f32.mrf.mxu0
      %v2941 = vadd.f32 %v2772, %v2940
      %v2942 = vpop.f32.mrf.mxu0
      %v2943 = vadd.f32 %v2774, %v2942
      %2944 = vmatmul.bf16.gmra.mxu0 %v1911
      %v2945 = vpop.f32.mrf.mxu0
      %v2946 = vadd.f32 %v2777, %v2945
      %v2947 = vpop.f32.mrf.mxu0
      %v2948 = vadd.f32 %v2779, %v2947
      %2949 = vmatmul.bf16.gmra.mxu0 %v1915
      %v2950 = vpop.f32.mrf.mxu0
      %v2951 = vadd.f32 %v2782, %v2950
      %v2952 = vpop.f32.mrf.mxu0
      %v2953 = vadd.f32 %v2784, %v2952
      %2954 = vmatmul.bf16.gmra.mxu0 %v1919
      %v2955 = vpop.f32.mrf.mxu0
      %v2956 = vadd.f32 %v2787, %v2955
      %v2957 = vpop.f32.mrf.mxu0
      %v2958 = vadd.f32 %v2789, %v2957
      %2959 = vmatmul.bf16.gmra.mxu0 %v1923
      %v2960 = vpop.f32.mrf.mxu0
      %v2961 = vadd.f32 %v2792, %v2960
      %v2962 = vpop.f32.mrf.mxu0
      %v2963 = vadd.f32 %v2794, %v2962
      %2964 = vmatmul.bf16.gmra.mxu0 %v1927
      %v2965 = vpop.f32.mrf.mxu0
      %v2966 = vadd.f32 %v2797, %v2965
      %v2967 = vpop.f32.mrf.mxu0
      %v2968 = vadd.f32 %v2799, %v2967
      %2969 = vmatmul.bf16.gmra.mxu0 %v1931
      %v2970 = vpop.f32.mrf.mxu0
      %v2971 = vadd.f32 %v2802, %v2970
      %v2972 = vpop.f32.mrf.mxu0
      %v2973 = vadd.f32 %v2804, %v2972
      %2974 = vmatmul.bf16.gmra.mxu0 %v1935
      %v2975 = vpop.f32.mrf.mxu0
      %v2976 = vadd.f32 %v2807, %v2975
      %v2977 = vpop.f32.mrf.mxu0
      %v2978 = vadd.f32 %v2809, %v2977
      %2979 = vmatmul.bf16.gmra.mxu0 %v1939
      %v2980 = vpop.f32.mrf.mxu0
      %v2981 = vadd.f32 %v2812, %v2980
      %v2982 = vpop.f32.mrf.mxu0
      %v2983 = vadd.f32 %v2814, %v2982
      %2984 = vmatmul.bf16.gmra.mxu0 %v1943
      %v2985 = vpop.f32.mrf.mxu0
      %v2986 = vadd.f32 %v2817, %v2985
      %v2987 = vpop.f32.mrf.mxu0
      %v2988 = vadd.f32 %v2819, %v2987
      %2989 = vmatmul.bf16.gmra.mxu0 %v1947
      %v2990 = vpop.f32.mrf.mxu0
      %v2991 = vadd.f32 %v2822, %v2990
      %v2992 = vpop.f32.mrf.mxu0
      %v2993 = vadd.f32 %v2824, %v2992
      %2994 = vmatmul.bf16.gmra.mxu0 %v1951
      %v2995 = vpop.f32.mrf.mxu0
      %v2996 = vadd.f32 %v2827, %v2995
      %v2997 = vpop.f32.mrf.mxu0
      %v2998 = vadd.f32 %v2829, %v2997
      %2999 = vmatmul.bf16.gmra.mxu0 %v1955
      %v3000 = vpop.f32.mrf.mxu0
      %v3001 = vadd.f32 %v2832, %v3000
      %v3002 = vpop.f32.mrf.mxu0
      %v3003 = vadd.f32 %v2834, %v3002
      %3004 = vmatmul.bf16.gmra.mxu0 %v1959
      %v3005 = vpop.f32.mrf.mxu0
      %v3006 = vadd.f32 %v2837, %v3005
      %v3007 = vpop.f32.mrf.mxu0
      %v3008 = vadd.f32 %v2839, %v3007
      %3009 = vmatmul.bf16.gmra.mxu0 %v1963
      %v3010 = vpop.f32.mrf.mxu0
      %v3011 = vadd.f32 %v2842, %v3010
      %v3012 = vpop.f32.mrf.mxu0
      %v3013 = vadd.f32 %v2844, %v3012
      %3014 = vmatmul.bf16.gmra.mxu0 %v1967
      %v3015 = vpop.f32.mrf.mxu0
      %v3016 = vadd.f32 %v2847, %v3015
      %v3017 = vpop.f32.mrf.mxu0
      %v3018 = vadd.f32 %v2849, %v3017
      %3019 = vmatmul.bf16.gmra.mxu0 %v1971
      %v3020 = vpop.f32.mrf.mxu0
      %v3021 = vadd.f32 %v2852, %v3020
      %v3022 = vpop.f32.mrf.mxu0
      %v3023 = vadd.f32 %v2854, %v3022
      %3024 = vmatmul.bf16.gmra.mxu0 %v1975
      %v3025 = vpop.f32.mrf.mxu0
      %v3026 = vadd.f32 %v2857, %v3025
      %v3027 = vpop.f32.mrf.mxu0
      %v3028 = vadd.f32 %v2859, %v3027
      %3029 = vmatmul.bf16.gmra.mxu0 %v1979
      %v3030 = vpop.f32.mrf.mxu0
      %v3031 = vadd.f32 %v2862, %v3030
      %v3032 = vpop.f32.mrf.mxu0
      %v3033 = vadd.f32 %v2864, %v3032
      %3034 = vmatmul.bf16.gmra.mxu0 %v1983
      %v3035 = vpop.f32.mrf.mxu0
      %v3036 = vadd.f32 %v2867, %v3035
      %v3037 = vpop.f32.mrf.mxu0
      %v3038 = vadd.f32 %v2869, %v3037
      %3039 = vmatmul.bf16.gmra.mxu0 %v1987
      %v3040 = vpop.f32.mrf.mxu0
      %v3041 = vadd.f32 %v2872, %v3040
      %v3042 = vpop.f32.mrf.mxu0
      %v3043 = vadd.f32 %v2874, %v3042
      %3044 = vmatmul.bf16.gmra.mxu0 %v1991
      %v3045 = vpop.f32.mrf.mxu0
      %v3046 = vadd.f32 %v2877, %v3045
      %v3047 = vpop.f32.mrf.mxu0
      %v3048 = vadd.f32 %v2879, %v3047
      %3049 = vmatmul.bf16.gmra.mxu0 %v1995
      %v3050 = vpop.f32.mrf.mxu0
      %v3051 = vadd.f32 %v2882, %v3050
      %v3052 = vpop.f32.mrf.mxu0
      %v3053 = vadd.f32 %v2884, %v3052
      %3054 = vmatmul.bf16.gmra.mxu0 %v1999
      %v3055 = vpop.f32.mrf.mxu0
      %v3056 = vadd.f32 %v2887, %v3055
      %v3057 = vpop.f32.mrf.mxu0
      %v3058 = vadd.f32 %v2889, %v3057
      %3059 = vmatmul.bf16.gmra.mxu0 %v2003
      %v3060 = vpop.f32.mrf.mxu0
      %v3061 = vadd.f32 %v2892, %v3060
      %v3062 = vpop.f32.mrf.mxu0
      %v3063 = vadd.f32 %v2894, %v3062
      %3064 = vmatmul.bf16.gmra.mxu0 %v2007
      %v3065 = vpop.f32.mrf.mxu0
      %v3066 = vadd.f32 %v2897, %v3065
      %v3067 = vpop.f32.mrf.mxu0
      %v3068 = vadd.f32 %v2899, %v3067
      %3069 = vmatmul.bf16.gmra.mxu0 %v2011
      %v3070 = vpop.f32.mrf.mxu0
      %v3071 = vadd.f32 %v2902, %v3070
      %v3072 = vpop.f32.mrf.mxu0
      %v3073 = vadd.f32 %v2904, %v3072
      %3074 = vmatmul.bf16.gmra.mxu0 %v2015
      %v3075 = vpop.f32.mrf.mxu0
      %v3076 = vadd.f32 %v2907, %v3075
      %v3077 = vpop.f32.mrf.mxu0
      %v3078 = vadd.f32 %v2909, %v3077
      %3079 = vmatmul.bf16.gmra.mxu0 %v2019
      %v3080 = vpop.f32.mrf.mxu0
      %v3081 = vadd.f32 %v2912, %v3080
      %v3082 = vpop.f32.mrf.mxu0
      %v3083 = vadd.f32 %v2914, %v3082
      %3084 = vmatmul.bf16.gmra.mxu0 %v2023
      %v3085 = vpop.f32.mrf.mxu0
      %v3086 = vadd.f32 %v2917, %v3085
      %v3087 = vpop.f32.mrf.mxu0
      %v3088 = vadd.f32 %v2919, %v3087
      %3089 = vdwg.mxu0
      %3090 = vmatpush.bf16.msra.mxu0 %v2301
      %3091 = vmatpush.bf16.msra.mxu0 %v2299
      %3092 = vmatpush.bf16.msra.mxu0 %v2297
      %3093 = vmatpush.bf16.msra.mxu0 %v2295
      %3094 = vmatpush.bf16.msra.mxu0 %v2293
      %3095 = vmatpush.bf16.msra.mxu0 %v2291
      %3096 = vmatpush.bf16.msra.mxu0 %v2289
      %3097 = vmatpush.bf16.msra.mxu0 %v2287
      %3098 = vmatmul.bf16.gmra.mxu0 %v1896
      %v3099 = vpop.f32.mrf.mxu0
      %v3100 = vadd.f32 %v2091, %v3099
      %v3101 = vpop.f32.mrf.mxu0
      %v3102 = vadd.f32 %v2091, %v3101
      %3103 = vmatmul.bf16.gmra.mxu0 %v1900
      %v3104 = vpop.f32.mrf.mxu0
      %v3105 = vadd.f32 %v2091, %v3104
      %v3106 = vpop.f32.mrf.mxu0
      %v3107 = vadd.f32 %v2091, %v3106
      %3108 = vmatmul.bf16.gmra.mxu0 %v1904
      %v3109 = vpop.f32.mrf.mxu0
      %v3110 = vadd.f32 %v2091, %v3109
      %v3111 = vpop.f32.mrf.mxu0
      %v3112 = vadd.f32 %v2091, %v3111
      %3113 = vmatmul.bf16.gmra.mxu0 %v1908
      %v3114 = vpop.f32.mrf.mxu0
      %v3115 = vadd.f32 %v2091, %v3114
      %v3116 = vpop.f32.mrf.mxu0
      %v3117 = vadd.f32 %v2091, %v3116
      %3118 = vmatmul.bf16.gmra.mxu0 %v1912
      %v3119 = vpop.f32.mrf.mxu0
      %v3120 = vadd.f32 %v2091, %v3119
      %v3121 = vpop.f32.mrf.mxu0
      %v3122 = vadd.f32 %v2091, %v3121
      %3123 = vmatmul.bf16.gmra.mxu0 %v1916
      %v3124 = vpop.f32.mrf.mxu0
      %v3125 = vadd.f32 %v2091, %v3124
      %v3126 = vpop.f32.mrf.mxu0
      %v3127 = vadd.f32 %v2091, %v3126
      %3128 = vmatmul.bf16.gmra.mxu0 %v1920
      %v3129 = vpop.f32.mrf.mxu0
      %v3130 = vadd.f32 %v2091, %v3129
      %v3131 = vpop.f32.mrf.mxu0
      %v3132 = vadd.f32 %v2091, %v3131
      %3133 = vmatmul.bf16.gmra.mxu0 %v1924
      %v3134 = vpop.f32.mrf.mxu0
      %v3135 = vadd.f32 %v2091, %v3134
      %v3136 = vpop.f32.mrf.mxu0
      %v3137 = vadd.f32 %v2091, %v3136
      %3138 = vmatmul.bf16.gmra.mxu0 %v1928
      %v3139 = vpop.f32.mrf.mxu0
      %v3140 = vadd.f32 %v2091, %v3139
      %v3141 = vpop.f32.mrf.mxu0
      %v3142 = vadd.f32 %v2091, %v3141
      %3143 = vmatmul.bf16.gmra.mxu0 %v1932
      %v3144 = vpop.f32.mrf.mxu0
      %v3145 = vadd.f32 %v2091, %v3144
      %v3146 = vpop.f32.mrf.mxu0
      %v3147 = vadd.f32 %v2091, %v3146
      %3148 = vmatmul.bf16.gmra.mxu0 %v1936
      %v3149 = vpop.f32.mrf.mxu0
      %v3150 = vadd.f32 %v2091, %v3149
      %v3151 = vpop.f32.mrf.mxu0
      %v3152 = vadd.f32 %v2091, %v3151
      %3153 = vmatmul.bf16.gmra.mxu0 %v1940
      %v3154 = vpop.f32.mrf.mxu0
      %v3155 = vadd.f32 %v2091, %v3154
      %v3156 = vpop.f32.mrf.mxu0
      %v3157 = vadd.f32 %v2091, %v3156
      %3158 = vmatmul.bf16.gmra.mxu0 %v1944
      %v3159 = vpop.f32.mrf.mxu0
      %v3160 = vadd.f32 %v2091, %v3159
      %v3161 = vpop.f32.mrf.mxu0
      %v3162 = vadd.f32 %v2091, %v3161
      %3163 = vmatmul.bf16.gmra.mxu0 %v1948
      %v3164 = vpop.f32.mrf.mxu0
      %v3165 = vadd.f32 %v2091, %v3164
      %v3166 = vpop.f32.mrf.mxu0
      %v3167 = vadd.f32 %v2091, %v3166
      %3168 = vmatmul.bf16.gmra.mxu0 %v1952
      %v3169 = vpop.f32.mrf.mxu0
      %v3170 = vadd.f32 %v2091, %v3169
      %v3171 = vpop.f32.mrf.mxu0
      %v3172 = vadd.f32 %v2091, %v3171
      %3173 = vmatmul.bf16.gmra.mxu0 %v1956
      %v3174 = vpop.f32.mrf.mxu0
      %v3175 = vadd.f32 %v2091, %v3174
      %v3176 = vpop.f32.mrf.mxu0
      %v3177 = vadd.f32 %v2091, %v3176
      %3178 = vmatmul.bf16.gmra.mxu0 %v1960
      %v3179 = vpop.f32.mrf.mxu0
      %v3180 = vadd.f32 %v2091, %v3179
      %v3181 = vpop.f32.mrf.mxu0
      %v3182 = vadd.f32 %v2091, %v3181
      %3183 = vmatmul.bf16.gmra.mxu0 %v1964
      %v3184 = vpop.f32.mrf.mxu0
      %v3185 = vadd.f32 %v2091, %v3184
      %v3186 = vpop.f32.mrf.mxu0
      %v3187 = vadd.f32 %v2091, %v3186
      %3188 = vmatmul.bf16.gmra.mxu0 %v1968
      %v3189 = vpop.f32.mrf.mxu0
      %v3190 = vadd.f32 %v2091, %v3189
      %v3191 = vpop.f32.mrf.mxu0
      %v3192 = vadd.f32 %v2091, %v3191
      %3193 = vmatmul.bf16.gmra.mxu0 %v1972
      %v3194 = vpop.f32.mrf.mxu0
      %v3195 = vadd.f32 %v2091, %v3194
      %v3196 = vpop.f32.mrf.mxu0
      %v3197 = vadd.f32 %v2091, %v3196
      %3198 = vmatmul.bf16.gmra.mxu0 %v1976
      %v3199 = vpop.f32.mrf.mxu0
      %v3200 = vadd.f32 %v2091, %v3199
      %v3201 = vpop.f32.mrf.mxu0
      %v3202 = vadd.f32 %v2091, %v3201
      %3203 = vmatmul.bf16.gmra.mxu0 %v1980
      %v3204 = vpop.f32.mrf.mxu0
      %v3205 = vadd.f32 %v2091, %v3204
      %v3206 = vpop.f32.mrf.mxu0
      %v3207 = vadd.f32 %v2091, %v3206
      %3208 = vmatmul.bf16.gmra.mxu0 %v1984
      %v3209 = vpop.f32.mrf.mxu0
      %v3210 = vadd.f32 %v2091, %v3209
      %v3211 = vpop.f32.mrf.mxu0
      %v3212 = vadd.f32 %v2091, %v3211
      %3213 = vmatmul.bf16.gmra.mxu0 %v1988
      %v3214 = vpop.f32.mrf.mxu0
      %v3215 = vadd.f32 %v2091, %v3214
      %v3216 = vpop.f32.mrf.mxu0
      %v3217 = vadd.f32 %v2091, %v3216
      %3218 = vmatmul.bf16.gmra.mxu0 %v1992
      %v3219 = vpop.f32.mrf.mxu0
      %v3220 = vadd.f32 %v2091, %v3219
      %v3221 = vpop.f32.mrf.mxu0
      %v3222 = vadd.f32 %v2091, %v3221
      %3223 = vmatmul.bf16.gmra.mxu0 %v1996
      %v3224 = vpop.f32.mrf.mxu0
      %v3225 = vadd.f32 %v2091, %v3224
      %v3226 = vpop.f32.mrf.mxu0
      %v3227 = vadd.f32 %v2091, %v3226
      %3228 = vmatmul.bf16.gmra.mxu0 %v2000
      %v3229 = vpop.f32.mrf.mxu0
      %v3230 = vadd.f32 %v2091, %v3229
      %v3231 = vpop.f32.mrf.mxu0
      %v3232 = vadd.f32 %v2091, %v3231
      %3233 = vmatmul.bf16.gmra.mxu0 %v2004
      %v3234 = vpop.f32.mrf.mxu0
      %v3235 = vadd.f32 %v2091, %v3234
      %v3236 = vpop.f32.mrf.mxu0
      %v3237 = vadd.f32 %v2091, %v3236
      %3238 = vmatmul.bf16.gmra.mxu0 %v2008
      %v3239 = vpop.f32.mrf.mxu0
      %v3240 = vadd.f32 %v2091, %v3239
      %v3241 = vpop.f32.mrf.mxu0
      %v3242 = vadd.f32 %v2091, %v3241
      %3243 = vmatmul.bf16.gmra.mxu0 %v2012
      %v3244 = vpop.f32.mrf.mxu0
      %v3245 = vadd.f32 %v2091, %v3244
      %v3246 = vpop.f32.mrf.mxu0
      %v3247 = vadd.f32 %v2091, %v3246
      %3248 = vmatmul.bf16.gmra.mxu0 %v2016
      %v3249 = vpop.f32.mrf.mxu0
      %v3250 = vadd.f32 %v2091, %v3249
      %v3251 = vpop.f32.mrf.mxu0
      %v3252 = vadd.f32 %v2091, %v3251
      %3253 = vmatmul.bf16.gmra.mxu0 %v2020
      %v3254 = vpop.f32.mrf.mxu0
      %v3255 = vadd.f32 %v2091, %v3254
      %v3256 = vpop.f32.mrf.mxu0
      %v3257 = vadd.f32 %v2091, %v3256
      %3258 = vdwg.mxu0
      %3259 = vmatpush.bf16.msra.mxu0 %v2317
      %3260 = vmatpush.bf16.msra.mxu0 %v2315
      %3261 = vmatpush.bf16.msra.mxu0 %v2313
      %3262 = vmatpush.bf16.msra.mxu0 %v2311
      %3263 = vmatpush.bf16.msra.mxu0 %v2309
      %3264 = vmatpush.bf16.msra.mxu0 %v2307
      %3265 = vmatpush.bf16.msra.mxu0 %v2305
      %3266 = vmatpush.bf16.msra.mxu0 %v2303
      %3267 = vmatmul.bf16.gmra.mxu0 %v1897
      %v3268 = vpop.f32.mrf.mxu0
      %v3269 = vadd.f32 %v3100, %v3268
      %v3270 = vpop.f32.mrf.mxu0
      %v3271 = vadd.f32 %v3102, %v3270
      %3272 = vmatmul.bf16.gmra.mxu0 %v1901
      %v3273 = vpop.f32.mrf.mxu0
      %v3274 = vadd.f32 %v3105, %v3273
      %v3275 = vpop.f32.mrf.mxu0
      %v3276 = vadd.f32 %v3107, %v3275
      %3277 = vmatmul.bf16.gmra.mxu0 %v1905
      %v3278 = vpop.f32.mrf.mxu0
      %v3279 = vadd.f32 %v3110, %v3278
      %v3280 = vpop.f32.mrf.mxu0
      %v3281 = vadd.f32 %v3112, %v3280
      %3282 = vmatmul.bf16.gmra.mxu0 %v1909
      %v3283 = vpop.f32.mrf.mxu0
      %v3284 = vadd.f32 %v3115, %v3283
      %v3285 = vpop.f32.mrf.mxu0
      %v3286 = vadd.f32 %v3117, %v3285
      %3287 = vmatmul.bf16.gmra.mxu0 %v1913
      %v3288 = vpop.f32.mrf.mxu0
      %v3289 = vadd.f32 %v3120, %v3288
      %v3290 = vpop.f32.mrf.mxu0
      %v3291 = vadd.f32 %v3122, %v3290
      %3292 = vmatmul.bf16.gmra.mxu0 %v1917
      %v3293 = vpop.f32.mrf.mxu0
      %v3294 = vadd.f32 %v3125, %v3293
      %v3295 = vpop.f32.mrf.mxu0
      %v3296 = vadd.f32 %v3127, %v3295
      %3297 = vmatmul.bf16.gmra.mxu0 %v1921
      %v3298 = vpop.f32.mrf.mxu0
      %v3299 = vadd.f32 %v3130, %v3298
      %v3300 = vpop.f32.mrf.mxu0
      %v3301 = vadd.f32 %v3132, %v3300
      %3302 = vmatmul.bf16.gmra.mxu0 %v1925
      %v3303 = vpop.f32.mrf.mxu0
      %v3304 = vadd.f32 %v3135, %v3303
      %v3305 = vpop.f32.mrf.mxu0
      %v3306 = vadd.f32 %v3137, %v3305
      %3307 = vmatmul.bf16.gmra.mxu0 %v1929
      %v3308 = vpop.f32.mrf.mxu0
      %v3309 = vadd.f32 %v3140, %v3308
      %v3310 = vpop.f32.mrf.mxu0
      %v3311 = vadd.f32 %v3142, %v3310
      %3312 = vmatmul.bf16.gmra.mxu0 %v1933
      %v3313 = vpop.f32.mrf.mxu0
      %v3314 = vadd.f32 %v3145, %v3313
      %v3315 = vpop.f32.mrf.mxu0
      %v3316 = vadd.f32 %v3147, %v3315
      %3317 = vmatmul.bf16.gmra.mxu0 %v1937
      %v3318 = vpop.f32.mrf.mxu0
      %v3319 = vadd.f32 %v3150, %v3318
      %v3320 = vpop.f32.mrf.mxu0
      %v3321 = vadd.f32 %v3152, %v3320
      %3322 = vmatmul.bf16.gmra.mxu0 %v1941
      %v3323 = vpop.f32.mrf.mxu0
      %v3324 = vadd.f32 %v3155, %v3323
      %v3325 = vpop.f32.mrf.mxu0
      %v3326 = vadd.f32 %v3157, %v3325
      %3327 = vmatmul.bf16.gmra.mxu0 %v1945
      %v3328 = vpop.f32.mrf.mxu0
      %v3329 = vadd.f32 %v3160, %v3328
      %v3330 = vpop.f32.mrf.mxu0
      %v3331 = vadd.f32 %v3162, %v3330
      %3332 = vmatmul.bf16.gmra.mxu0 %v1949
      %v3333 = vpop.f32.mrf.mxu0
      %v3334 = vadd.f32 %v3165, %v3333
      %v3335 = vpop.f32.mrf.mxu0
      %v3336 = vadd.f32 %v3167, %v3335
      %3337 = vmatmul.bf16.gmra.mxu0 %v1953
      %v3338 = vpop.f32.mrf.mxu0
      %v3339 = vadd.f32 %v3170, %v3338
      %v3340 = vpop.f32.mrf.mxu0
      %v3341 = vadd.f32 %v3172, %v3340
      %3342 = vmatmul.bf16.gmra.mxu0 %v1957
      %v3343 = vpop.f32.mrf.mxu0
      %v3344 = vadd.f32 %v3175, %v3343
      %v3345 = vpop.f32.mrf.mxu0
      %v3346 = vadd.f32 %v3177, %v3345
      %3347 = vmatmul.bf16.gmra.mxu0 %v1961
      %v3348 = vpop.f32.mrf.mxu0
      %v3349 = vadd.f32 %v3180, %v3348
      %v3350 = vpop.f32.mrf.mxu0
      %v3351 = vadd.f32 %v3182, %v3350
      %3352 = vmatmul.bf16.gmra.mxu0 %v1965
      %v3353 = vpop.f32.mrf.mxu0
      %v3354 = vadd.f32 %v3185, %v3353
      %v3355 = vpop.f32.mrf.mxu0
      %v3356 = vadd.f32 %v3187, %v3355
      %3357 = vmatmul.bf16.gmra.mxu0 %v1969
      %v3358 = vpop.f32.mrf.mxu0
      %v3359 = vadd.f32 %v3190, %v3358
      %v3360 = vpop.f32.mrf.mxu0
      %v3361 = vadd.f32 %v3192, %v3360
      %3362 = vmatmul.bf16.gmra.mxu0 %v1973
      %v3363 = vpop.f32.mrf.mxu0
      %v3364 = vadd.f32 %v3195, %v3363
      %v3365 = vpop.f32.mrf.mxu0
      %v3366 = vadd.f32 %v3197, %v3365
      %3367 = vmatmul.bf16.gmra.mxu0 %v1977
      %v3368 = vpop.f32.mrf.mxu0
      %v3369 = vadd.f32 %v3200, %v3368
      %v3370 = vpop.f32.mrf.mxu0
      %v3371 = vadd.f32 %v3202, %v3370
      %3372 = vmatmul.bf16.gmra.mxu0 %v1981
      %v3373 = vpop.f32.mrf.mxu0
      %v3374 = vadd.f32 %v3205, %v3373
      %v3375 = vpop.f32.mrf.mxu0
      %v3376 = vadd.f32 %v3207, %v3375
      %3377 = vmatmul.bf16.gmra.mxu0 %v1985
      %v3378 = vpop.f32.mrf.mxu0
      %v3379 = vadd.f32 %v3210, %v3378
      %v3380 = vpop.f32.mrf.mxu0
      %v3381 = vadd.f32 %v3212, %v3380
      %3382 = vmatmul.bf16.gmra.mxu0 %v1989
      %v3383 = vpop.f32.mrf.mxu0
      %v3384 = vadd.f32 %v3215, %v3383
      %v3385 = vpop.f32.mrf.mxu0
      %v3386 = vadd.f32 %v3217, %v3385
      %3387 = vmatmul.bf16.gmra.mxu0 %v1993
      %v3388 = vpop.f32.mrf.mxu0
      %v3389 = vadd.f32 %v3220, %v3388
      %v3390 = vpop.f32.mrf.mxu0
      %v3391 = vadd.f32 %v3222, %v3390
      %3392 = vmatmul.bf16.gmra.mxu0 %v1997
      %v3393 = vpop.f32.mrf.mxu0
      %v3394 = vadd.f32 %v3225, %v3393
      %v3395 = vpop.f32.mrf.mxu0
      %v3396 = vadd.f32 %v3227, %v3395
      %3397 = vmatmul.bf16.gmra.mxu0 %v2001
      %v3398 = vpop.f32.mrf.mxu0
      %v3399 = vadd.f32 %v3230, %v3398
      %v3400 = vpop.f32.mrf.mxu0
      %v3401 = vadd.f32 %v3232, %v3400
      %3402 = vmatmul.bf16.gmra.mxu0 %v2005
      %v3403 = vpop.f32.mrf.mxu0
      %v3404 = vadd.f32 %v3235, %v3403
      %v3405 = vpop.f32.mrf.mxu0
      %v3406 = vadd.f32 %v3237, %v3405
      %3407 = vmatmul.bf16.gmra.mxu0 %v2009
      %v3408 = vpop.f32.mrf.mxu0
      %v3409 = vadd.f32 %v3240, %v3408
      %v3410 = vpop.f32.mrf.mxu0
      %v3411 = vadd.f32 %v3242, %v3410
      %3412 = vmatmul.bf16.gmra.mxu0 %v2013
      %v3413 = vpop.f32.mrf.mxu0
      %v3414 = vadd.f32 %v3245, %v3413
      %v3415 = vpop.f32.mrf.mxu0
      %v3416 = vadd.f32 %v3247, %v3415
      %3417 = vmatmul.bf16.gmra.mxu0 %v2017
      %v3418 = vpop.f32.mrf.mxu0
      %v3419 = vadd.f32 %v3250, %v3418
      %v3420 = vpop.f32.mrf.mxu0
      %v3421 = vadd.f32 %v3252, %v3420
      %3422 = vmatmul.bf16.gmra.mxu0 %v2021
      %v3423 = vpop.f32.mrf.mxu0
      %v3424 = vadd.f32 %v3255, %v3423
      %v3425 = vpop.f32.mrf.mxu0
      %v3426 = vadd.f32 %v3257, %v3425
      %3427 = vdwg.mxu0
      %3428 = vmatpush.bf16.msra.mxu0 %v2333
      %3429 = vmatpush.bf16.msra.mxu0 %v2331
      %3430 = vmatpush.bf16.msra.mxu0 %v2329
      %3431 = vmatpush.bf16.msra.mxu0 %v2327
      %3432 = vmatpush.bf16.msra.mxu0 %v2325
      %3433 = vmatpush.bf16.msra.mxu0 %v2323
      %3434 = vmatpush.bf16.msra.mxu0 %v2321
      %3435 = vmatpush.bf16.msra.mxu0 %v2319
      %3436 = vmatmul.bf16.gmra.mxu0 %v1898
      %v3437 = vpop.f32.mrf.mxu0
      %v3438 = vadd.f32 %v3269, %v3437
      %v3439 = vpop.f32.mrf.mxu0
      %v3440 = vadd.f32 %v3271, %v3439
      %3441 = vmatmul.bf16.gmra.mxu0 %v1902
      %v3442 = vpop.f32.mrf.mxu0
      %v3443 = vadd.f32 %v3274, %v3442
      %v3444 = vpop.f32.mrf.mxu0
      %v3445 = vadd.f32 %v3276, %v3444
      %3446 = vmatmul.bf16.gmra.mxu0 %v1906
      %v3447 = vpop.f32.mrf.mxu0
      %v3448 = vadd.f32 %v3279, %v3447
      %v3449 = vpop.f32.mrf.mxu0
      %v3450 = vadd.f32 %v3281, %v3449
      %3451 = vmatmul.bf16.gmra.mxu0 %v1910
      %v3452 = vpop.f32.mrf.mxu0
      %v3453 = vadd.f32 %v3284, %v3452
      %v3454 = vpop.f32.mrf.mxu0
      %v3455 = vadd.f32 %v3286, %v3454
      %3456 = vmatmul.bf16.gmra.mxu0 %v1914
      %v3457 = vpop.f32.mrf.mxu0
      %v3458 = vadd.f32 %v3289, %v3457
      %v3459 = vpop.f32.mrf.mxu0
      %v3460 = vadd.f32 %v3291, %v3459
      %3461 = vmatmul.bf16.gmra.mxu0 %v1918
      %v3462 = vpop.f32.mrf.mxu0
      %v3463 = vadd.f32 %v3294, %v3462
      %v3464 = vpop.f32.mrf.mxu0
      %v3465 = vadd.f32 %v3296, %v3464
      %3466 = vmatmul.bf16.gmra.mxu0 %v1922
      %v3467 = vpop.f32.mrf.mxu0
      %v3468 = vadd.f32 %v3299, %v3467
      %v3469 = vpop.f32.mrf.mxu0
      %v3470 = vadd.f32 %v3301, %v3469
      %3471 = vmatmul.bf16.gmra.mxu0 %v1926
      %v3472 = vpop.f32.mrf.mxu0
      %v3473 = vadd.f32 %v3304, %v3472
      %v3474 = vpop.f32.mrf.mxu0
      %v3475 = vadd.f32 %v3306, %v3474
      %3476 = vmatmul.bf16.gmra.mxu0 %v1930
      %v3477 = vpop.f32.mrf.mxu0
      %v3478 = vadd.f32 %v3309, %v3477
      %v3479 = vpop.f32.mrf.mxu0
      %v3480 = vadd.f32 %v3311, %v3479
      %3481 = vmatmul.bf16.gmra.mxu0 %v1934
      %v3482 = vpop.f32.mrf.mxu0
      %v3483 = vadd.f32 %v3314, %v3482
      %v3484 = vpop.f32.mrf.mxu0
      %v3485 = vadd.f32 %v3316, %v3484
      %3486 = vmatmul.bf16.gmra.mxu0 %v1938
      %v3487 = vpop.f32.mrf.mxu0
      %v3488 = vadd.f32 %v3319, %v3487
      %v3489 = vpop.f32.mrf.mxu0
      %v3490 = vadd.f32 %v3321, %v3489
      %3491 = vmatmul.bf16.gmra.mxu0 %v1942
      %v3492 = vpop.f32.mrf.mxu0
      %v3493 = vadd.f32 %v3324, %v3492
      %v3494 = vpop.f32.mrf.mxu0
      %v3495 = vadd.f32 %v3326, %v3494
      %3496 = vmatmul.bf16.gmra.mxu0 %v1946
      %v3497 = vpop.f32.mrf.mxu0
      %v3498 = vadd.f32 %v3329, %v3497
      %v3499 = vpop.f32.mrf.mxu0
      %v3500 = vadd.f32 %v3331, %v3499
      %3501 = vmatmul.bf16.gmra.mxu0 %v1950
      %v3502 = vpop.f32.mrf.mxu0
      %v3503 = vadd.f32 %v3334, %v3502
      %v3504 = vpop.f32.mrf.mxu0
      %v3505 = vadd.f32 %v3336, %v3504
      %3506 = vmatmul.bf16.gmra.mxu0 %v1954
      %v3507 = vpop.f32.mrf.mxu0
      %v3508 = vadd.f32 %v3339, %v3507
      %v3509 = vpop.f32.mrf.mxu0
      %v3510 = vadd.f32 %v3341, %v3509
      %3511 = vmatmul.bf16.gmra.mxu0 %v1958
      %v3512 = vpop.f32.mrf.mxu0
      %v3513 = vadd.f32 %v3344, %v3512
      %v3514 = vpop.f32.mrf.mxu0
      %v3515 = vadd.f32 %v3346, %v3514
      %3516 = vmatmul.bf16.gmra.mxu0 %v1962
      %v3517 = vpop.f32.mrf.mxu0
      %v3518 = vadd.f32 %v3349, %v3517
      %v3519 = vpop.f32.mrf.mxu0
      %v3520 = vadd.f32 %v3351, %v3519
      %3521 = vmatmul.bf16.gmra.mxu0 %v1966
      %v3522 = vpop.f32.mrf.mxu0
      %v3523 = vadd.f32 %v3354, %v3522
      %v3524 = vpop.f32.mrf.mxu0
      %v3525 = vadd.f32 %v3356, %v3524
      %3526 = vmatmul.bf16.gmra.mxu0 %v1970
      %v3527 = vpop.f32.mrf.mxu0
      %v3528 = vadd.f32 %v3359, %v3527
      %v3529 = vpop.f32.mrf.mxu0
      %v3530 = vadd.f32 %v3361, %v3529
      %3531 = vmatmul.bf16.gmra.mxu0 %v1974
      %v3532 = vpop.f32.mrf.mxu0
      %v3533 = vadd.f32 %v3364, %v3532
      %v3534 = vpop.f32.mrf.mxu0
      %v3535 = vadd.f32 %v3366, %v3534
      %3536 = vmatmul.bf16.gmra.mxu0 %v1978
      %v3537 = vpop.f32.mrf.mxu0
      %v3538 = vadd.f32 %v3369, %v3537
      %v3539 = vpop.f32.mrf.mxu0
      %v3540 = vadd.f32 %v3371, %v3539
      %3541 = vmatmul.bf16.gmra.mxu0 %v1982
      %v3542 = vpop.f32.mrf.mxu0
      %v3543 = vadd.f32 %v3374, %v3542
      %v3544 = vpop.f32.mrf.mxu0
      %v3545 = vadd.f32 %v3376, %v3544
      %3546 = vmatmul.bf16.gmra.mxu0 %v1986
      %v3547 = vpop.f32.mrf.mxu0
      %v3548 = vadd.f32 %v3379, %v3547
      %v3549 = vpop.f32.mrf.mxu0
      %v3550 = vadd.f32 %v3381, %v3549
      %3551 = vmatmul.bf16.gmra.mxu0 %v1990
      %v3552 = vpop.f32.mrf.mxu0
      %v3553 = vadd.f32 %v3384, %v3552
      %v3554 = vpop.f32.mrf.mxu0
      %v3555 = vadd.f32 %v3386, %v3554
      %3556 = vmatmul.bf16.gmra.mxu0 %v1994
      %v3557 = vpop.f32.mrf.mxu0
      %v3558 = vadd.f32 %v3389, %v3557
      %v3559 = vpop.f32.mrf.mxu0
      %v3560 = vadd.f32 %v3391, %v3559
      %3561 = vmatmul.bf16.gmra.mxu0 %v1998
      %v3562 = vpop.f32.mrf.mxu0
      %v3563 = vadd.f32 %v3394, %v3562
      %v3564 = vpop.f32.mrf.mxu0
      %v3565 = vadd.f32 %v3396, %v3564
      %3566 = vmatmul.bf16.gmra.mxu0 %v2002
      %v3567 = vpop.f32.mrf.mxu0
      %v3568 = vadd.f32 %v3399, %v3567
      %v3569 = vpop.f32.mrf.mxu0
      %v3570 = vadd.f32 %v3401, %v3569
      %3571 = vmatmul.bf16.gmra.mxu0 %v2006
      %v3572 = vpop.f32.mrf.mxu0
      %v3573 = vadd.f32 %v3404, %v3572
      %v3574 = vpop.f32.mrf.mxu0
      %v3575 = vadd.f32 %v3406, %v3574
      %3576 = vmatmul.bf16.gmra.mxu0 %v2010
      %v3577 = vpop.f32.mrf.mxu0
      %v3578 = vadd.f32 %v3409, %v3577
      %v3579 = vpop.f32.mrf.mxu0
      %v3580 = vadd.f32 %v3411, %v3579
      %3581 = vmatmul.bf16.gmra.mxu0 %v2014
      %v3582 = vpop.f32.mrf.mxu0
      %v3583 = vadd.f32 %v3414, %v3582
      %v3584 = vpop.f32.mrf.mxu0
      %v3585 = vadd.f32 %v3416, %v3584
      %3586 = vmatmul.bf16.gmra.mxu0 %v2018
      %v3587 = vpop.f32.mrf.mxu0
      %v3588 = vadd.f32 %v3419, %v3587
      %v3589 = vpop.f32.mrf.mxu0
      %v3590 = vadd.f32 %v3421, %v3589
      %3591 = vmatmul.bf16.gmra.mxu0 %v2022
      %v3592 = vpop.f32.mrf.mxu0
      %v3593 = vadd.f32 %v3424, %v3592
      %v3594 = vpop.f32.mrf.mxu0
      %v3595 = vadd.f32 %v3426, %v3594
      %3596 = vdwg.mxu0
      %3597 = vmatpush.bf16.msra.mxu0 %v2349
      %3598 = vmatpush.bf16.msra.mxu0 %v2347
      %3599 = vmatpush.bf16.msra.mxu0 %v2345
      %3600 = vmatpush.bf16.msra.mxu0 %v2343
      %3601 = vmatpush.bf16.msra.mxu0 %v2341
      %3602 = vmatpush.bf16.msra.mxu0 %v2339
      %3603 = vmatpush.bf16.msra.mxu0 %v2337
      %3604 = vmatpush.bf16.msra.mxu0 %v2335
      %3605 = vmatmul.bf16.gmra.mxu0 %v1899
      %v3606 = vpop.f32.mrf.mxu0
      %v3607 = vadd.f32 %v3438, %v3606
      %v3608 = vpop.f32.mrf.mxu0
      %v3609 = vadd.f32 %v3440, %v3608
      %3610 = vmatmul.bf16.gmra.mxu0 %v1903
      %v3611 = vpop.f32.mrf.mxu0
      %v3612 = vadd.f32 %v3443, %v3611
      %v3613 = vpop.f32.mrf.mxu0
      %v3614 = vadd.f32 %v3445, %v3613
      %3615 = vmatmul.bf16.gmra.mxu0 %v1907
      %v3616 = vpop.f32.mrf.mxu0
      %v3617 = vadd.f32 %v3448, %v3616
      %v3618 = vpop.f32.mrf.mxu0
      %v3619 = vadd.f32 %v3450, %v3618
      %3620 = vmatmul.bf16.gmra.mxu0 %v1911
      %v3621 = vpop.f32.mrf.mxu0
      %v3622 = vadd.f32 %v3453, %v3621
      %v3623 = vpop.f32.mrf.mxu0
      %v3624 = vadd.f32 %v3455, %v3623
      %3625 = vmatmul.bf16.gmra.mxu0 %v1915
      %v3626 = vpop.f32.mrf.mxu0
      %v3627 = vadd.f32 %v3458, %v3626
      %v3628 = vpop.f32.mrf.mxu0
      %v3629 = vadd.f32 %v3460, %v3628
      %3630 = vmatmul.bf16.gmra.mxu0 %v1919
      %v3631 = vpop.f32.mrf.mxu0
      %v3632 = vadd.f32 %v3463, %v3631
      %v3633 = vpop.f32.mrf.mxu0
      %v3634 = vadd.f32 %v3465, %v3633
      %3635 = vmatmul.bf16.gmra.mxu0 %v1923
      %v3636 = vpop.f32.mrf.mxu0
      %v3637 = vadd.f32 %v3468, %v3636
      %v3638 = vpop.f32.mrf.mxu0
      %v3639 = vadd.f32 %v3470, %v3638
      %3640 = vmatmul.bf16.gmra.mxu0 %v1927
      %v3641 = vpop.f32.mrf.mxu0
      %v3642 = vadd.f32 %v3473, %v3641
      %v3643 = vpop.f32.mrf.mxu0
      %v3644 = vadd.f32 %v3475, %v3643
      %3645 = vmatmul.bf16.gmra.mxu0 %v1931
      %v3646 = vpop.f32.mrf.mxu0
      %v3647 = vadd.f32 %v3478, %v3646
      %v3648 = vpop.f32.mrf.mxu0
      %v3649 = vadd.f32 %v3480, %v3648
      %3650 = vmatmul.bf16.gmra.mxu0 %v1935
      %v3651 = vpop.f32.mrf.mxu0
      %v3652 = vadd.f32 %v3483, %v3651
      %v3653 = vpop.f32.mrf.mxu0
      %v3654 = vadd.f32 %v3485, %v3653
      %3655 = vmatmul.bf16.gmra.mxu0 %v1939
      %v3656 = vpop.f32.mrf.mxu0
      %v3657 = vadd.f32 %v3488, %v3656
      %v3658 = vpop.f32.mrf.mxu0
      %v3659 = vadd.f32 %v3490, %v3658
      %3660 = vmatmul.bf16.gmra.mxu0 %v1943
      %v3661 = vpop.f32.mrf.mxu0
      %v3662 = vadd.f32 %v3493, %v3661
      %v3663 = vpop.f32.mrf.mxu0
      %v3664 = vadd.f32 %v3495, %v3663
      %3665 = vmatmul.bf16.gmra.mxu0 %v1947
      %v3666 = vpop.f32.mrf.mxu0
      %v3667 = vadd.f32 %v3498, %v3666
      %v3668 = vpop.f32.mrf.mxu0
      %v3669 = vadd.f32 %v3500, %v3668
      %3670 = vmatmul.bf16.gmra.mxu0 %v1951
      %v3671 = vpop.f32.mrf.mxu0
      %v3672 = vadd.f32 %v3503, %v3671
      %v3673 = vpop.f32.mrf.mxu0
      %v3674 = vadd.f32 %v3505, %v3673
      %3675 = vmatmul.bf16.gmra.mxu0 %v1955
      %v3676 = vpop.f32.mrf.mxu0
      %v3677 = vadd.f32 %v3508, %v3676
      %v3678 = vpop.f32.mrf.mxu0
      %v3679 = vadd.f32 %v3510, %v3678
      %3680 = vmatmul.bf16.gmra.mxu0 %v1959
      %v3681 = vpop.f32.mrf.mxu0
      %v3682 = vadd.f32 %v3513, %v3681
      %v3683 = vpop.f32.mrf.mxu0
      %v3684 = vadd.f32 %v3515, %v3683
      %3685 = vmatmul.bf16.gmra.mxu0 %v1963
      %v3686 = vpop.f32.mrf.mxu0
      %v3687 = vadd.f32 %v3518, %v3686
      %v3688 = vpop.f32.mrf.mxu0
      %v3689 = vadd.f32 %v3520, %v3688
      %3690 = vmatmul.bf16.gmra.mxu0 %v1967
      %v3691 = vpop.f32.mrf.mxu0
      %v3692 = vadd.f32 %v3523, %v3691
      %v3693 = vpop.f32.mrf.mxu0
      %v3694 = vadd.f32 %v3525, %v3693
      %3695 = vmatmul.bf16.gmra.mxu0 %v1971
      %v3696 = vpop.f32.mrf.mxu0
      %v3697 = vadd.f32 %v3528, %v3696
      %v3698 = vpop.f32.mrf.mxu0
      %v3699 = vadd.f32 %v3530, %v3698
      %3700 = vmatmul.bf16.gmra.mxu0 %v1975
      %v3701 = vpop.f32.mrf.mxu0
      %v3702 = vadd.f32 %v3533, %v3701
      %v3703 = vpop.f32.mrf.mxu0
      %v3704 = vadd.f32 %v3535, %v3703
      %3705 = vmatmul.bf16.gmra.mxu0 %v1979
      %v3706 = vpop.f32.mrf.mxu0
      %v3707 = vadd.f32 %v3538, %v3706
      %v3708 = vpop.f32.mrf.mxu0
      %v3709 = vadd.f32 %v3540, %v3708
      %3710 = vmatmul.bf16.gmra.mxu0 %v1983
      %v3711 = vpop.f32.mrf.mxu0
      %v3712 = vadd.f32 %v3543, %v3711
      %v3713 = vpop.f32.mrf.mxu0
      %v3714 = vadd.f32 %v3545, %v3713
      %3715 = vmatmul.bf16.gmra.mxu0 %v1987
      %v3716 = vpop.f32.mrf.mxu0
      %v3717 = vadd.f32 %v3548, %v3716
      %v3718 = vpop.f32.mrf.mxu0
      %v3719 = vadd.f32 %v3550, %v3718
      %3720 = vmatmul.bf16.gmra.mxu0 %v1991
      %v3721 = vpop.f32.mrf.mxu0
      %v3722 = vadd.f32 %v3553, %v3721
      %v3723 = vpop.f32.mrf.mxu0
      %v3724 = vadd.f32 %v3555, %v3723
      %3725 = vmatmul.bf16.gmra.mxu0 %v1995
      %v3726 = vpop.f32.mrf.mxu0
      %v3727 = vadd.f32 %v3558, %v3726
      %v3728 = vpop.f32.mrf.mxu0
      %v3729 = vadd.f32 %v3560, %v3728
      %3730 = vmatmul.bf16.gmra.mxu0 %v1999
      %v3731 = vpop.f32.mrf.mxu0
      %v3732 = vadd.f32 %v3563, %v3731
      %v3733 = vpop.f32.mrf.mxu0
      %v3734 = vadd.f32 %v3565, %v3733
      %3735 = vmatmul.bf16.gmra.mxu0 %v2003
      %v3736 = vpop.f32.mrf.mxu0
      %v3737 = vadd.f32 %v3568, %v3736
      %v3738 = vpop.f32.mrf.mxu0
      %v3739 = vadd.f32 %v3570, %v3738
      %3740 = vmatmul.bf16.gmra.mxu0 %v2007
      %v3741 = vpop.f32.mrf.mxu0
      %v3742 = vadd.f32 %v3573, %v3741
      %v3743 = vpop.f32.mrf.mxu0
      %v3744 = vadd.f32 %v3575, %v3743
      %3745 = vmatmul.bf16.gmra.mxu0 %v2011
      %v3746 = vpop.f32.mrf.mxu0
      %v3747 = vadd.f32 %v3578, %v3746
      %v3748 = vpop.f32.mrf.mxu0
      %v3749 = vadd.f32 %v3580, %v3748
      %3750 = vmatmul.bf16.gmra.mxu0 %v2015
      %v3751 = vpop.f32.mrf.mxu0
      %v3752 = vadd.f32 %v3583, %v3751
      %v3753 = vpop.f32.mrf.mxu0
      %v3754 = vadd.f32 %v3585, %v3753
      %3755 = vmatmul.bf16.gmra.mxu0 %v2019
      %v3756 = vpop.f32.mrf.mxu0
      %v3757 = vadd.f32 %v3588, %v3756
      %v3758 = vpop.f32.mrf.mxu0
      %v3759 = vadd.f32 %v3590, %v3758
      %3760 = vmatmul.bf16.gmra.mxu0 %v2023
      %v3761 = vpop.f32.mrf.mxu0
      %v3762 = vadd.f32 %v3593, %v3761
      %v3763 = vpop.f32.mrf.mxu0
      %v3764 = vadd.f32 %v3595, %v3763
      %3765 = vdwg.mxu0
      %3766 = vmax.xlane.f32.xlu0 %v2931
      %v3767 = vpop.xlane.xlu0 %3766
      %3768 = vmax.xlane.f32.xlu0 %v2933
      %v3769 = vpop.xlane.xlu0 %3768
      %3770 = vmax.xlane.f32.xlu0 %v2936
      %v3771 = vpop.xlane.xlu0 %3770
      %3772 = vmax.xlane.f32.xlu0 %v2938
      %v3773 = vpop.xlane.xlu0 %3772
      %3774 = vmax.xlane.f32.xlu0 %v2941
      %v3775 = vpop.xlane.xlu0 %3774
      %3776 = vmax.xlane.f32.xlu0 %v2943
      %v3777 = vpop.xlane.xlu0 %3776
      %3778 = vmax.xlane.f32.xlu0 %v2946
      %v3779 = vpop.xlane.xlu0 %3778
      %3780 = vmax.xlane.f32.xlu0 %v2948
      %v3781 = vpop.xlane.xlu0 %3780
      %3782 = vmax.xlane.f32.xlu0 %v2951
      %v3783 = vpop.xlane.xlu0 %3782
      %3784 = vmax.xlane.f32.xlu0 %v2953
      %v3785 = vpop.xlane.xlu0 %3784
      %3786 = vmax.xlane.f32.xlu0 %v2956
      %v3787 = vpop.xlane.xlu0 %3786
      %3788 = vmax.xlane.f32.xlu0 %v2958
      %v3789 = vpop.xlane.xlu0 %3788
      %3790 = vmax.xlane.f32.xlu0 %v2961
      %v3791 = vpop.xlane.xlu0 %3790
      %3792 = vmax.xlane.f32.xlu0 %v2963
      %v3793 = vpop.xlane.xlu0 %3792
      %3794 = vmax.xlane.f32.xlu0 %v2966
      %v3795 = vpop.xlane.xlu0 %3794
      %3796 = vmax.xlane.f32.xlu0 %v2968
      %v3797 = vpop.xlane.xlu0 %3796
      %3798 = vmax.xlane.f32.xlu0 %v2971
      %v3799 = vpop.xlane.xlu0 %3798
      %3800 = vmax.xlane.f32.xlu0 %v2973
      %v3801 = vpop.xlane.xlu0 %3800
      %3802 = vmax.xlane.f32.xlu0 %v2976
      %v3803 = vpop.xlane.xlu0 %3802
      %3804 = vmax.xlane.f32.xlu0 %v2978
      %v3805 = vpop.xlane.xlu0 %3804
      %3806 = vmax.xlane.f32.xlu0 %v2981
      %v3807 = vpop.xlane.xlu0 %3806
      %3808 = vmax.xlane.f32.xlu0 %v2983
      %v3809 = vpop.xlane.xlu0 %3808
      %3810 = vmax.xlane.f32.xlu0 %v2986
      %v3811 = vpop.xlane.xlu0 %3810
      %3812 = vmax.xlane.f32.xlu0 %v2988
      %v3813 = vpop.xlane.xlu0 %3812
      %3814 = vmax.xlane.f32.xlu0 %v2991
      %v3815 = vpop.xlane.xlu0 %3814
      %3816 = vmax.xlane.f32.xlu0 %v2993
      %v3817 = vpop.xlane.xlu0 %3816
      %3818 = vmax.xlane.f32.xlu0 %v2996
      %v3819 = vpop.xlane.xlu0 %3818
      %3820 = vmax.xlane.f32.xlu0 %v2998
      %v3821 = vpop.xlane.xlu0 %3820
      %3822 = vmax.xlane.f32.xlu0 %v3001
      %v3823 = vpop.xlane.xlu0 %3822
      %3824 = vmax.xlane.f32.xlu0 %v3003
      %v3825 = vpop.xlane.xlu0 %3824
      %3826 = vmax.xlane.f32.xlu0 %v3006
      %v3827 = vpop.xlane.xlu0 %3826
      %3828 = vmax.xlane.f32.xlu0 %v3008
      %v3829 = vpop.xlane.xlu0 %3828
      %3830 = vmax.xlane.f32.xlu0 %v3011
      %v3831 = vpop.xlane.xlu0 %3830
      %3832 = vmax.xlane.f32.xlu0 %v3013
      %v3833 = vpop.xlane.xlu0 %3832
      %3834 = vmax.xlane.f32.xlu0 %v3016
      %v3835 = vpop.xlane.xlu0 %3834
      %3836 = vmax.xlane.f32.xlu0 %v3018
      %v3837 = vpop.xlane.xlu0 %3836
      %3838 = vmax.xlane.f32.xlu0 %v3021
      %v3839 = vpop.xlane.xlu0 %3838
      %3840 = vmax.xlane.f32.xlu0 %v3023
      %v3841 = vpop.xlane.xlu0 %3840
      %3842 = vmax.xlane.f32.xlu0 %v3026
      %v3843 = vpop.xlane.xlu0 %3842
      %3844 = vmax.xlane.f32.xlu0 %v3028
      %v3845 = vpop.xlane.xlu0 %3844
      %3846 = vmax.xlane.f32.xlu0 %v3031
      %v3847 = vpop.xlane.xlu0 %3846
      %3848 = vmax.xlane.f32.xlu0 %v3033
      %v3849 = vpop.xlane.xlu0 %3848
      %3850 = vmax.xlane.f32.xlu0 %v3036
      %v3851 = vpop.xlane.xlu0 %3850
      %3852 = vmax.xlane.f32.xlu0 %v3038
      %v3853 = vpop.xlane.xlu0 %3852
      %3854 = vmax.xlane.f32.xlu0 %v3041
      %v3855 = vpop.xlane.xlu0 %3854
      %3856 = vmax.xlane.f32.xlu0 %v3043
      %v3857 = vpop.xlane.xlu0 %3856
      %3858 = vmax.xlane.f32.xlu0 %v3046
      %v3859 = vpop.xlane.xlu0 %3858
      %3860 = vmax.xlane.f32.xlu0 %v3048
      %v3861 = vpop.xlane.xlu0 %3860
      %3862 = vmax.xlane.f32.xlu0 %v3051
      %v3863 = vpop.xlane.xlu0 %3862
      %3864 = vmax.xlane.f32.xlu0 %v3053
      %v3865 = vpop.xlane.xlu0 %3864
      %3866 = vmax.xlane.f32.xlu0 %v3056
      %v3867 = vpop.xlane.xlu0 %3866
      %3868 = vmax.xlane.f32.xlu0 %v3058
      %v3869 = vpop.xlane.xlu0 %3868
      %3870 = vmax.xlane.f32.xlu0 %v3061
      %v3871 = vpop.xlane.xlu0 %3870
      %3872 = vmax.xlane.f32.xlu0 %v3063
      %v3873 = vpop.xlane.xlu0 %3872
      %3874 = vmax.xlane.f32.xlu0 %v3066
      %v3875 = vpop.xlane.xlu0 %3874
      %3876 = vmax.xlane.f32.xlu0 %v3068
      %v3877 = vpop.xlane.xlu0 %3876
      %3878 = vmax.xlane.f32.xlu0 %v3071
      %v3879 = vpop.xlane.xlu0 %3878
      %3880 = vmax.xlane.f32.xlu0 %v3073
      %v3881 = vpop.xlane.xlu0 %3880
      %3882 = vmax.xlane.f32.xlu0 %v3076
      %v3883 = vpop.xlane.xlu0 %3882
      %3884 = vmax.xlane.f32.xlu0 %v3078
      %v3885 = vpop.xlane.xlu0 %3884
      %3886 = vmax.xlane.f32.xlu0 %v3081
      %v3887 = vpop.xlane.xlu0 %3886
      %3888 = vmax.xlane.f32.xlu0 %v3083
      %v3889 = vpop.xlane.xlu0 %3888
      %3890 = vmax.xlane.f32.xlu0 %v3086
      %v3891 = vpop.xlane.xlu0 %3890
      %3892 = vmax.xlane.f32.xlu0 %v3088
      %v3893 = vpop.xlane.xlu0 %3892
      %v3894 = vsub.f32 %v2931, %v3767
      %v3895 = vsub.f32 %v2933, %v3769
      %v3896 = vsub.f32 %v2936, %v3771
      %v3897 = vsub.f32 %v2938, %v3773
      %v3898 = vsub.f32 %v2941, %v3775
      %v3899 = vsub.f32 %v2943, %v3777
      %v3900 = vsub.f32 %v2946, %v3779
      %v3901 = vsub.f32 %v2948, %v3781
      %v3902 = vsub.f32 %v2951, %v3783
      %v3903 = vsub.f32 %v2953, %v3785
      %v3904 = vsub.f32 %v2956, %v3787
      %v3905 = vsub.f32 %v2958, %v3789
      %v3906 = vsub.f32 %v2961, %v3791
      %v3907 = vsub.f32 %v2963, %v3793
      %v3908 = vsub.f32 %v2966, %v3795
      %v3909 = vsub.f32 %v2968, %v3797
      %v3910 = vsub.f32 %v2971, %v3799
      %v3911 = vsub.f32 %v2973, %v3801
      %v3912 = vsub.f32 %v2976, %v3803
      %v3913 = vsub.f32 %v2978, %v3805
      %v3914 = vsub.f32 %v2981, %v3807
      %v3915 = vsub.f32 %v2983, %v3809
      %v3916 = vsub.f32 %v2986, %v3811
      %v3917 = vsub.f32 %v2988, %v3813
      %v3918 = vsub.f32 %v2991, %v3815
      %v3919 = vsub.f32 %v2993, %v3817
      %v3920 = vsub.f32 %v2996, %v3819
      %v3921 = vsub.f32 %v2998, %v3821
      %v3922 = vsub.f32 %v3001, %v3823
      %v3923 = vsub.f32 %v3003, %v3825
      %v3924 = vsub.f32 %v3006, %v3827
      %v3925 = vsub.f32 %v3008, %v3829
      %v3926 = vsub.f32 %v3011, %v3831
      %v3927 = vsub.f32 %v3013, %v3833
      %v3928 = vsub.f32 %v3016, %v3835
      %v3929 = vsub.f32 %v3018, %v3837
      %v3930 = vsub.f32 %v3021, %v3839
      %v3931 = vsub.f32 %v3023, %v3841
      %v3932 = vsub.f32 %v3026, %v3843
      %v3933 = vsub.f32 %v3028, %v3845
      %v3934 = vsub.f32 %v3031, %v3847
      %v3935 = vsub.f32 %v3033, %v3849
      %v3936 = vsub.f32 %v3036, %v3851
      %v3937 = vsub.f32 %v3038, %v3853
      %v3938 = vsub.f32 %v3041, %v3855
      %v3939 = vsub.f32 %v3043, %v3857
      %v3940 = vsub.f32 %v3046, %v3859
      %v3941 = vsub.f32 %v3048, %v3861
      %v3942 = vsub.f32 %v3051, %v3863
      %v3943 = vsub.f32 %v3053, %v3865
      %v3944 = vsub.f32 %v3056, %v3867
      %v3945 = vsub.f32 %v3058, %v3869
      %v3946 = vsub.f32 %v3061, %v3871
      %v3947 = vsub.f32 %v3063, %v3873
      %v3948 = vsub.f32 %v3066, %v3875
      %v3949 = vsub.f32 %v3068, %v3877
      %v3950 = vsub.f32 %v3071, %v3879
      %v3951 = vsub.f32 %v3073, %v3881
      %v3952 = vsub.f32 %v3076, %v3883
      %v3953 = vsub.f32 %v3078, %v3885
      %v3954 = vsub.f32 %v3081, %v3887
      %v3955 = vsub.f32 %v3083, %v3889
      %v3956 = vsub.f32 %v3086, %v3891
      %v3957 = vsub.f32 %v3088, %v3893
      %v3958 = vmul.f32 %v3894, 1.442695
      %v3959 = vpow.pop %v3958
      %v3960 = vmul.f32 %v3895, 1.442695
      %v3961 = vpow.pop %v3960
      %v3962 = vmul.f32 %v3896, 1.442695
      %v3963 = vpow.pop %v3962
      %v3964 = vmul.f32 %v3897, 1.442695
      %v3965 = vpow.pop %v3964
      %v3966 = vmul.f32 %v3898, 1.442695
      %v3967 = vpow.pop %v3966
      %v3968 = vmul.f32 %v3899, 1.442695
      %v3969 = vpow.pop %v3968
      %v3970 = vmul.f32 %v3900, 1.442695
      %v3971 = vpow.pop %v3970
      %v3972 = vmul.f32 %v3901, 1.442695
      %v3973 = vpow.pop %v3972
      %v3974 = vmul.f32 %v3902, 1.442695
      %v3975 = vpow.pop %v3974
      %v3976 = vmul.f32 %v3903, 1.442695
      %v3977 = vpow.pop %v3976
      %v3978 = vmul.f32 %v3904, 1.442695
      %v3979 = vpow.pop %v3978
      %v3980 = vmul.f32 %v3905, 1.442695
      %v3981 = vpow.pop %v3980
      %v3982 = vmul.f32 %v3906, 1.442695
      %v3983 = vpow.pop %v3982
      %v3984 = vmul.f32 %v3907, 1.442695
      %v3985 = vpow.pop %v3984
      %v3986 = vmul.f32 %v3908, 1.442695
      %v3987 = vpow.pop %v3986
      %v3988 = vmul.f32 %v3909, 1.442695
      %v3989 = vpow.pop %v3988
      %v3990 = vmul.f32 %v3910, 1.442695
      %v3991 = vpow.pop %v3990
      %v3992 = vmul.f32 %v3911, 1.442695
      %v3993 = vpow.pop %v3992
      %v3994 = vmul.f32 %v3912, 1.442695
      %v3995 = vpow.pop %v3994
      %v3996 = vmul.f32 %v3913, 1.442695
      %v3997 = vpow.pop %v3996
      %v3998 = vmul.f32 %v3914, 1.442695
      %v3999 = vpow.pop %v3998
      %v4000 = vmul.f32 %v3915, 1.442695
      %v4001 = vpow.pop %v4000
      %v4002 = vmul.f32 %v3916, 1.442695
      %v4003 = vpow.pop %v4002
      %v4004 = vmul.f32 %v3917, 1.442695
      %v4005 = vpow.pop %v4004
      %v4006 = vmul.f32 %v3918, 1.442695
      %v4007 = vpow.pop %v4006
      %v4008 = vmul.f32 %v3919, 1.442695
      %v4009 = vpow.pop %v4008
      %v4010 = vmul.f32 %v3920, 1.442695
      %v4011 = vpow.pop %v4010
      %v4012 = vmul.f32 %v3921, 1.442695
      %v4013 = vpow.pop %v4012
      %v4014 = vmul.f32 %v3922, 1.442695
      %v4015 = vpow.pop %v4014
      %v4016 = vmul.f32 %v3923, 1.442695
      %v4017 = vpow.pop %v4016
      %v4018 = vmul.f32 %v3924, 1.442695
      %v4019 = vpow.pop %v4018
      %v4020 = vmul.f32 %v3925, 1.442695
      %v4021 = vpow.pop %v4020
      %v4022 = vmul.f32 %v3926, 1.442695
      %v4023 = vpow.pop %v4022
      %v4024 = vmul.f32 %v3927, 1.442695
      %v4025 = vpow.pop %v4024
      %v4026 = vmul.f32 %v3928, 1.442695
      %v4027 = vpow.pop %v4026
      %v4028 = vmul.f32 %v3929, 1.442695
      %v4029 = vpow.pop %v4028
      %v4030 = vmul.f32 %v3930, 1.442695
      %v4031 = vpow.pop %v4030
      %v4032 = vmul.f32 %v3931, 1.442695
      %v4033 = vpow.pop %v4032
      %v4034 = vmul.f32 %v3932, 1.442695
      %v4035 = vpow.pop %v4034
      %v4036 = vmul.f32 %v3933, 1.442695
      %v4037 = vpow.pop %v4036
      %v4038 = vmul.f32 %v3934, 1.442695
      %v4039 = vpow.pop %v4038
      %v4040 = vmul.f32 %v3935, 1.442695
      %v4041 = vpow.pop %v4040
      %v4042 = vmul.f32 %v3936, 1.442695
      %v4043 = vpow.pop %v4042
      %v4044 = vmul.f32 %v3937, 1.442695
      %v4045 = vpow.pop %v4044
      %v4046 = vmul.f32 %v3938, 1.442695
      %v4047 = vpow.pop %v4046
      %v4048 = vmul.f32 %v3939, 1.442695
      %v4049 = vpow.pop %v4048
      %v4050 = vmul.f32 %v3940, 1.442695
      %v4051 = vpow.pop %v4050
      %v4052 = vmul.f32 %v3941, 1.442695
      %v4053 = vpow.pop %v4052
      %v4054 = vmul.f32 %v3942, 1.442695
      %v4055 = vpow.pop %v4054
      %v4056 = vmul.f32 %v3943, 1.442695
      %v4057 = vpow.pop %v4056
      %v4058 = vmul.f32 %v3944, 1.442695
      %v4059 = vpow.pop %v4058
      %v4060 = vmul.f32 %v3945, 1.442695
      %v4061 = vpow.pop %v4060
      %v4062 = vmul.f32 %v3946, 1.442695
      %v4063 = vpow.pop %v4062
      %v4064 = vmul.f32 %v3947, 1.442695
      %v4065 = vpow.pop %v4064
      %v4066 = vmul.f32 %v3948, 1.442695
      %v4067 = vpow.pop %v4066
      %v4068 = vmul.f32 %v3949, 1.442695
      %v4069 = vpow.pop %v4068
      %v4070 = vmul.f32 %v3950, 1.442695
      %v4071 = vpow.pop %v4070
      %v4072 = vmul.f32 %v3951, 1.442695
      %v4073 = vpow.pop %v4072
      %v4074 = vmul.f32 %v3952, 1.442695
      %v4075 = vpow.pop %v4074
      %v4076 = vmul.f32 %v3953, 1.442695
      %v4077 = vpow.pop %v4076
      %v4078 = vmul.f32 %v3954, 1.442695
      %v4079 = vpow.pop %v4078
      %v4080 = vmul.f32 %v3955, 1.442695
      %v4081 = vpow.pop %v4080
      %v4082 = vmul.f32 %v3956, 1.442695
      %v4083 = vpow.pop %v4082
      %v4084 = vmul.f32 %v3957, 1.442695
      %v4085 = vpow.pop %v4084
      %4086 = vadd.xlane.f32.xlu0 %v3959
      %v4087 = vpop.xlane.xlu0 %4086
      %4088 = vadd.xlane.f32.xlu0 %v3961
      %v4089 = vpop.xlane.xlu0 %4088
      %4090 = vadd.xlane.f32.xlu0 %v3963
      %v4091 = vpop.xlane.xlu0 %4090
      %4092 = vadd.xlane.f32.xlu0 %v3965
      %v4093 = vpop.xlane.xlu0 %4092
      %4094 = vadd.xlane.f32.xlu0 %v3967
      %v4095 = vpop.xlane.xlu0 %4094
      %4096 = vadd.xlane.f32.xlu0 %v3969
      %v4097 = vpop.xlane.xlu0 %4096
      %4098 = vadd.xlane.f32.xlu0 %v3971
      %v4099 = vpop.xlane.xlu0 %4098
      %4100 = vadd.xlane.f32.xlu0 %v3973
      %v4101 = vpop.xlane.xlu0 %4100
      %4102 = vadd.xlane.f32.xlu0 %v3975
      %v4103 = vpop.xlane.xlu0 %4102
      %4104 = vadd.xlane.f32.xlu0 %v3977
      %v4105 = vpop.xlane.xlu0 %4104
      %4106 = vadd.xlane.f32.xlu0 %v3979
      %v4107 = vpop.xlane.xlu0 %4106
      %4108 = vadd.xlane.f32.xlu0 %v3981
      %v4109 = vpop.xlane.xlu0 %4108
      %4110 = vadd.xlane.f32.xlu0 %v3983
      %v4111 = vpop.xlane.xlu0 %4110
      %4112 = vadd.xlane.f32.xlu0 %v3985
      %v4113 = vpop.xlane.xlu0 %4112
      %4114 = vadd.xlane.f32.xlu0 %v3987
      %v4115 = vpop.xlane.xlu0 %4114
      %4116 = vadd.xlane.f32.xlu0 %v3989
      %v4117 = vpop.xlane.xlu0 %4116
      %4118 = vadd.xlane.f32.xlu0 %v3991
      %v4119 = vpop.xlane.xlu0 %4118
      %4120 = vadd.xlane.f32.xlu0 %v3993
      %v4121 = vpop.xlane.xlu0 %4120
      %4122 = vadd.xlane.f32.xlu0 %v3995
      %v4123 = vpop.xlane.xlu0 %4122
      %4124 = vadd.xlane.f32.xlu0 %v3997
      %v4125 = vpop.xlane.xlu0 %4124
      %4126 = vadd.xlane.f32.xlu0 %v3999
      %v4127 = vpop.xlane.xlu0 %4126
      %4128 = vadd.xlane.f32.xlu0 %v4001
      %v4129 = vpop.xlane.xlu0 %4128
      %4130 = vadd.xlane.f32.xlu0 %v4003
      %v4131 = vpop.xlane.xlu0 %4130
      %4132 = vadd.xlane.f32.xlu0 %v4005
      %v4133 = vpop.xlane.xlu0 %4132
      %4134 = vadd.xlane.f32.xlu0 %v4007
      %v4135 = vpop.xlane.xlu0 %4134
      %4136 = vadd.xlane.f32.xlu0 %v4009
      %v4137 = vpop.xlane.xlu0 %4136
      %4138 = vadd.xlane.f32.xlu0 %v4011
      %v4139 = vpop.xlane.xlu0 %4138
      %4140 = vadd.xlane.f32.xlu0 %v4013
      %v4141 = vpop.xlane.xlu0 %4140
      %4142 = vadd.xlane.f32.xlu0 %v4015
      %v4143 = vpop.xlane.xlu0 %4142
      %4144 = vadd.xlane.f32.xlu0 %v4017
      %v4145 = vpop.xlane.xlu0 %4144
      %4146 = vadd.xlane.f32.xlu0 %v4019
      %v4147 = vpop.xlane.xlu0 %4146
      %4148 = vadd.xlane.f32.xlu0 %v4021
      %v4149 = vpop.xlane.xlu0 %4148
      %4150 = vadd.xlane.f32.xlu0 %v4023
      %v4151 = vpop.xlane.xlu0 %4150
      %4152 = vadd.xlane.f32.xlu0 %v4025
      %v4153 = vpop.xlane.xlu0 %4152
      %4154 = vadd.xlane.f32.xlu0 %v4027
      %v4155 = vpop.xlane.xlu0 %4154
      %4156 = vadd.xlane.f32.xlu0 %v4029
      %v4157 = vpop.xlane.xlu0 %4156
      %4158 = vadd.xlane.f32.xlu0 %v4031
      %v4159 = vpop.xlane.xlu0 %4158
      %4160 = vadd.xlane.f32.xlu0 %v4033
      %v4161 = vpop.xlane.xlu0 %4160
      %4162 = vadd.xlane.f32.xlu0 %v4035
      %v4163 = vpop.xlane.xlu0 %4162
      %4164 = vadd.xlane.f32.xlu0 %v4037
      %v4165 = vpop.xlane.xlu0 %4164
      %4166 = vadd.xlane.f32.xlu0 %v4039
      %v4167 = vpop.xlane.xlu0 %4166
      %4168 = vadd.xlane.f32.xlu0 %v4041
      %v4169 = vpop.xlane.xlu0 %4168
      %4170 = vadd.xlane.f32.xlu0 %v4043
      %v4171 = vpop.xlane.xlu0 %4170
      %4172 = vadd.xlane.f32.xlu0 %v4045
      %v4173 = vpop.xlane.xlu0 %4172
      %4174 = vadd.xlane.f32.xlu0 %v4047
      %v4175 = vpop.xlane.xlu0 %4174
      %4176 = vadd.xlane.f32.xlu0 %v4049
      %v4177 = vpop.xlane.xlu0 %4176
      %4178 = vadd.xlane.f32.xlu0 %v4051
      %v4179 = vpop.xlane.xlu0 %4178
      %4180 = vadd.xlane.f32.xlu0 %v4053
      %v4181 = vpop.xlane.xlu0 %4180
      %4182 = vadd.xlane.f32.xlu0 %v4055
      %v4183 = vpop.xlane.xlu0 %4182
      %4184 = vadd.xlane.f32.xlu0 %v4057
      %v4185 = vpop.xlane.xlu0 %4184
      %4186 = vadd.xlane.f32.xlu0 %v4059
      %v4187 = vpop.xlane.xlu0 %4186
      %4188 = vadd.xlane.f32.xlu0 %v4061
      %v4189 = vpop.xlane.xlu0 %4188
      %4190 = vadd.xlane.f32.xlu0 %v4063
      %v4191 = vpop.xlane.xlu0 %4190
      %4192 = vadd.xlane.f32.xlu0 %v4065
      %v4193 = vpop.xlane.xlu0 %4192
      %4194 = vadd.xlane.f32.xlu0 %v4067
      %v4195 = vpop.xlane.xlu0 %4194
      %4196 = vadd.xlane.f32.xlu0 %v4069
      %v4197 = vpop.xlane.xlu0 %4196
      %4198 = vadd.xlane.f32.xlu0 %v4071
      %v4199 = vpop.xlane.xlu0 %4198
      %4200 = vadd.xlane.f32.xlu0 %v4073
      %v4201 = vpop.xlane.xlu0 %4200
      %4202 = vadd.xlane.f32.xlu0 %v4075
      %v4203 = vpop.xlane.xlu0 %4202
      %4204 = vadd.xlane.f32.xlu0 %v4077
      %v4205 = vpop.xlane.xlu0 %4204
      %4206 = vadd.xlane.f32.xlu0 %v4079
      %v4207 = vpop.xlane.xlu0 %4206
      %4208 = vadd.xlane.f32.xlu0 %v4081
      %v4209 = vpop.xlane.xlu0 %4208
      %4210 = vadd.xlane.f32.xlu0 %v4083
      %v4211 = vpop.xlane.xlu0 %4210
      %4212 = vadd.xlane.f32.xlu0 %v4085
      %v4213 = vpop.xlane.xlu0 %4212
      %v4214 = vrcp.pop %v4087
      %v4215 = vrcp.pop %v4089
      %v4216 = vrcp.pop %v4091
      %v4217 = vrcp.pop %v4093
      %v4218 = vrcp.pop %v4095
      %v4219 = vrcp.pop %v4097
      %v4220 = vrcp.pop %v4099
      %v4221 = vrcp.pop %v4101
      %v4222 = vrcp.pop %v4103
      %v4223 = vrcp.pop %v4105
      %v4224 = vrcp.pop %v4107
      %v4225 = vrcp.pop %v4109
      %v4226 = vrcp.pop %v4111
      %v4227 = vrcp.pop %v4113
      %v4228 = vrcp.pop %v4115
      %v4229 = vrcp.pop %v4117
      %v4230 = vrcp.pop %v4119
      %v4231 = vrcp.pop %v4121
      %v4232 = vrcp.pop %v4123
      %v4233 = vrcp.pop %v4125
      %v4234 = vrcp.pop %v4127
      %v4235 = vrcp.pop %v4129
      %v4236 = vrcp.pop %v4131
      %v4237 = vrcp.pop %v4133
      %v4238 = vrcp.pop %v4135
      %v4239 = vrcp.pop %v4137
      %v4240 = vrcp.pop %v4139
      %v4241 = vrcp.pop %v4141
      %v4242 = vrcp.pop %v4143
      %v4243 = vrcp.pop %v4145
      %v4244 = vrcp.pop %v4147
      %v4245 = vrcp.pop %v4149
      %v4246 = vrcp.pop %v4151
      %v4247 = vrcp.pop %v4153
      %v4248 = vrcp.pop %v4155
      %v4249 = vrcp.pop %v4157
      %v4250 = vrcp.pop %v4159
      %v4251 = vrcp.pop %v4161
      %v4252 = vrcp.pop %v4163
      %v4253 = vrcp.pop %v4165
      %v4254 = vrcp.pop %v4167
      %v4255 = vrcp.pop %v4169
      %v4256 = vrcp.pop %v4171
      %v4257 = vrcp.pop %v4173
      %v4258 = vrcp.pop %v4175
      %v4259 = vrcp.pop %v4177
      %v4260 = vrcp.pop %v4179
      %v4261 = vrcp.pop %v4181
      %v4262 = vrcp.pop %v4183
      %v4263 = vrcp.pop %v4185
      %v4264 = vrcp.pop %v4187
      %v4265 = vrcp.pop %v4189
      %v4266 = vrcp.pop %v4191
      %v4267 = vrcp.pop %v4193
      %v4268 = vrcp.pop %v4195
      %v4269 = vrcp.pop %v4197
      %v4270 = vrcp.pop %v4199
      %v4271 = vrcp.pop %v4201
      %v4272 = vrcp.pop %v4203
      %v4273 = vrcp.pop %v4205
      %v4274 = vrcp.pop %v4207
      %v4275 = vrcp.pop %v4209
      %v4276 = vrcp.pop %v4211
      %v4277 = vrcp.pop %v4213
      %v4278 = vmul.f32 %v3959, %v4214
      %v4279 = vmul.f32 %v3961, %v4215
      %v4280 = vmul.f32 %v3963, %v4216
      %v4281 = vmul.f32 %v3965, %v4217
      %v4282 = vmul.f32 %v3967, %v4218
      %v4283 = vmul.f32 %v3969, %v4219
      %v4284 = vmul.f32 %v3971, %v4220
      %v4285 = vmul.f32 %v3973, %v4221
      %v4286 = vmul.f32 %v3975, %v4222
      %v4287 = vmul.f32 %v3977, %v4223
      %v4288 = vmul.f32 %v3979, %v4224
      %v4289 = vmul.f32 %v3981, %v4225
      %v4290 = vmul.f32 %v3983, %v4226
      %v4291 = vmul.f32 %v3985, %v4227
      %v4292 = vmul.f32 %v3987, %v4228
      %v4293 = vmul.f32 %v3989, %v4229
      %v4294 = vmul.f32 %v3991, %v4230
      %v4295 = vmul.f32 %v3993, %v4231
      %v4296 = vmul.f32 %v3995, %v4232
      %v4297 = vmul.f32 %v3997, %v4233
      %v4298 = vmul.f32 %v3999, %v4234
      %v4299 = vmul.f32 %v4001, %v4235
      %v4300 = vmul.f32 %v4003, %v4236
      %v4301 = vmul.f32 %v4005, %v4237
      %v4302 = vmul.f32 %v4007, %v4238
      %v4303 = vmul.f32 %v4009, %v4239
      %v4304 = vmul.f32 %v4011, %v4240
      %v4305 = vmul.f32 %v4013, %v4241
      %v4306 = vmul.f32 %v4015, %v4242
      %v4307 = vmul.f32 %v4017, %v4243
      %v4308 = vmul.f32 %v4019, %v4244
      %v4309 = vmul.f32 %v4021, %v4245
      %v4310 = vmul.f32 %v4023, %v4246
      %v4311 = vmul.f32 %v4025, %v4247
      %v4312 = vmul.f32 %v4027, %v4248
      %v4313 = vmul.f32 %v4029, %v4249
      %v4314 = vmul.f32 %v4031, %v4250
      %v4315 = vmul.f32 %v4033, %v4251
      %v4316 = vmul.f32 %v4035, %v4252
      %v4317 = vmul.f32 %v4037, %v4253
      %v4318 = vmul.f32 %v4039, %v4254
      %v4319 = vmul.f32 %v4041, %v4255
      %v4320 = vmul.f32 %v4043, %v4256
      %v4321 = vmul.f32 %v4045, %v4257
      %v4322 = vmul.f32 %v4047, %v4258
      %v4323 = vmul.f32 %v4049, %v4259
      %v4324 = vmul.f32 %v4051, %v4260
      %v4325 = vmul.f32 %v4053, %v4261
      %v4326 = vmul.f32 %v4055, %v4262
      %v4327 = vmul.f32 %v4057, %v4263
      %v4328 = vmul.f32 %v4059, %v4264
      %v4329 = vmul.f32 %v4061, %v4265
      %v4330 = vmul.f32 %v4063, %v4266
      %v4331 = vmul.f32 %v4065, %v4267
      %v4332 = vmul.f32 %v4067, %v4268
      %v4333 = vmul.f32 %v4069, %v4269
      %v4334 = vmul.f32 %v4071, %v4270
      %v4335 = vmul.f32 %v4073, %v4271
      %v4336 = vmul.f32 %v4075, %v4272
      %v4337 = vmul.f32 %v4077, %v4273
      %v4338 = vmul.f32 %v4079, %v4274
      %v4339 = vmul.f32 %v4081, %v4275
      %v4340 = vmul.f32 %v4083, %v4276
      %v4341 = vmul.f32 %v4085, %v4277
      %v4342 = vpack.c.bf16 %v4278, %v4278
      %v4343 = vpack.c.bf16 %v4279, %v4279
      %v4344 = vpack.c.bf16 %v4280, %v4280
      %v4345 = vpack.c.bf16 %v4281, %v4281
      %v4346 = vpack.c.bf16 %v4282, %v4282
      %v4347 = vpack.c.bf16 %v4283, %v4283
      %v4348 = vpack.c.bf16 %v4284, %v4284
      %v4349 = vpack.c.bf16 %v4285, %v4285
      %v4350 = vpack.c.bf16 %v4286, %v4286
      %v4351 = vpack.c.bf16 %v4287, %v4287
      %v4352 = vpack.c.bf16 %v4288, %v4288
      %v4353 = vpack.c.bf16 %v4289, %v4289
      %v4354 = vpack.c.bf16 %v4290, %v4290
      %v4355 = vpack.c.bf16 %v4291, %v4291
      %v4356 = vpack.c.bf16 %v4292, %v4292
      %v4357 = vpack.c.bf16 %v4293, %v4293
      %v4358 = vpack.c.bf16 %v4294, %v4294
      %v4359 = vpack.c.bf16 %v4295, %v4295
      %v4360 = vpack.c.bf16 %v4296, %v4296
      %v4361 = vpack.c.bf16 %v4297, %v4297
      %v4362 = vpack.c.bf16 %v4298, %v4298
      %v4363 = vpack.c.bf16 %v4299, %v4299
      %v4364 = vpack.c.bf16 %v4300, %v4300
      %v4365 = vpack.c.bf16 %v4301, %v4301
      %v4366 = vpack.c.bf16 %v4302, %v4302
      %v4367 = vpack.c.bf16 %v4303, %v4303
      %v4368 = vpack.c.bf16 %v4304, %v4304
      %v4369 = vpack.c.bf16 %v4305, %v4305
      %v4370 = vpack.c.bf16 %v4306, %v4306
      %v4371 = vpack.c.bf16 %v4307, %v4307
      %v4372 = vpack.c.bf16 %v4308, %v4308
      %v4373 = vpack.c.bf16 %v4309, %v4309
      %v4374 = vpack.c.bf16 %v4310, %v4310
      %v4375 = vpack.c.bf16 %v4311, %v4311
      %v4376 = vpack.c.bf16 %v4312, %v4312
      %v4377 = vpack.c.bf16 %v4313, %v4313
      %v4378 = vpack.c.bf16 %v4314, %v4314
      %v4379 = vpack.c.bf16 %v4315, %v4315
      %v4380 = vpack.c.bf16 %v4316, %v4316
      %v4381 = vpack.c.bf16 %v4317, %v4317
      %v4382 = vpack.c.bf16 %v4318, %v4318
      %v4383 = vpack.c.bf16 %v4319, %v4319
      %v4384 = vpack.c.bf16 %v4320, %v4320
      %v4385 = vpack.c.bf16 %v4321, %v4321
      %v4386 = vpack.c.bf16 %v4322, %v4322
      %v4387 = vpack.c.bf16 %v4323, %v4323
      %v4388 = vpack.c.bf16 %v4324, %v4324
      %v4389 = vpack.c.bf16 %v4325, %v4325
      %v4390 = vpack.c.bf16 %v4326, %v4326
      %v4391 = vpack.c.bf16 %v4327, %v4327
      %v4392 = vpack.c.bf16 %v4328, %v4328
      %v4393 = vpack.c.bf16 %v4329, %v4329
      %v4394 = vpack.c.bf16 %v4330, %v4330
      %v4395 = vpack.c.bf16 %v4331, %v4331
      %v4396 = vpack.c.bf16 %v4332, %v4332
      %v4397 = vpack.c.bf16 %v4333, %v4333
      %v4398 = vpack.c.bf16 %v4334, %v4334
      %v4399 = vpack.c.bf16 %v4335, %v4335
      %v4400 = vpack.c.bf16 %v4336, %v4336
      %v4401 = vpack.c.bf16 %v4337, %v4337
      %v4402 = vpack.c.bf16 %v4338, %v4338
      %v4403 = vpack.c.bf16 %v4339, %v4339
      %v4404 = vpack.c.bf16 %v4340, %v4340
      %v4405 = vpack.c.bf16 %v4341, %v4341
      %4406 = vst [vmem:[%s261] sm:$0xf] %v4342
      %4407 = vst [vmem:[%s261 + $0x4] sm:$0xf] %v4343
      %4408 = vst [vmem:[%s261 + $0x8] sm:$0xf] %v4344
      %4409 = vst [vmem:[%s261 + $0xc] sm:$0xf] %v4345
      %4410 = vst [vmem:[%s261 + $0x10] sm:$0xf] %v4346
      %4411 = vst [vmem:[%s261 + $0x14] sm:$0xf] %v4347
      %4412 = vst [vmem:[%s261 + $0x18] sm:$0xf] %v4348
      %4413 = vst [vmem:[%s261 + $0x1c] sm:$0xf] %v4349
      %4414 = vst [vmem:[%s261 + $0x20] sm:$0xf] %v4350
      %4415 = vst [vmem:[%s261 + $0x24] sm:$0xf] %v4351
      %4416 = vst [vmem:[%s261 + $0x28] sm:$0xf] %v4352
      %4417 = vst [vmem:[%s261 + $0x2c] sm:$0xf] %v4353
      %4418 = vst [vmem:[%s261 + $0x30] sm:$0xf] %v4354
      %4419 = vst [vmem:[%s261 + $0x34] sm:$0xf] %v4355
      %4420 = vst [vmem:[%s261 + $0x38] sm:$0xf] %v4356
      %4421 = vst [vmem:[%s261 + $0x3c] sm:$0xf] %v4357
      %4422 = vst [vmem:[%s261 + $0x40] sm:$0xf] %v4358
      %4423 = vst [vmem:[%s261 + $0x44] sm:$0xf] %v4359
      %4424 = vst [vmem:[%s261 + $0x48] sm:$0xf] %v4360
      %4425 = vst [vmem:[%s261 + $0x4c] sm:$0xf] %v4361
      %4426 = vst [vmem:[%s261 + $0x50] sm:$0xf] %v4362
      %4427 = vst [vmem:[%s261 + $0x54] sm:$0xf] %v4363
      %4428 = vst [vmem:[%s261 + $0x58] sm:$0xf] %v4364
      %4429 = vst [vmem:[%s261 + $0x5c] sm:$0xf] %v4365
      %4430 = vst [vmem:[%s261 + $0x60] sm:$0xf] %v4366
      %4431 = vst [vmem:[%s261 + $0x64] sm:$0xf] %v4367
      %4432 = vst [vmem:[%s261 + $0x68] sm:$0xf] %v4368
      %4433 = vst [vmem:[%s261 + $0x6c] sm:$0xf] %v4369
      %4434 = vst [vmem:[%s261 + $0x70] sm:$0xf] %v4370
      %4435 = vst [vmem:[%s261 + $0x74] sm:$0xf] %v4371
      %4436 = vst [vmem:[%s261 + $0x78] sm:$0xf] %v4372
      %4437 = vst [vmem:[%s261 + $0x7c] sm:$0xf] %v4373
      %4438 = vst [vmem:[%s261 + $0x80] sm:$0xf] %v4374
      %4439 = vst [vmem:[%s261 + $0x84] sm:$0xf] %v4375
      %4440 = vst [vmem:[%s261 + $0x88] sm:$0xf] %v4376
      %4441 = vst [vmem:[%s261 + $0x8c] sm:$0xf] %v4377
      %4442 = vst [vmem:[%s261 + $0x90] sm:$0xf] %v4378
      %4443 = vst [vmem:[%s261 + $0x94] sm:$0xf] %v4379
      %4444 = vst [vmem:[%s261 + $0x98] sm:$0xf] %v4380
      %4445 = vst [vmem:[%s261 + $0x9c] sm:$0xf] %v4381
      %4446 = vst [vmem:[%s261 + $0xa0] sm:$0xf] %v4382
      %4447 = vst [vmem:[%s261 + $0xa4] sm:$0xf] %v4383
      %4448 = vst [vmem:[%s261 + $0xa8] sm:$0xf] %v4384
      %4449 = vst [vmem:[%s261 + $0xac] sm:$0xf] %v4385
      %4450 = vst [vmem:[%s261 + $0xb0] sm:$0xf] %v4386
      %4451 = vst [vmem:[%s261 + $0xb4] sm:$0xf] %v4387
      %4452 = vst [vmem:[%s261 + $0xb8] sm:$0xf] %v4388
      %4453 = vst [vmem:[%s261 + $0xbc] sm:$0xf] %v4389
      %4454 = vst [vmem:[%s261 + $0xc0] sm:$0xf] %v4390
      %4455 = vst [vmem:[%s261 + $0xc4] sm:$0xf] %v4391
      %4456 = vst [vmem:[%s261 + $0xc8] sm:$0xf] %v4392
      %4457 = vst [vmem:[%s261 + $0xcc] sm:$0xf] %v4393
      %4458 = vst [vmem:[%s261 + $0xd0] sm:$0xf] %v4394
      %4459 = vst [vmem:[%s261 + $0xd4] sm:$0xf] %v4395
      %4460 = vst [vmem:[%s261 + $0xd8] sm:$0xf] %v4396
      %4461 = vst [vmem:[%s261 + $0xdc] sm:$0xf] %v4397
      %4462 = vst [vmem:[%s261 + $0xe0] sm:$0xf] %v4398
      %4463 = vst [vmem:[%s261 + $0xe4] sm:$0xf] %v4399
      %4464 = vst [vmem:[%s261 + $0xe8] sm:$0xf] %v4400
      %4465 = vst [vmem:[%s261 + $0xec] sm:$0xf] %v4401
      %4466 = vst [vmem:[%s261 + $0xf0] sm:$0xf] %v4402
      %4467 = vst [vmem:[%s261 + $0xf4] sm:$0xf] %v4403
      %4468 = vst [vmem:[%s261 + $0xf8] sm:$0xf] %v4404
      %4469 = vst [vmem:[%s261 + $0xfc] sm:$0xf] %v4405
      %v4470 = vpack.c.bf16 %v3607, %v3607
      %v4471 = vpack.c.bf16 %v3609, %v3609
      %v4472 = vpack.c.bf16 %v3612, %v3612
      %v4473 = vpack.c.bf16 %v3614, %v3614
      %v4474 = vpack.c.bf16 %v3617, %v3617
      %v4475 = vpack.c.bf16 %v3619, %v3619
      %v4476 = vpack.c.bf16 %v3622, %v3622
      %v4477 = vpack.c.bf16 %v3624, %v3624
      %v4478 = vpack.c.bf16 %v3627, %v3627
      %v4479 = vpack.c.bf16 %v3629, %v3629
      %v4480 = vpack.c.bf16 %v3632, %v3632
      %v4481 = vpack.c.bf16 %v3634, %v3634
      %v4482 = vpack.c.bf16 %v3637, %v3637
      %v4483 = vpack.c.bf16 %v3639, %v3639
      %v4484 = vpack.c.bf16 %v3642, %v3642
      %v4485 = vpack.c.bf16 %v3644, %v3644
      %v4486 = vpack.c.bf16 %v3647, %v3647
      %v4487 = vpack.c.bf16 %v3649, %v3649
      %v4488 = vpack.c.bf16 %v3652, %v3652
      %v4489 = vpack.c.bf16 %v3654, %v3654
      %v4490 = vpack.c.bf16 %v3657, %v3657
      %v4491 = vpack.c.bf16 %v3659, %v3659
      %v4492 = vpack.c.bf16 %v3662, %v3662
      %v4493 = vpack.c.bf16 %v3664, %v3664
      %v4494 = vpack.c.bf16 %v3667, %v3667
      %v4495 = vpack.c.bf16 %v3669, %v3669
      %v4496 = vpack.c.bf16 %v3672, %v3672
      %v4497 = vpack.c.bf16 %v3674, %v3674
      %v4498 = vpack.c.bf16 %v3677, %v3677
      %v4499 = vpack.c.bf16 %v3679, %v3679
      %v4500 = vpack.c.bf16 %v3682, %v3682
      %v4501 = vpack.c.bf16 %v3684, %v3684
      %v4502 = vpack.c.bf16 %v3687, %v3687
      %v4503 = vpack.c.bf16 %v3689, %v3689
      %v4504 = vpack.c.bf16 %v3692, %v3692
      %v4505 = vpack.c.bf16 %v3694, %v3694
      %v4506 = vpack.c.bf16 %v3697, %v3697
      %v4507 = vpack.c.bf16 %v3699, %v3699
      %v4508 = vpack.c.bf16 %v3702, %v3702
      %v4509 = vpack.c.bf16 %v3704, %v3704
      %v4510 = vpack.c.bf16 %v3707, %v3707
      %v4511 = vpack.c.bf16 %v3709, %v3709
      %v4512 = vpack.c.bf16 %v3712, %v3712
      %v4513 = vpack.c.bf16 %v3714, %v3714
      %v4514 = vpack.c.bf16 %v3717, %v3717
      %v4515 = vpack.c.bf16 %v3719, %v3719
      %v4516 = vpack.c.bf16 %v3722, %v3722
      %v4517 = vpack.c.bf16 %v3724, %v3724
      %v4518 = vpack.c.bf16 %v3727, %v3727
      %v4519 = vpack.c.bf16 %v3729, %v3729
      %v4520 = vpack.c.bf16 %v3732, %v3732
      %v4521 = vpack.c.bf16 %v3734, %v3734
      %v4522 = vpack.c.bf16 %v3737, %v3737
      %v4523 = vpack.c.bf16 %v3739, %v3739
      %v4524 = vpack.c.bf16 %v3742, %v3742
      %v4525 = vpack.c.bf16 %v3744, %v3744
      %v4526 = vpack.c.bf16 %v3747, %v3747
      %v4527 = vpack.c.bf16 %v3749, %v3749
      %v4528 = vpack.c.bf16 %v3752, %v3752
      %v4529 = vpack.c.bf16 %v3754, %v3754
      %v4530 = vpack.c.bf16 %v3757, %v3757
      %v4531 = vpack.c.bf16 %v3759, %v3759
      %v4532 = vpack.c.bf16 %v3762, %v3762
      %v4533 = vpack.c.bf16 %v3764, %v3764
      %4534 = vst [vmem:[%s267] sm:$0xf] %v4470
      %4535 = vst [vmem:[%s267 + $0x4] sm:$0xf] %v4471
      %4536 = vst [vmem:[%s267 + $0x8] sm:$0xf] %v4472
      %4537 = vst [vmem:[%s267 + $0xc] sm:$0xf] %v4473
      %4538 = vst [vmem:[%s267 + $0x10] sm:$0xf] %v4474
      %4539 = vst [vmem:[%s267 + $0x14] sm:$0xf] %v4475
      %4540 = vst [vmem:[%s267 + $0x18] sm:$0xf] %v4476
      %4541 = vst [vmem:[%s267 + $0x1c] sm:$0xf] %v4477
      %4542 = vst [vmem:[%s267 + $0x20] sm:$0xf] %v4478
      %4543 = vst [vmem:[%s267 + $0x24] sm:$0xf] %v4479
      %4544 = vst [vmem:[%s267 + $0x28] sm:$0xf] %v4480
      %4545 = vst [vmem:[%s267 + $0x2c] sm:$0xf] %v4481
      %4546 = vst [vmem:[%s267 + $0x30] sm:$0xf] %v4482
      %4547 = vst [vmem:[%s267 + $0x34] sm:$0xf] %v4483
      %4548 = vst [vmem:[%s267 + $0x38] sm:$0xf] %v4484
      %4549 = vst [vmem:[%s267 + $0x3c] sm:$0xf] %v4485
      %4550 = vst [vmem:[%s267 + $0x40] sm:$0xf] %v4486
      %4551 = vst [vmem:[%s267 + $0x44] sm:$0xf] %v4487
      %4552 = vst [vmem:[%s267 + $0x48] sm:$0xf] %v4488
      %4553 = vst [vmem:[%s267 + $0x4c] sm:$0xf] %v4489
      %4554 = vst [vmem:[%s267 + $0x50] sm:$0xf] %v4490
      %4555 = vst [vmem:[%s267 + $0x54] sm:$0xf] %v4491
      %4556 = vst [vmem:[%s267 + $0x58] sm:$0xf] %v4492
      %4557 = vst [vmem:[%s267 + $0x5c] sm:$0xf] %v4493
      %4558 = vst [vmem:[%s267 + $0x60] sm:$0xf] %v4494
      %4559 = vst [vmem:[%s267 + $0x64] sm:$0xf] %v4495
      %4560 = vst [vmem:[%s267 + $0x68] sm:$0xf] %v4496
      %4561 = vst [vmem:[%s267 + $0x6c] sm:$0xf] %v4497
      %4562 = vst [vmem:[%s267 + $0x70] sm:$0xf] %v4498
      %4563 = vst [vmem:[%s267 + $0x74] sm:$0xf] %v4499
      %4564 = vst [vmem:[%s267 + $0x78] sm:$0xf] %v4500
      %4565 = vst [vmem:[%s267 + $0x7c] sm:$0xf] %v4501
      %4566 = vst [vmem:[%s267 + $0x80] sm:$0xf] %v4502
      %4567 = vst [vmem:[%s267 + $0x84] sm:$0xf] %v4503
      %4568 = vst [vmem:[%s267 + $0x88] sm:$0xf] %v4504
      %4569 = vst [vmem:[%s267 + $0x8c] sm:$0xf] %v4505
      %4570 = vst [vmem:[%s267 + $0x90] sm:$0xf] %v4506
      %4571 = vst [vmem:[%s267 + $0x94] sm:$0xf] %v4507
      %4572 = vst [vmem:[%s267 + $0x98] sm:$0xf] %v4508
      %4573 = vst [vmem:[%s267 + $0x9c] sm:$0xf] %v4509
      %4574 = vst [vmem:[%s267 + $0xa0] sm:$0xf] %v4510
      %4575 = vst [vmem:[%s267 + $0xa4] sm:$0xf] %v4511
      %4576 = vst [vmem:[%s267 + $0xa8] sm:$0xf] %v4512
      %4577 = vst [vmem:[%s267 + $0xac] sm:$0xf] %v4513
      %4578 = vst [vmem:[%s267 + $0xb0] sm:$0xf] %v4514
      %4579 = vst [vmem:[%s267 + $0xb4] sm:$0xf] %v4515
      %4580 = vst [vmem:[%s267 + $0xb8] sm:$0xf] %v4516
      %4581 = vst [vmem:[%s267 + $0xbc] sm:$0xf] %v4517
      %4582 = vst [vmem:[%s267 + $0xc0] sm:$0xf] %v4518
      %4583 = vst [vmem:[%s267 + $0xc4] sm:$0xf] %v4519
      %4584 = vst [vmem:[%s267 + $0xc8] sm:$0xf] %v4520
      %4585 = vst [vmem:[%s267 + $0xcc] sm:$0xf] %v4521
      %4586 = vst [vmem:[%s267 + $0xd0] sm:$0xf] %v4522
      %4587 = vst [vmem:[%s267 + $0xd4] sm:$0xf] %v4523
      %4588 = vst [vmem:[%s267 + $0xd8] sm:$0xf] %v4524
      %4589 = vst [vmem:[%s267 + $0xdc] sm:$0xf] %v4525
      %4590 = vst [vmem:[%s267 + $0xe0] sm:$0xf] %v4526
      %4591 = vst [vmem:[%s267 + $0xe4] sm:$0xf] %v4527
      %4592 = vst [vmem:[%s267 + $0xe8] sm:$0xf] %v4528
      %4593 = vst [vmem:[%s267 + $0xec] sm:$0xf] %v4529
      %4594 = vst [vmem:[%s267 + $0xf0] sm:$0xf] %v4530
      %4595 = vst [vmem:[%s267 + $0xf4] sm:$0xf] %v4531
      %4596 = vst [vmem:[%s267 + $0xf8] sm:$0xf] %v4532
      %4597 = vst [vmem:[%s267 + $0xfc] sm:$0xf] %v4533
      %s4598 = smul.u32 64, %s18
      %p4599 = scmp.lt.s32.totalorder %s4598, 255
      %s4600 = scalar_select %p4599, %s4598, 255
      %s4601 = smul.addr %s4600, 4
      %s4602 = scalar_lea.vmem %s5, %s4601
      %s4603 = smul.u32 64, %s18
      %p4604 = scmp.lt.s32.totalorder %s4603, 255
      %s4605 = scalar_select %p4604, %s4603, 255
      %s4606 = smul.addr %s4605, 4
      %s4607 = scalar_lea.vmem %s6, %s4606
      // Predicated region
      $region41: #{cam_encode_pallas.1} parent=39 // pred_check
        %p4608 = pneg %p146
      $region42: #{cam_encode_pallas.1} parent=39 // pred_check_branch
        %4610 = sbr.rel (%p4608) target = $region44
      $region43: #{cam_encode_pallas.1} parent=39 // pred_region
        %s4611 = smul.u32 64, %s18
      $region44: #{cam_encode_pallas.1} parent=39 // pred_fallthru
        _
      // Predicated region
      $region45: #{cam_encode_pallas.1} parent=39 // pred_check
        %p4612 = pneg %p172
      $region46: #{cam_encode_pallas.1} parent=39 // pred_check_branch
        %4614 = sbr.rel (%p4612) target = $region48
      $region47: #{cam_encode_pallas.1} parent=39 // pred_region
        %s4615 = smul.u32 64, %s18
      $region48: #{cam_encode_pallas.1} parent=39 // pred_fallthru
        _
    $region40: #{cam_encode_pallas.1} parent=5 // pred_fallthru
      _
    %p4616 = scmp.le.s32.totalorder 2, %s13
    // Predicated region
    $region49: #{cam_encode_pallas.1} parent=5 // pred_check
      %p4617 = pneg %p4616
    $region50: #{cam_encode_pallas.1} parent=5 // pred_check_branch
      %4619 = sbr.rel (%p4617) target = $region52
    $region51: #{cam_encode_pallas.1} parent=5 // pred_region
      %s4620 = ssub.s32 %s13, 2
      // Predicated region
      $region53: #{cam_encode_pallas.1} parent=51 // pred_check
        %p4621 = pneg %p152
      $region54: #{cam_encode_pallas.1} parent=51 // pred_check_branch
        %4623 = sbr.rel (%p4621) target = $region56
      $region55: #{cam_encode_pallas.1} parent=51 // pred_region
        %s4624 = smul.u32 64, %s19
        %p4625 = scmp.lt.s32.totalorder %s4624, 255
        %s4626 = scalar_select %p4625, %s4624, 255
        %s4627 = smul.addr %s4626, 4
        %s4628 = scalar_lea.vmem %s5, %s4627
      $region56: #{cam_encode_pallas.1} parent=51 // pred_fallthru
        _
      // Predicated region
      $region57: #{cam_encode_pallas.1} parent=51 // pred_check
        %p4629 = pneg %p178
      $region58: #{cam_encode_pallas.1} parent=51 // pred_check_branch
        %4631 = sbr.rel (%p4629) target = $region60
      $region59: #{cam_encode_pallas.1} parent=51 // pred_region
        %s4632 = smul.u32 64, %s19
        %p4633 = scmp.lt.s32.totalorder %s4632, 255
        %s4634 = scalar_select %p4633, %s4632, 255
        %s4635 = smul.addr %s4634, 4
        %s4636 = scalar_lea.vmem %s6, %s4635
      $region60: #{cam_encode_pallas.1} parent=51 // pred_fallthru
        _
    $region52: #{cam_encode_pallas.1} parent=5 // pred_fallthru
      _
  $region6: #{cam_encode_pallas.1} parent=0 // loop_footer
    %s17 = sadd.s32 1, %s13
  $region7: #{cam_encode_pallas.1} parent=0 // loop_footer_branch
    %12 = sbr.rel target = $region3
  $region8: #{cam_encode_pallas.1} parent=0 // loop_exit
    _

</llo_original>
